<compile_context>
chip_gen: v5e
topology: v5e:2x2
jax: 0.10.0
libtpu: 0.0.40
codegen_flags: <defaults>
</compile_context>

<pallas_src>
import jax
import jax.numpy as jnp
from jax.experimental import pallas as pl
from jax.experimental.pallas import tpu as pltpu


LRELU_SLOPE = 0.2
BN_EPS = 1e-5


# ----------------------------------------------------------------------------
# Pallas kernels
# ----------------------------------------------------------------------------
def conv_lrelu_bn_kernel(p_ref, w_ref, b_ref, g_ref, beta_ref, o_ref):
    """Fused (im2col conv as matmul) + bias + LeakyReLU(0.2) + BatchNorm.

    p_ref:    (M, Kp)  bf16 im2col patches (K zero-padded to Kp)
    w_ref:    (Kp, Cb) bf16 conv weights for this channel block
    b_ref:    (1, Cb)  f32 conv bias
    g_ref:    (1, Cb)  f32 BN gamma
    beta_ref: (1, Cb)  f32 BN beta
    o_ref:    (M, Cb)  f32 output (NHWC rows, ordered b, h, w)
    """
    y = jnp.dot(p_ref[...], w_ref[...], preferred_element_type=jnp.float32)
    y = y + b_ref[...]
    y = jnp.where(y > 0, y, LRELU_SLOPE * y)                      # LeakyReLU(0.2)
    # BatchNorm2d (training-mode batch stats) over N*H*W == axis 0, one pass.
    m = y.shape[0]
    s1 = jnp.sum(y, axis=0, keepdims=True)
    s2 = jnp.sum(y * y, axis=0, keepdims=True)
    mean = s1 * (1.0 / m)
    var = s2 * (1.0 / m) - mean * mean                            # biased variance
    scale = jax.lax.rsqrt(var + BN_EPS) * g_ref[...]
    o_ref[...] = ((y - mean) * scale + beta_ref[...]).astype(o_ref.dtype)


def conv_lrelu_bn_fc_sigmoid_kernel(p_ref, w_ref, b_ref, g_ref, beta_ref,
                                    wf_ref, bf_ref, sel_ref, o_ref):
    """conv3 block fused with the final Linear(4096, 1) + sigmoid.

    p_ref:   (M3, K3) bf16 patches     w_ref: (K3, 256) bf16
    b/g/beta:(1, 256) f32
    wf_ref:  (M3, 256) f32 fc weight, broadcast to the (b, h, w) row order
    bf_ref:  (1, 1)   f32 fc bias
    sel_ref: (B, M3)  f32 one-hot row->batch selector
    o_ref:   (B, 1)   f32 sigmoid output
    """
    y = jnp.dot(p_ref[...], w_ref[...], preferred_element_type=jnp.float32)
    y = y + b_ref[...]
    y = jnp.where(y > 0, y, LRELU_SLOPE * y)
    m = y.shape[0]
    s1 = jnp.sum(y, axis=0, keepdims=True)
    s2 = jnp.sum(y * y, axis=0, keepdims=True)
    mean = s1 * (1.0 / m)
    var = s2 * (1.0 / m) - mean * mean
    scale = jax.lax.rsqrt(var + BN_EPS) * g_ref[...]
    y = (y - mean) * scale + beta_ref[...]                        # (M3, 256) f32

    # fc: logit[b] = sum_{m,c} sel[b,m] * y[m,c] * wf[m,c]
    # (VPU multiply + tiny lane-dense matmul + lane reduce; avoids an N=1 MXU
    #  matmul and keeps the conv3 activations resident in VMEM.)
    yw = y * wf_ref[...]                                          # (M3, 256)
    per_b = jnp.dot(sel_ref[...], yw, preferred_element_type=jnp.float32)  # (B, 256)
    logit = jnp.sum(per_b, axis=-1, keepdims=True) + bf_ref[...]  # (B, 1)
    # sigmoid via tanh: numerically stable, maps to the EUP.
    o_ref[...] = 0.5 * (jnp.tanh(0.5 * logit) + 1.0)


# ----------------------------------------------------------------------------
# Wrapper helpers
# ----------------------------------------------------------------------------
def _vmem_spec():
    return pl.BlockSpec(memory_space=pltpu.MemorySpace.VMEM)


def _round_up(x, m):
    return ((x + m - 1) // m) * m


def _im2col_nhwc(x, k, stride, pad, k_pad_to):
    """x: (B, H, W, C) NHWC -> patches (B*Ho*Wo, k_pad_to), K ordered (ki, kj, c).

    No transposes: only pad / strided slice / concat (all XLA-side and cheap);
    extra K columns beyond k*k*C are zero (contribute nothing to the matmul).
    """
    B, H, W, C = x.shape
    Ho = (H + 2 * pad - k) // stride + 1
    Wo = (W + 2 * pad - k) // stride + 1
    xp = jnp.pad(x, ((0, 0), (pad, pad), (pad, pad), (0, 0)))
    cols = [xp[:, ki:ki + stride * Ho:stride, kj:kj + stride * Wo:stride, :]
            for ki in range(k) for kj in range(k)]
    p = jnp.concatenate(cols, axis=-1)                 # (B, Ho, Wo, k*k*C)
    K = k * k * C
    if k_pad_to > K:
        p = jnp.concatenate(
            [p, jnp.zeros((B, Ho, Wo, k_pad_to - K), p.dtype)], axis=-1)
    return p.reshape(B * Ho * Wo, p.shape[-1]), Ho, Wo


def _conv_weight_2d(w, k_pad_to):
    """(Cout, Cin, kh, kw) -> (k_pad_to, Cout), row order (ki, kj, cin)."""
    Cout, Cin, kh, kw = w.shape
    w2 = jnp.transpose(w, (2, 3, 1, 0)).reshape(kh * kw * Cin, Cout)
    if k_pad_to > kh * kw * Cin:
        w2 = jnp.concatenate(
            [w2, jnp.zeros((k_pad_to - kh * kw * Cin, Cout), w2.dtype)], axis=0)
    return w2


def _conv_block_pallas(patches_bf16, w2d_bf16, bias, gamma, beta):
    M, Kp = patches_bf16.shape
    C = w2d_bf16.shape[1]
    cb = min(C, 128)                        # lane-dense channel block
    grid = (C // cb,)
    cost = pl.CostEstimate(
        flops=2 * M * Kp * C, transcendentals=0,
        bytes_accessed=(patches_bf16.size * 2 + w2d_bf16.size * 2
                        + 3 * C * 4 + M * C * 4))
    return pl.pallas_call(
        conv_lrelu_bn_kernel,
        out_shape=jax.ShapeDtypeStruct((M, C), jnp.float32),
        grid=grid,
        in_specs=[
            pl.BlockSpec((M, Kp), lambda j: (0, 0)),
            pl.BlockSpec((Kp, cb), lambda j: (0, j)),
            pl.BlockSpec((1, cb), lambda j: (0, j)),
            pl.BlockSpec((1, cb), lambda j: (0, j)),
            pl.BlockSpec((1, cb), lambda j: (0, j)),
        ],
        out_specs=pl.BlockSpec((M, cb), lambda j: (0, j)),
        compiler_params=pltpu.CompilerParams(
            dimension_semantics=("parallel",)),   # channel blocks independent (v7x 2 TCs)
        cost_estimate=cost,
    )(patches_bf16, w2d_bf16, bias, gamma, beta)


def _conv_fc_sigmoid_pallas(patches_bf16, w2d_bf16, bias, gamma, beta,
                            wf_rows, bf, sel):
    M, Kp = patches_bf16.shape
    C = w2d_bf16.shape[1]
    B = sel.shape[0]
    cost = pl.CostEstimate(
        flops=2 * M * Kp * C + 2 * M * C + 2 * B * M * C,
        transcendentals=B,
        bytes_accessed=(patches_bf16.size * 2 + w2d_bf16.size * 2
                        + 3 * C * 4 + wf_rows.size * 4 + sel.size * 4 + B * 4))
    return pl.pallas_call(
        conv_lrelu_bn_fc_sigmoid_kernel,
        out_shape=jax.ShapeDtypeStruct((B, 1), jnp.float32),
        in_specs=[_vmem_spec()] * 8,
        out_specs=_vmem_spec(),
        cost_estimate=cost,
    )(patches_bf16, w2d_bf16, bias, gamma, beta, wf_rows, bf, sel)


# ----------------------------------------------------------------------------
# Parameter init (deterministic, synthetic weights; PyTorch layouts)
# ----------------------------------------------------------------------------
def init_params(key):
    def nrm(k, shape, scale):
        return (scale * jax.random.normal(k, shape)).astype(jnp.float32)

    ks = jax.random.split(key, 8)
    params = {}
    params["w1"] = nrm(ks[0], (64, 3, 5, 5), 0.05)
    params["b1"] = nrm(ks[1], (64,), 0.05)
    params["w2"] = nrm(ks[2], (128, 64, 3, 3), 0.05)
    params["b2"] = nrm(ks[3], (128,), 0.05)
    params["w3"] = nrm(ks[4], (256, 128, 3, 3), 0.05)
    params["b3"] = nrm(ks[5], (256,), 0.05)
    for c, n in ((64, 1), (128, 2), (256, 3)):
        params[f"g{n}"] = jnp.ones((c,), jnp.float32)
        params[f"beta{n}"] = jnp.zeros((c,), jnp.float32)
    # fc1: Linear(4096, 1) stored as (4096, 1); rows ordered like PyTorch's
    # NCHW .view(): index = c*16 + h*4 + w.
    params["wf"] = nrm(ks[6], (4096, 1), 0.02)
    params["bf"] = nrm(ks[7], (1,), 0.02)
    return params


# ----------------------------------------------------------------------------
# Forward pass (NHWC internally)
# ----------------------------------------------------------------------------
def _conv_layer(x_nhwc, w, b, g, beta, k, stride, pad):
    B, _, _, Cin = x_nhwc.shape
    Cout = w.shape[0]
    Kp = _round_up(k * k * Cin, 128)
    patches, Ho, Wo = _im2col_nhwc(x_nhwc.astype(jnp.bfloat16), k, stride, pad, Kp)
    w2d = _conv_weight_2d(w, Kp).astype(jnp.bfloat16)
    y = _conv_block_pallas(patches, w2d, b.reshape(1, Cout),
                           g.reshape(1, Cout), beta.reshape(1, Cout))
    return y.reshape(B, Ho, Wo, Cout)        # stays NHWC, no transpose


@jax.jit
def discriminator_forward(params, x):
    # x: (B, 3, 32, 32) NCHW (PyTorch layout); convert to NHWC once at the boundary.
    B = x.shape[0]
    x = jnp.transpose(x, (0, 2, 3, 1))

    x = _conv_layer(x, params["w1"], params["b1"], params["g1"], params["beta1"], 5, 2, 2)
    x = _conv_layer(x, params["w2"], params["b2"], params["g2"], params["beta2"], 3, 2, 1)

    # conv3 + Linear(4096,1) + sigmoid fused into a single kernel.
    Cin, Cout, k, stride, pad = 128, 256, 3, 2, 1
    Kp = _round_up(k * k * Cin, 128)                      # 1152, already aligned
    patches, Ho, Wo = _im2col_nhwc(x.astype(jnp.bfloat16), k, stride, pad, Kp)
    M3 = B * Ho * Wo

    w2d = _conv_weight_2d(params["w3"], Kp).astype(jnp.bfloat16)
    # fc weight: PyTorch flattens NCHW (c, h, w); our conv3 rows are (b, h, w)
    # with channels on the lane axis, so permute the 4096 rows once to (h, w, c).
    wf_hwc = params["wf"].reshape(Cout, Ho, Wo).transpose(1, 2, 0).reshape(Ho * Wo, Cout)
    wf_rows = jnp.tile(wf_hwc, (B, 1)).astype(jnp.float32)             # (M3, 256)
    sel = (jnp.arange(M3)[None, :] // (Ho * Wo)
           == jnp.arange(B)[:, None]).astype(jnp.float32)              # (B, M3)

    out = _conv_fc_sigmoid_pallas(
        patches, w2d,
        params["b3"].reshape(1, Cout), params["g3"].reshape(1, Cout),
        params["beta3"].reshape(1, Cout),
        wf_rows, params["bf"].reshape(1, 1), sel)
    return out                                                          # (B, 1)


# ----------------------------------------------------------------------------
# Pure-JAX references (f32 and bf16-mirrored) for sanity checks
# ----------------------------------------------------------------------------
def reference_forward(params, x, mm_dtype=jnp.float32):
    def conv_block(x_nhwc, w, b, g, beta, k, stride, pad):
        B, _, _, Cin = x_nhwc.shape
        Cout = w.shape[0]
        K = k * k * Cin
        patches, Ho, Wo = _im2col_nhwc(x_nhwc, k, stride, pad, K)
        w2 = _conv_weight_2d(w, K)
        y = jnp.dot(patches.astype(mm_dtype), w2.astype(mm_dtype),
                    preferred_element_type=jnp.float32)
        y = y + b[None, :]
        y = jnp.where(y > 0, y, LRELU_SLOPE * y)
        mean = jnp.mean(y, axis=0, keepdims=True)
        var = jnp.mean((y - mean) ** 2, axis=0, keepdims=True)
        y = (y - mean) / jnp.sqrt(var + BN_EPS) * g[None, :] + beta[None, :]
        return y.reshape(B, Ho, Wo, Cout)

    x = jnp.transpose(x, (0, 2, 3, 1))
    x = conv_block(x, params["w1"], params["b1"], params["g1"], params["beta1"], 5, 2, 2)
    x = conv_block(x, params["w2"], params["b2"], params["g2"], params["beta2"], 3, 2, 1)
    x = conv_block(x, params["w3"], params["b3"], params["g3"], params["beta3"], 3, 2, 1)
    # PyTorch-order flatten: NHWC -> NCHW -> view(-1, 4096)   (independent path
    # from the kernel's permuted-fc-weight trick, so it cross-checks that logic).
    xf = jnp.transpose(x, (0, 3, 1, 2)).reshape(x.shape[0], -1)
    return jax.nn.sigmoid(xf @ params["wf"] + params["bf"][None, :])


if __name__ == "__main__":
    key = jax.random.PRNGKey(0)
    pkey, xkey = jax.random.split(key)
    params = init_params(pkey)

    # Input implied by the module: 32x32 RGB images (32 -> 16 -> 8 -> 4 spatial).
    x = jax.random.normal(xkey, (2, 3, 32, 32), dtype=jnp.float32)

    out = jax.block_until_ready(discriminator_forward(params, x))
    assert out.shape == (2, 1), out.shape

    # (1) strict check vs a reference that mirrors the kernel's precision policy
    #     (bf16 MXU inputs, f32 epilogue).
    ref_bf16 = reference_forward(params, x, mm_dtype=jnp.bfloat16)
    assert jnp.allclose(out, ref_bf16, atol=5e-3, rtol=5e-3), (out, ref_bf16)

    # (2) sanity band vs the full-f32 reference (PyTorch-equivalent math);
    #     bf16 MXU feeds shift the sigmoid output by O(1e-3).
    ref_f32 = reference_forward(params, x, mm_dtype=jnp.float32)
    assert jnp.allclose(out, ref_f32, atol=3e-2, rtol=3e-2), (out, ref_f32)

    print("KERNEL_OK")
</pallas_src>

<mosaic_0001>
module attributes {stable_mosaic.version = 11 : i64} {
  func.func @conv_lrelu_bn_kernel(%arg0: i32, %arg1: memref<512x128xbf16, #tpu.memory_space<vmem>>, %arg2: memref<128x64xbf16, #tpu.memory_space<vmem>>, %arg3: memref<1x64xf32, #tpu.memory_space<vmem>>, %arg4: memref<1x64xf32, #tpu.memory_space<vmem>>, %arg5: memref<1x64xf32, #tpu.memory_space<vmem>>, %arg6: memref<512x64xf32, #tpu.memory_space<vmem>>) attributes {dimension_semantics = [#tpu.dimension_semantics<parallel>], iteration_bounds = array<i64: 1>, scalar_prefetch = 0 : i64, scratch_operands = 0 : i64, tpu.core_type = #tpu.core_type<tc>, window_params = [{pipeline_mode = #tpu.pipeline_mode<synchronous>, transform_indices = @transform_0, window_bounds = array<i64: 512, 128>}, {transform_indices = @transform_1, window_bounds = array<i64: 128, 64>}, {transform_indices = @transform_2, window_bounds = array<i64: 1, 64>}, {transform_indices = @transform_3, window_bounds = array<i64: 1, 64>}, {transform_indices = @transform_4, window_bounds = array<i64: 1, 64>}, {transform_indices = @transform_5, window_bounds = array<i64: 512, 64>}]} {
    %c0 = arith.constant 0 : index
    %c0_0 = arith.constant 0 : index
    %0 = vector.load %arg1[%c0, %c0_0] : memref<512x128xbf16, #tpu.memory_space<vmem>>, vector<512x128xbf16>
    %c0_1 = arith.constant 0 : index
    %c0_2 = arith.constant 0 : index
    %1 = vector.load %arg2[%c0_1, %c0_2] : memref<128x64xbf16, #tpu.memory_space<vmem>>, vector<128x64xbf16>
    %cst = arith.constant dense<0.000000e+00> : vector<512x64xf32>
    %2 = tpu.matmul %0, %1, %cst {dimension_numbers = #tpu.dot_dimension_numbers<[1], [0], [0], [1], [0, 0, 1, 1], [], []>} : vector<512x128xbf16>, vector<128x64xbf16>, vector<512x64xf32> -> vector<512x64xf32>
    %c0_3 = arith.constant 0 : index
    %c0_4 = arith.constant 0 : index
    %3 = vector.load %arg3[%c0_3, %c0_4] : memref<1x64xf32, #tpu.memory_space<vmem>>, vector<1x64xf32>
    %4 = vector.broadcast %3 : vector<1x64xf32> to vector<512x64xf32>
    %5 = arith.addf %2, %4 : vector<512x64xf32>
    %cst_5 = arith.constant 0.000000e+00 : f32
    %6 = vector.broadcast %cst_5 : f32 to vector<512x64xf32>
    %7 = arith.cmpf ogt, %5, %6 : vector<512x64xf32>
    %cst_6 = arith.constant 2.000000e-01 : f32
    %8 = vector.broadcast %cst_6 : f32 to vector<512x64xf32>
    %9 = arith.mulf %8, %5 : vector<512x64xf32>
    %10 = arith.select %7, %5, %9 : vector<512x64xi1>, vector<512x64xf32>
    %cst_7 = arith.constant dense<0.000000e+00> : vector<64xf32>
    %11 = vector.multi_reduction <add>, %10, %cst_7 [0] : vector<512x64xf32> to vector<64xf32>
    %12 = vector.shape_cast %11 : vector<64xf32> to vector<1x64xf32>
    %13 = arith.mulf %10, %10 : vector<512x64xf32>
    %cst_8 = arith.constant dense<0.000000e+00> : vector<64xf32>
    %14 = vector.multi_reduction <add>, %13, %cst_8 [0] : vector<512x64xf32> to vector<64xf32>
    %15 = vector.shape_cast %14 : vector<64xf32> to vector<1x64xf32>
    %cst_9 = arith.constant 0.001953125 : f32
    %16 = vector.broadcast %cst_9 : f32 to vector<1x64xf32>
    %17 = arith.mulf %12, %16 : vector<1x64xf32>
    %cst_10 = arith.constant 0.001953125 : f32
    %18 = vector.broadcast %cst_10 : f32 to vector<1x64xf32>
    %19 = arith.mulf %15, %18 : vector<1x64xf32>
    %20 = arith.mulf %17, %17 : vector<1x64xf32>
    %21 = arith.subf %19, %20 : vector<1x64xf32>
    %cst_11 = arith.constant 9.99999974E-6 : f32
    %22 = vector.broadcast %cst_11 : f32 to vector<1x64xf32>
    %23 = arith.addf %21, %22 : vector<1x64xf32>
    %24 = math.rsqrt %23 : vector<1x64xf32>
    %c0_12 = arith.constant 0 : index
    %c0_13 = arith.constant 0 : index
    %25 = vector.load %arg4[%c0_12, %c0_13] : memref<1x64xf32, #tpu.memory_space<vmem>>, vector<1x64xf32>
    %26 = arith.mulf %24, %25 : vector<1x64xf32>
    %27 = vector.broadcast %17 : vector<1x64xf32> to vector<512x64xf32>
    %28 = arith.subf %10, %27 : vector<512x64xf32>
    %29 = vector.broadcast %26 : vector<1x64xf32> to vector<512x64xf32>
    %30 = arith.mulf %28, %29 : vector<512x64xf32>
    %c0_14 = arith.constant 0 : index
    %c0_15 = arith.constant 0 : index
    %31 = vector.load %arg5[%c0_14, %c0_15] : memref<1x64xf32, #tpu.memory_space<vmem>>, vector<1x64xf32>
    %32 = vector.broadcast %31 : vector<1x64xf32> to vector<512x64xf32>
    %33 = arith.addf %30, %32 : vector<512x64xf32>
    %c0_16 = arith.constant 0 : index
    %c0_17 = arith.constant 0 : index
    %34 = vector.load %arg6[%c0_16, %c0_17] : memref<512x64xf32, #tpu.memory_space<vmem>>, vector<512x64xf32>
    tpu.vector_store %arg6[%c0_16, %c0_17], %33 {strides = array<i32>} : memref<512x64xf32, #tpu.memory_space<vmem>>, vector<512x64xf32>,
    return
  }
  func.func @transform_0(%arg0: i32) -> (i32, i32) {
    %c0_i32 = arith.constant 0 : i32
    %c0_i32_0 = arith.constant 0 : i32
    %c0_i32_1 = arith.constant 0 : i32
    return %c0_i32, %c0_i32_0 : i32, i32
  }
  func.func @transform_1(%arg0: i32) -> (i32, i32) {
    %c0_i32 = arith.constant 0 : i32
    %c0_i32_0 = arith.constant 0 : i32
    return %c0_i32, %arg0 : i32, i32
  }
  func.func @transform_2(%arg0: i32) -> (i32, i32) {
    %c0_i32 = arith.constant 0 : i32
    %c0_i32_0 = arith.constant 0 : i32
    return %c0_i32, %arg0 : i32, i32
  }
  func.func @transform_3(%arg0: i32) -> (i32, i32) {
    %c0_i32 = arith.constant 0 : i32
    %c0_i32_0 = arith.constant 0 : i32
    return %c0_i32, %arg0 : i32, i32
  }
  func.func @transform_4(%arg0: i32) -> (i32, i32) {
    %c0_i32 = arith.constant 0 : i32
    %c0_i32_0 = arith.constant 0 : i32
    return %c0_i32, %arg0 : i32, i32
  }
  func.func @transform_5(%arg0: i32) -> (i32, i32) {
    %c0_i32 = arith.constant 0 : i32
    %c0_i32_0 = arith.constant 0 : i32
    return %c0_i32, %arg0 : i32, i32
  }
}

module attributes {stable_mosaic.version = 11 : i64} {
  func.func @conv_lrelu_bn_kernel(%arg0: i32, %arg1: memref<128x640xbf16, #tpu.memory_space<vmem>>, %arg2: memref<640x128xbf16, #tpu.memory_space<vmem>>, %arg3: memref<1x128xf32, #tpu.memory_space<vmem>>, %arg4: memref<1x128xf32, #tpu.memory_space<vmem>>, %arg5: memref<1x128xf32, #tpu.memory_space<vmem>>, %arg6: memref<128x128xf32, #tpu.memory_space<vmem>>) attributes {dimension_semantics = [#tpu.dimension_semantics<parallel>], iteration_bounds = array<i64: 1>, scalar_prefetch = 0 : i64, scratch_operands = 0 : i64, tpu.core_type = #tpu.core_type<tc>, window_params = [{pipeline_mode = #tpu.pipeline_mode<synchronous>, transform_indices = @transform_0, window_bounds = array<i64: 128, 640>}, {transform_indices = @transform_1, window_bounds = array<i64: 640, 128>}, {transform_indices = @transform_2, window_bounds = array<i64: 1, 128>}, {transform_indices = @transform_3, window_bounds = array<i64: 1, 128>}, {transform_indices = @transform_4, window_bounds = array<i64: 1, 128>}, {transform_indices = @transform_5, window_bounds = array<i64: 128, 128>}]} {
    %c0 = arith.constant 0 : index
    %c0_0 = arith.constant 0 : index
    %0 = vector.load %arg1[%c0, %c0_0] : memref<128x640xbf16, #tpu.memory_space<vmem>>, vector<128x640xbf16>
    %c0_1 = arith.constant 0 : index
    %c0_2 = arith.constant 0 : index
    %1 = vector.load %arg2[%c0_1, %c0_2] : memref<640x128xbf16, #tpu.memory_space<vmem>>, vector<640x128xbf16>
    %cst = arith.constant dense<0.000000e+00> : vector<128x128xf32>
    %2 = tpu.matmul %0, %1, %cst {dimension_numbers = #tpu.dot_dimension_numbers<[1], [0], [0], [1], [0, 0, 1, 1], [], []>} : vector<128x640xbf16>, vector<640x128xbf16>, vector<128x128xf32> -> vector<128x128xf32>
    %c0_3 = arith.constant 0 : index
    %c0_4 = arith.constant 0 : index
    %3 = vector.load %arg3[%c0_3, %c0_4] : memref<1x128xf32, #tpu.memory_space<vmem>>, vector<1x128xf32>
    %4 = vector.broadcast %3 : vector<1x128xf32> to vector<128x128xf32>
    %5 = arith.addf %2, %4 : vector<128x128xf32>
    %cst_5 = arith.constant 0.000000e+00 : f32
    %6 = vector.broadcast %cst_5 : f32 to vector<128x128xf32>
    %7 = arith.cmpf ogt, %5, %6 : vector<128x128xf32>
    %cst_6 = arith.constant 2.000000e-01 : f32
    %8 = vector.broadcast %cst_6 : f32 to vector<128x128xf32>
    %9 = arith.mulf %8, %5 : vector<128x128xf32>
    %10 = arith.select %7, %5, %9 : vector<128x128xi1>, vector<128x128xf32>
    %cst_7 = arith.constant dense<0.000000e+00> : vector<128xf32>
    %11 = vector.multi_reduction <add>, %10, %cst_7 [0] : vector<128x128xf32> to vector<128xf32>
    %12 = vector.shape_cast %11 : vector<128xf32> to vector<1x128xf32>
    %13 = arith.mulf %10, %10 : vector<128x128xf32>
    %cst_8 = arith.constant dense<0.000000e+00> : vector<128xf32>
    %14 = vector.multi_reduction <add>, %13, %cst_8 [0] : vector<128x128xf32> to vector<128xf32>
    %15 = vector.shape_cast %14 : vector<128xf32> to vector<1x128xf32>
    %cst_9 = arith.constant 7.812500e-03 : f32
    %16 = vector.broadcast %cst_9 : f32 to vector<1x128xf32>
    %17 = arith.mulf %12, %16 : vector<1x128xf32>
    %cst_10 = arith.constant 7.812500e-03 : f32
    %18 = vector.broadcast %cst_10 : f32 to vector<1x128xf32>
    %19 = arith.mulf %15, %18 : vector<1x128xf32>
    %20 = arith.mulf %17, %17 : vector<1x128xf32>
    %21 = arith.subf %19, %20 : vector<1x128xf32>
    %cst_11 = arith.constant 9.99999974E-6 : f32
    %22 = vector.broadcast %cst_11 : f32 to vector<1x128xf32>
    %23 = arith.addf %21, %22 : vector<1x128xf32>
    %24 = math.rsqrt %23 : vector<1x128xf32>
    %c0_12 = arith.constant 0 : index
    %c0_13 = arith.constant 0 : index
    %25 = vector.load %arg4[%c0_12, %c0_13] : memref<1x128xf32, #tpu.memory_space<vmem>>, vector<1x128xf32>
    %26 = arith.mulf %24, %25 : vector<1x128xf32>
    %27 = vector.broadcast %17 : vector<1x128xf32> to vector<128x128xf32>
    %28 = arith.subf %10, %27 : vector<128x128xf32>
    %29 = vector.broadcast %26 : vector<1x128xf32> to vector<128x128xf32>
    %30 = arith.mulf %28, %29 : vector<128x128xf32>
    %c0_14 = arith.constant 0 : index
    %c0_15 = arith.constant 0 : index
    %31 = vector.load %arg5[%c0_14, %c0_15] : memref<1x128xf32, #tpu.memory_space<vmem>>, vector<1x128xf32>
    %32 = vector.broadcast %31 : vector<1x128xf32> to vector<128x128xf32>
    %33 = arith.addf %30, %32 : vector<128x128xf32>
    %c0_16 = arith.constant 0 : index
    %c0_17 = arith.constant 0 : index
    %34 = vector.load %arg6[%c0_16, %c0_17] : memref<128x128xf32, #tpu.memory_space<vmem>>, vector<128x128xf32>
    tpu.vector_store %arg6[%c0_16, %c0_17], %33 {strides = array<i32>} : memref<128x128xf32, #tpu.memory_space<vmem>>, vector<128x128xf32>,
    return
  }
  func.func @transform_0(%arg0: i32) -> (i32, i32) {
    %c0_i32 = arith.constant 0 : i32
    %c0_i32_0 = arith.constant 0 : i32
    %c0_i32_1 = arith.constant 0 : i32
    return %c0_i32, %c0_i32_0 : i32, i32
  }
  func.func @transform_1(%arg0: i32) -> (i32, i32) {
    %c0_i32 = arith.constant 0 : i32
    %c0_i32_0 = arith.constant 0 : i32
    return %c0_i32, %arg0 : i32, i32
  }
  func.func @transform_2(%arg0: i32) -> (i32, i32) {
    %c0_i32 = arith.constant 0 : i32
    %c0_i32_0 = arith.constant 0 : i32
    return %c0_i32, %arg0 : i32, i32
  }
  func.func @transform_3(%arg0: i32) -> (i32, i32) {
    %c0_i32 = arith.constant 0 : i32
    %c0_i32_0 = arith.constant 0 : i32
    return %c0_i32, %arg0 : i32, i32
  }
  func.func @transform_4(%arg0: i32) -> (i32, i32) {
    %c0_i32 = arith.constant 0 : i32
    %c0_i32_0 = arith.constant 0 : i32
    return %c0_i32, %arg0 : i32, i32
  }
  func.func @transform_5(%arg0: i32) -> (i32, i32) {
    %c0_i32 = arith.constant 0 : i32
    %c0_i32_0 = arith.constant 0 : i32
    return %c0_i32, %arg0 : i32, i32
  }
}

module attributes {stable_mosaic.version = 11 : i64} {
  func.func @conv_lrelu_bn_fc_sigmoid_kernel(%arg0: memref<32x1152xbf16, #tpu.memory_space<vmem>>, %arg1: memref<1152x256xbf16, #tpu.memory_space<vmem>>, %arg2: memref<1x256xf32, #tpu.memory_space<vmem>>, %arg3: memref<1x256xf32, #tpu.memory_space<vmem>>, %arg4: memref<1x256xf32, #tpu.memory_space<vmem>>, %arg5: memref<32x256xf32, #tpu.memory_space<vmem>>, %arg6: memref<1x1xf32, #tpu.memory_space<vmem>>, %arg7: memref<2x32xf32, #tpu.memory_space<vmem>>, %arg8: memref<2x1xf32, #tpu.memory_space<vmem>>) attributes {dimension_semantics = [], scalar_prefetch = 0 : i64, scratch_operands = 0 : i64, tpu.core_type = #tpu.core_type<tc>} {
    %c0 = arith.constant 0 : index
    %c0_0 = arith.constant 0 : index
    %0 = vector.load %arg0[%c0, %c0_0] : memref<32x1152xbf16, #tpu.memory_space<vmem>>, vector<32x1152xbf16>
    %c0_1 = arith.constant 0 : index
    %c0_2 = arith.constant 0 : index
    %1 = vector.load %arg1[%c0_1, %c0_2] : memref<1152x256xbf16, #tpu.memory_space<vmem>>, vector<1152x256xbf16>
    %cst = arith.constant dense<0.000000e+00> : vector<32x256xf32>
    %2 = tpu.matmul %0, %1, %cst {dimension_numbers = #tpu.dot_dimension_numbers<[1], [0], [0], [1], [0, 0, 1, 1], [], []>} : vector<32x1152xbf16>, vector<1152x256xbf16>, vector<32x256xf32> -> vector<32x256xf32>
    %c0_3 = arith.constant 0 : index
    %c0_4 = arith.constant 0 : index
    %3 = vector.load %arg2[%c0_3, %c0_4] : memref<1x256xf32, #tpu.memory_space<vmem>>, vector<1x256xf32>
    %4 = vector.broadcast %3 : vector<1x256xf32> to vector<32x256xf32>
    %5 = arith.addf %2, %4 : vector<32x256xf32>
    %cst_5 = arith.constant 0.000000e+00 : f32
    %6 = vector.broadcast %cst_5 : f32 to vector<32x256xf32>
    %7 = arith.cmpf ogt, %5, %6 : vector<32x256xf32>
    %cst_6 = arith.constant 2.000000e-01 : f32
    %8 = vector.broadcast %cst_6 : f32 to vector<32x256xf32>
    %9 = arith.mulf %8, %5 : vector<32x256xf32>
    %10 = arith.select %7, %5, %9 : vector<32x256xi1>, vector<32x256xf32>
    %cst_7 = arith.constant dense<0.000000e+00> : vector<256xf32>
    %11 = vector.multi_reduction <add>, %10, %cst_7 [0] : vector<32x256xf32> to vector<256xf32>
    %12 = vector.shape_cast %11 : vector<256xf32> to vector<1x256xf32>
    %13 = arith.mulf %10, %10 : vector<32x256xf32>
    %cst_8 = arith.constant dense<0.000000e+00> : vector<256xf32>
    %14 = vector.multi_reduction <add>, %13, %cst_8 [0] : vector<32x256xf32> to vector<256xf32>
    %15 = vector.shape_cast %14 : vector<256xf32> to vector<1x256xf32>
    %cst_9 = arith.constant 3.125000e-02 : f32
    %16 = vector.broadcast %cst_9 : f32 to vector<1x256xf32>
    %17 = arith.mulf %12, %16 : vector<1x256xf32>
    %cst_10 = arith.constant 3.125000e-02 : f32
    %18 = vector.broadcast %cst_10 : f32 to vector<1x256xf32>
    %19 = arith.mulf %15, %18 : vector<1x256xf32>
    %20 = arith.mulf %17, %17 : vector<1x256xf32>
    %21 = arith.subf %19, %20 : vector<1x256xf32>
    %cst_11 = arith.constant 9.99999974E-6 : f32
    %22 = vector.broadcast %cst_11 : f32 to vector<1x256xf32>
    %23 = arith.addf %21, %22 : vector<1x256xf32>
    %24 = math.rsqrt %23 : vector<1x256xf32>
    %c0_12 = arith.constant 0 : index
    %c0_13 = arith.constant 0 : index
    %25 = vector.load %arg3[%c0_12, %c0_13] : memref<1x256xf32, #tpu.memory_space<vmem>>, vector<1x256xf32>
    %26 = arith.mulf %24, %25 : vector<1x256xf32>
    %27 = vector.broadcast %17 : vector<1x256xf32> to vector<32x256xf32>
    %28 = arith.subf %10, %27 : vector<32x256xf32>
    %29 = vector.broadcast %26 : vector<1x256xf32> to vector<32x256xf32>
    %30 = arith.mulf %28, %29 : vector<32x256xf32>
    %c0_14 = arith.constant 0 : index
    %c0_15 = arith.constant 0 : index
    %31 = vector.load %arg4[%c0_14, %c0_15] : memref<1x256xf32, #tpu.memory_space<vmem>>, vector<1x256xf32>
    %32 = vector.broadcast %31 : vector<1x256xf32> to vector<32x256xf32>
    %33 = arith.addf %30, %32 : vector<32x256xf32>
    %c0_16 = arith.constant 0 : index
    %c0_17 = arith.constant 0 : index
    %34 = vector.load %arg5[%c0_16, %c0_17] : memref<32x256xf32, #tpu.memory_space<vmem>>, vector<32x256xf32>
    %35 = arith.mulf %33, %34 : vector<32x256xf32>
    %c0_18 = arith.constant 0 : index
    %c0_19 = arith.constant 0 : index
    %36 = vector.load %arg7[%c0_18, %c0_19] : memref<2x32xf32, #tpu.memory_space<vmem>>, vector<2x32xf32>
    %cst_20 = arith.constant dense<0.000000e+00> : vector<2x256xf32>
    %37 = tpu.matmul %36, %35, %cst_20 {dimension_numbers = #tpu.dot_dimension_numbers<[1], [0], [0], [1], [0, 0, 1, 1], [], []>} : vector<2x32xf32>, vector<32x256xf32>, vector<2x256xf32> -> vector<2x256xf32>
    %cst_21 = arith.constant dense<0.000000e+00> : vector<2xf32>
    %38 = vector.multi_reduction <add>, %37, %cst_21 [1] : vector<2x256xf32> to vector<2xf32>
    %39 = vector.shape_cast %38 : vector<2xf32> to vector<2x1xf32>
    %c0_22 = arith.constant 0 : index
    %c0_23 = arith.constant 0 : index
    %40 = vector.load %arg6[%c0_22, %c0_23] : memref<1x1xf32, #tpu.memory_space<vmem>>, vector<1x1xf32>
    %41 = vector.broadcast %40 : vector<1x1xf32> to vector<2x1xf32>
    %42 = arith.addf %39, %41 : vector<2x1xf32>
    %cst_24 = arith.constant 5.000000e-01 : f32
    %43 = vector.broadcast %cst_24 : f32 to vector<2x1xf32>
    %44 = arith.mulf %43, %42 : vector<2x1xf32>
    %45 = math.tanh %44 : vector<2x1xf32>
    %cst_25 = arith.constant 1.000000e+00 : f32
    %46 = vector.broadcast %cst_25 : f32 to vector<2x1xf32>
    %47 = arith.addf %45, %46 : vector<2x1xf32>
    %cst_26 = arith.constant 5.000000e-01 : f32
    %48 = vector.broadcast %cst_26 : f32 to vector<2x1xf32>
    %49 = arith.mulf %48, %47 : vector<2x1xf32>
    %c0_27 = arith.constant 0 : index
    %c0_28 = arith.constant 0 : index
    %50 = vector.load %arg8[%c0_27, %c0_28] : memref<2x1xf32, #tpu.memory_space<vmem>>, vector<2x1xf32>
    tpu.vector_store %arg8[%c0_27, %c0_28], %49 {strides = array<i32>} : memref<2x1xf32, #tpu.memory_space<vmem>>, vector<2x1xf32>,
    return
  }
}

</mosaic_0001>

<llo_original>
// kernel: discriminator_forward.3
$region0: #{discriminator_forward.3}
  #allocation0 [shape = 'u32[]', space=smem, size = 0x4, offset = 0x4, fixed_abs, tag = 'smem constant byte address 0x4 - core index']
  #allocation1 [shape = 'u32[72,128]{1,0:T(1,128)}', space=vmem, size = 0x9000, scoped, tag = 'internal scratch']
  %s0 = inlined_call_operand.vmem [shape: bf16[512,128], index: 0, kind: input, shape index: {}]
  %s1 = inlined_call_operand.vmem [shape: bf16[128,64], index: 1, kind: input, shape index: {}]
  %s2 = inlined_call_operand.vmem [shape: f32[1,64], index: 2, kind: input, shape index: {}]
  %s3 = inlined_call_operand.vmem [shape: f32[1,64], index: 3, kind: input, shape index: {}]
  %s4 = inlined_call_operand.vmem [shape: f32[1,64], index: 4, kind: input, shape index: {}]
  %s5 = inlined_call_operand.vmem [shape: f32[512,64], index: 5, kind: output, shape index: {}]
  %s6 = sld [smem:[#allocation0]]
  $region30: #{discriminator_forward.3} parent=0
    _
  %s8 = ssub.s32 1, %s6
  %s9 = scalar_select 0, %s8, %s6
  // Predicated region
  $region2: #{discriminator_forward.3} parent=0 // pred_check
    _
  $region3: #{discriminator_forward.3} parent=0 // pred_check_branch
    %11 = sbr.rel (0) target = $region5
  $region4: #{discriminator_forward.3} parent=0 // pred_region
    _
  $region5: #{discriminator_forward.3} parent=0 // pred_fallthru
    _
  // Predicated region
  $region6: #{discriminator_forward.3} parent=0 // pred_check
    _
  $region7: #{discriminator_forward.3} parent=0 // pred_check_branch
    %13 = sbr.rel (0) target = $region9
  $region8: #{discriminator_forward.3} parent=0 // pred_region
    _
  $region9: #{discriminator_forward.3} parent=0 // pred_fallthru
    _
  // Predicated region
  $region10: #{discriminator_forward.3} parent=0 // pred_check
    _
  $region11: #{discriminator_forward.3} parent=0 // pred_check_branch
    %15 = sbr.rel (0) target = $region13
  $region12: #{discriminator_forward.3} parent=0 // pred_region
    _
  $region13: #{discriminator_forward.3} parent=0 // pred_fallthru
    _
  // Predicated region
  $region14: #{discriminator_forward.3} parent=0 // pred_check
    _
  $region15: #{discriminator_forward.3} parent=0 // pred_check_branch
    %17 = sbr.rel (0) target = $region17
  $region16: #{discriminator_forward.3} parent=0 // pred_region
    _
  $region17: #{discriminator_forward.3} parent=0 // pred_fallthru
    _
  // Predicated region
  $region18: #{discriminator_forward.3} parent=0 // pred_check
    _
  $region19: #{discriminator_forward.3} parent=0 // pred_check_branch
    %19 = sbr.rel (0) target = $region21
  $region20: #{discriminator_forward.3} parent=0 // pred_region
    _
  $region21: #{discriminator_forward.3} parent=0 // pred_fallthru
    _
  %v20 = vld [vmem:[%s0] sm:$0xf]
  %v21 = vld [vmem:[%s0 + $0x4] sm:$0xf]
  %v22 = vld [vmem:[%s0 + $0x8] sm:$0xf]
  %v23 = vld [vmem:[%s0 + $0xc] sm:$0xf]
  %v24 = vld [vmem:[%s0 + $0x10] sm:$0xf]
  %v25 = vld [vmem:[%s0 + $0x14] sm:$0xf]
  %v26 = vld [vmem:[%s0 + $0x18] sm:$0xf]
  %v27 = vld [vmem:[%s0 + $0x1c] sm:$0xf]
  %v28 = vld [vmem:[%s0 + $0x20] sm:$0xf]
  %v29 = vld [vmem:[%s0 + $0x24] sm:$0xf]
  %v30 = vld [vmem:[%s0 + $0x28] sm:$0xf]
  %v31 = vld [vmem:[%s0 + $0x2c] sm:$0xf]
  %v32 = vld [vmem:[%s0 + $0x30] sm:$0xf]
  %v33 = vld [vmem:[%s0 + $0x34] sm:$0xf]
  %v34 = vld [vmem:[%s0 + $0x38] sm:$0xf]
  %v35 = vld [vmem:[%s0 + $0x3c] sm:$0xf]
  %v36 = vld [vmem:[%s0 + $0x40] sm:$0xf]
  %v37 = vld [vmem:[%s0 + $0x44] sm:$0xf]
  %v38 = vld [vmem:[%s0 + $0x48] sm:$0xf]
  %v39 = vld [vmem:[%s0 + $0x4c] sm:$0xf]
  %v40 = vld [vmem:[%s0 + $0x50] sm:$0xf]
  %v41 = vld [vmem:[%s0 + $0x54] sm:$0xf]
  %v42 = vld [vmem:[%s0 + $0x58] sm:$0xf]
  %v43 = vld [vmem:[%s0 + $0x5c] sm:$0xf]
  %v44 = vld [vmem:[%s0 + $0x60] sm:$0xf]
  %v45 = vld [vmem:[%s0 + $0x64] sm:$0xf]
  %v46 = vld [vmem:[%s0 + $0x68] sm:$0xf]
  %v47 = vld [vmem:[%s0 + $0x6c] sm:$0xf]
  %v48 = vld [vmem:[%s0 + $0x70] sm:$0xf]
  %v49 = vld [vmem:[%s0 + $0x74] sm:$0xf]
  %v50 = vld [vmem:[%s0 + $0x78] sm:$0xf]
  %v51 = vld [vmem:[%s0 + $0x7c] sm:$0xf]
  %v52 = vld [vmem:[%s0 + $0x80] sm:$0xf]
  %v53 = vld [vmem:[%s0 + $0x84] sm:$0xf]
  %v54 = vld [vmem:[%s0 + $0x88] sm:$0xf]
  %v55 = vld [vmem:[%s0 + $0x8c] sm:$0xf]
  %v56 = vld [vmem:[%s0 + $0x90] sm:$0xf]
  %v57 = vld [vmem:[%s0 + $0x94] sm:$0xf]
  %v58 = vld [vmem:[%s0 + $0x98] sm:$0xf]
  %v59 = vld [vmem:[%s0 + $0x9c] sm:$0xf]
  %v60 = vld [vmem:[%s0 + $0xa0] sm:$0xf]
  %v61 = vld [vmem:[%s0 + $0xa4] sm:$0xf]
  %v62 = vld [vmem:[%s0 + $0xa8] sm:$0xf]
  %v63 = vld [vmem:[%s0 + $0xac] sm:$0xf]
  %v64 = vld [vmem:[%s0 + $0xb0] sm:$0xf]
  %v65 = vld [vmem:[%s0 + $0xb4] sm:$0xf]
  %v66 = vld [vmem:[%s0 + $0xb8] sm:$0xf]
  %v67 = vld [vmem:[%s0 + $0xbc] sm:$0xf]
  %v68 = vld [vmem:[%s0 + $0xc0] sm:$0xf]
  %v69 = vld [vmem:[%s0 + $0xc4] sm:$0xf]
  %v70 = vld [vmem:[%s0 + $0xc8] sm:$0xf]
  %v71 = vld [vmem:[%s0 + $0xcc] sm:$0xf]
  %v72 = vld [vmem:[%s0 + $0xd0] sm:$0xf]
  %v73 = vld [vmem:[%s0 + $0xd4] sm:$0xf]
  %v74 = vld [vmem:[%s0 + $0xd8] sm:$0xf]
  %v75 = vld [vmem:[%s0 + $0xdc] sm:$0xf]
  %v76 = vld [vmem:[%s0 + $0xe0] sm:$0xf]
  %v77 = vld [vmem:[%s0 + $0xe4] sm:$0xf]
  %v78 = vld [vmem:[%s0 + $0xe8] sm:$0xf]
  %v79 = vld [vmem:[%s0 + $0xec] sm:$0xf]
  %v80 = vld [vmem:[%s0 + $0xf0] sm:$0xf]
  %v81 = vld [vmem:[%s0 + $0xf4] sm:$0xf]
  %v82 = vld [vmem:[%s0 + $0xf8] sm:$0xf]
  %v83 = vld [vmem:[%s0 + $0xfc] sm:$0xf]
  %v84 = vld [vmem:[%s1] sm:$0xf]
  %v85 = vld [vmem:[%s1 + $0x4] sm:$0xf]
  %v86 = vld [vmem:[%s1 + $0x8] sm:$0xf]
  %v87 = vld [vmem:[%s1 + $0xc] sm:$0xf]
  %v88 = vld [vmem:[%s1 + $0x10] sm:$0xf]
  %v89 = vld [vmem:[%s1 + $0x14] sm:$0xf]
  %v90 = vld [vmem:[%s1 + $0x18] sm:$0xf]
  %v91 = vld [vmem:[%s1 + $0x1c] sm:$0xf]
  %v92 = vld [vmem:[%s1 + $0x20] sm:$0xf]
  %v93 = vld [vmem:[%s1 + $0x24] sm:$0xf]
  %v94 = vld [vmem:[%s1 + $0x28] sm:$0xf]
  %v95 = vld [vmem:[%s1 + $0x2c] sm:$0xf]
  %v96 = vld [vmem:[%s1 + $0x30] sm:$0xf]
  %v97 = vld [vmem:[%s1 + $0x34] sm:$0xf]
  %v98 = vld [vmem:[%s1 + $0x38] sm:$0xf]
  %v99 = vld [vmem:[%s1 + $0x3c] sm:$0xf]
  %v100 = vld [vmem:[%s2] sm:$0x1]
  %v102 = vperm.slane %v100, 0
  %v168 = vunpack.c.l.b16 %v20
  %v169 = vunpack.c.l.b16 %v21
  %v170 = vunpack.c.l.b16 %v22
  %v171 = vunpack.c.l.b16 %v23
  %v172 = vunpack.c.l.b16 %v24
  %v173 = vunpack.c.l.b16 %v25
  %v174 = vunpack.c.l.b16 %v26
  %v175 = vunpack.c.l.b16 %v27
  %v176 = vunpack.c.l.b16 %v28
  %v177 = vunpack.c.l.b16 %v29
  %v178 = vunpack.c.l.b16 %v30
  %v179 = vunpack.c.l.b16 %v31
  %v180 = vunpack.c.l.b16 %v32
  %v181 = vunpack.c.l.b16 %v33
  %v182 = vunpack.c.l.b16 %v34
  %v183 = vunpack.c.l.b16 %v35
  %v184 = vunpack.c.l.b16 %v36
  %v185 = vunpack.c.l.b16 %v37
  %v186 = vunpack.c.l.b16 %v38
  %v187 = vunpack.c.l.b16 %v39
  %v188 = vunpack.c.l.b16 %v40
  %v189 = vunpack.c.l.b16 %v41
  %v190 = vunpack.c.l.b16 %v42
  %v191 = vunpack.c.l.b16 %v43
  %v192 = vunpack.c.l.b16 %v44
  %v193 = vunpack.c.l.b16 %v45
  %v194 = vunpack.c.l.b16 %v46
  %v195 = vunpack.c.l.b16 %v47
  %v196 = vunpack.c.l.b16 %v48
  %v197 = vunpack.c.l.b16 %v49
  %v198 = vunpack.c.l.b16 %v50
  %v199 = vunpack.c.l.b16 %v51
  %v200 = vunpack.c.l.b16 %v52
  %v201 = vunpack.c.l.b16 %v53
  %v202 = vunpack.c.l.b16 %v54
  %v203 = vunpack.c.l.b16 %v55
  %v204 = vunpack.c.l.b16 %v56
  %v205 = vunpack.c.l.b16 %v57
  %v206 = vunpack.c.l.b16 %v58
  %v207 = vunpack.c.l.b16 %v59
  %v208 = vunpack.c.l.b16 %v60
  %v209 = vunpack.c.l.b16 %v61
  %v210 = vunpack.c.l.b16 %v62
  %v211 = vunpack.c.l.b16 %v63
  %v212 = vunpack.c.l.b16 %v64
  %v213 = vunpack.c.l.b16 %v65
  %v214 = vunpack.c.l.b16 %v66
  %v215 = vunpack.c.l.b16 %v67
  %v216 = vunpack.c.l.b16 %v68
  %v217 = vunpack.c.l.b16 %v69
  %v218 = vunpack.c.l.b16 %v70
  %v219 = vunpack.c.l.b16 %v71
  %v220 = vunpack.c.l.b16 %v72
  %v221 = vunpack.c.l.b16 %v73
  %v222 = vunpack.c.l.b16 %v74
  %v223 = vunpack.c.l.b16 %v75
  %v224 = vunpack.c.l.b16 %v76
  %v225 = vunpack.c.l.b16 %v77
  %v226 = vunpack.c.l.b16 %v78
  %v227 = vunpack.c.l.b16 %v79
  %v228 = vunpack.c.l.b16 %v80
  %v229 = vunpack.c.l.b16 %v81
  %v230 = vunpack.c.l.b16 %v82
  %v231 = vunpack.c.l.b16 %v83
  %v232 = vpack.c.b16 %v169, %v168
  %v233 = vpack.c.b16 %v171, %v170
  %v234 = vpack.c.b16 %v173, %v172
  %v235 = vpack.c.b16 %v175, %v174
  %v236 = vpack.c.b16 %v177, %v176
  %v237 = vpack.c.b16 %v179, %v178
  %v238 = vpack.c.b16 %v181, %v180
  %v239 = vpack.c.b16 %v183, %v182
  %v240 = vpack.c.b16 %v185, %v184
  %v241 = vpack.c.b16 %v187, %v186
  %v242 = vpack.c.b16 %v189, %v188
  %v243 = vpack.c.b16 %v191, %v190
  %v244 = vpack.c.b16 %v193, %v192
  %v245 = vpack.c.b16 %v195, %v194
  %v246 = vpack.c.b16 %v197, %v196
  %v247 = vpack.c.b16 %v199, %v198
  %v248 = vpack.c.b16 %v201, %v200
  %v249 = vpack.c.b16 %v203, %v202
  %v250 = vpack.c.b16 %v205, %v204
  %v251 = vpack.c.b16 %v207, %v206
  %v252 = vpack.c.b16 %v209, %v208
  %v253 = vpack.c.b16 %v211, %v210
  %v254 = vpack.c.b16 %v213, %v212
  %v255 = vpack.c.b16 %v215, %v214
  %v256 = vpack.c.b16 %v217, %v216
  %v257 = vpack.c.b16 %v219, %v218
  %v258 = vpack.c.b16 %v221, %v220
  %v259 = vpack.c.b16 %v223, %v222
  %v260 = vpack.c.b16 %v225, %v224
  %v261 = vpack.c.b16 %v227, %v226
  %v262 = vpack.c.b16 %v229, %v228
  %v263 = vpack.c.b16 %v231, %v230
  %v312 = vunpack.c.l.b16 %v84
  %v313 = vunpack.c.l.b16 %v85
  %v314 = vunpack.c.l.b16 %v86
  %v315 = vunpack.c.l.b16 %v87
  %v316 = vunpack.c.l.b16 %v88
  %v317 = vunpack.c.l.b16 %v89
  %v318 = vunpack.c.l.b16 %v90
  %v319 = vunpack.c.l.b16 %v91
  %v320 = vunpack.c.l.b16 %v92
  %v321 = vunpack.c.l.b16 %v93
  %v322 = vunpack.c.l.b16 %v94
  %v323 = vunpack.c.l.b16 %v95
  %v324 = vunpack.c.l.b16 %v96
  %v325 = vunpack.c.l.b16 %v97
  %v326 = vunpack.c.l.b16 %v98
  %v327 = vunpack.c.l.b16 %v99
  %v328 = vpack.c.b16 %v313, %v312
  %v329 = vpack.c.b16 %v315, %v314
  %v330 = vpack.c.b16 %v317, %v316
  %v331 = vpack.c.b16 %v319, %v318
  %v332 = vpack.c.b16 %v321, %v320
  %v333 = vpack.c.b16 %v323, %v322
  %v334 = vpack.c.b16 %v325, %v324
  %v335 = vpack.c.b16 %v327, %v326
  %344 = vmatpush.bf16.msra.mxu0 %v335
  %345 = vmatpush.bf16.msra.mxu0 %v334
  %346 = vmatpush.bf16.msra.mxu0 %v333
  %347 = vmatpush.bf16.msra.mxu0 %v332
  %348 = vmatpush.bf16.msra.mxu0 %v331
  %349 = vmatpush.bf16.msra.mxu0 %v330
  %350 = vmatpush.bf16.msra.mxu0 %v329
  %351 = vmatpush.bf16.msra.mxu0 %v328
  %352 = vmatmul.bf16.gmra.mxu0 %v232
  %v353 = vpop.f32.mrf.mxu0
  %v354 = vadd.f32 %v102, %v353
  %v355 = vpop.f32.mrf.mxu0
  %v356 = vadd.f32 %v102, %v355
  %357 = vmatmul.bf16.gmra.mxu0 %v233
  %v358 = vpop.f32.mrf.mxu0
  %v359 = vadd.f32 %v102, %v358
  %v360 = vpop.f32.mrf.mxu0
  %v361 = vadd.f32 %v102, %v360
  %362 = vmatmul.bf16.gmra.mxu0 %v234
  %v363 = vpop.f32.mrf.mxu0
  %v364 = vadd.f32 %v102, %v363
  %v365 = vpop.f32.mrf.mxu0
  %v366 = vadd.f32 %v102, %v365
  %367 = vmatmul.bf16.gmra.mxu0 %v235
  %v368 = vpop.f32.mrf.mxu0
  %v369 = vadd.f32 %v102, %v368
  %v370 = vpop.f32.mrf.mxu0
  %v371 = vadd.f32 %v102, %v370
  %372 = vmatmul.bf16.gmra.mxu0 %v236
  %v373 = vpop.f32.mrf.mxu0
  %v374 = vadd.f32 %v102, %v373
  %v375 = vpop.f32.mrf.mxu0
  %v376 = vadd.f32 %v102, %v375
  %377 = vmatmul.bf16.gmra.mxu0 %v237
  %v378 = vpop.f32.mrf.mxu0
  %v379 = vadd.f32 %v102, %v378
  %v380 = vpop.f32.mrf.mxu0
  %v381 = vadd.f32 %v102, %v380
  %382 = vmatmul.bf16.gmra.mxu0 %v238
  %v383 = vpop.f32.mrf.mxu0
  %v384 = vadd.f32 %v102, %v383
  %v385 = vpop.f32.mrf.mxu0
  %v386 = vadd.f32 %v102, %v385
  %387 = vmatmul.bf16.gmra.mxu0 %v239
  %v388 = vpop.f32.mrf.mxu0
  %v389 = vadd.f32 %v102, %v388
  %v390 = vpop.f32.mrf.mxu0
  %v391 = vadd.f32 %v102, %v390
  %392 = vmatmul.bf16.gmra.mxu0 %v240
  %v393 = vpop.f32.mrf.mxu0
  %v394 = vadd.f32 %v102, %v393
  %v395 = vpop.f32.mrf.mxu0
  %v396 = vadd.f32 %v102, %v395
  %397 = vmatmul.bf16.gmra.mxu0 %v241
  %v398 = vpop.f32.mrf.mxu0
  %v399 = vadd.f32 %v102, %v398
  %v400 = vpop.f32.mrf.mxu0
  %v401 = vadd.f32 %v102, %v400
  %402 = vmatmul.bf16.gmra.mxu0 %v242
  %v403 = vpop.f32.mrf.mxu0
  %v404 = vadd.f32 %v102, %v403
  %v405 = vpop.f32.mrf.mxu0
  %v406 = vadd.f32 %v102, %v405
  %407 = vmatmul.bf16.gmra.mxu0 %v243
  %v408 = vpop.f32.mrf.mxu0
  %v409 = vadd.f32 %v102, %v408
  %v410 = vpop.f32.mrf.mxu0
  %v411 = vadd.f32 %v102, %v410
  %412 = vmatmul.bf16.gmra.mxu0 %v244
  %v413 = vpop.f32.mrf.mxu0
  %v414 = vadd.f32 %v102, %v413
  %v415 = vpop.f32.mrf.mxu0
  %v416 = vadd.f32 %v102, %v415
  %417 = vmatmul.bf16.gmra.mxu0 %v245
  %v418 = vpop.f32.mrf.mxu0
  %v419 = vadd.f32 %v102, %v418
  %v420 = vpop.f32.mrf.mxu0
  %v421 = vadd.f32 %v102, %v420
  %422 = vmatmul.bf16.gmra.mxu0 %v246
  %v423 = vpop.f32.mrf.mxu0
  %v424 = vadd.f32 %v102, %v423
  %v425 = vpop.f32.mrf.mxu0
  %v426 = vadd.f32 %v102, %v425
  %427 = vmatmul.bf16.gmra.mxu0 %v247
  %v428 = vpop.f32.mrf.mxu0
  %v429 = vadd.f32 %v102, %v428
  %v430 = vpop.f32.mrf.mxu0
  %v431 = vadd.f32 %v102, %v430
  %432 = vmatmul.bf16.gmra.mxu0 %v248
  %v433 = vpop.f32.mrf.mxu0
  %v434 = vadd.f32 %v102, %v433
  %v435 = vpop.f32.mrf.mxu0
  %v436 = vadd.f32 %v102, %v435
  %437 = vmatmul.bf16.gmra.mxu0 %v249
  %v438 = vpop.f32.mrf.mxu0
  %v439 = vadd.f32 %v102, %v438
  %v440 = vpop.f32.mrf.mxu0
  %v441 = vadd.f32 %v102, %v440
  %442 = vmatmul.bf16.gmra.mxu0 %v250
  %v443 = vpop.f32.mrf.mxu0
  %v444 = vadd.f32 %v102, %v443
  %v445 = vpop.f32.mrf.mxu0
  %v446 = vadd.f32 %v102, %v445
  %447 = vmatmul.bf16.gmra.mxu0 %v251
  %v448 = vpop.f32.mrf.mxu0
  %v449 = vadd.f32 %v102, %v448
  %v450 = vpop.f32.mrf.mxu0
  %v451 = vadd.f32 %v102, %v450
  %452 = vmatmul.bf16.gmra.mxu0 %v252
  %v453 = vpop.f32.mrf.mxu0
  %v454 = vadd.f32 %v102, %v453
  %v455 = vpop.f32.mrf.mxu0
  %v456 = vadd.f32 %v102, %v455
  %457 = vmatmul.bf16.gmra.mxu0 %v253
  %v458 = vpop.f32.mrf.mxu0
  %v459 = vadd.f32 %v102, %v458
  %v460 = vpop.f32.mrf.mxu0
  %v461 = vadd.f32 %v102, %v460
  %462 = vmatmul.bf16.gmra.mxu0 %v254
  %v463 = vpop.f32.mrf.mxu0
  %v464 = vadd.f32 %v102, %v463
  %v465 = vpop.f32.mrf.mxu0
  %v466 = vadd.f32 %v102, %v465
  %467 = vmatmul.bf16.gmra.mxu0 %v255
  %v468 = vpop.f32.mrf.mxu0
  %v469 = vadd.f32 %v102, %v468
  %v470 = vpop.f32.mrf.mxu0
  %v471 = vadd.f32 %v102, %v470
  %472 = vmatmul.bf16.gmra.mxu0 %v256
  %v473 = vpop.f32.mrf.mxu0
  %v474 = vadd.f32 %v102, %v473
  %v475 = vpop.f32.mrf.mxu0
  %v476 = vadd.f32 %v102, %v475
  %477 = vmatmul.bf16.gmra.mxu0 %v257
  %v478 = vpop.f32.mrf.mxu0
  %v479 = vadd.f32 %v102, %v478
  %v480 = vpop.f32.mrf.mxu0
  %v481 = vadd.f32 %v102, %v480
  %482 = vmatmul.bf16.gmra.mxu0 %v258
  %v483 = vpop.f32.mrf.mxu0
  %v484 = vadd.f32 %v102, %v483
  %v485 = vpop.f32.mrf.mxu0
  %v486 = vadd.f32 %v102, %v485
  %487 = vmatmul.bf16.gmra.mxu0 %v259
  %v488 = vpop.f32.mrf.mxu0
  %v489 = vadd.f32 %v102, %v488
  %v490 = vpop.f32.mrf.mxu0
  %v491 = vadd.f32 %v102, %v490
  %492 = vmatmul.bf16.gmra.mxu0 %v260
  %v493 = vpop.f32.mrf.mxu0
  %v494 = vadd.f32 %v102, %v493
  %v495 = vpop.f32.mrf.mxu0
  %v496 = vadd.f32 %v102, %v495
  %497 = vmatmul.bf16.gmra.mxu0 %v261
  %v498 = vpop.f32.mrf.mxu0
  %v499 = vadd.f32 %v102, %v498
  %v500 = vpop.f32.mrf.mxu0
  %v501 = vadd.f32 %v102, %v500
  %502 = vmatmul.bf16.gmra.mxu0 %v262
  %v503 = vpop.f32.mrf.mxu0
  %v504 = vadd.f32 %v102, %v503
  %v505 = vpop.f32.mrf.mxu0
  %v506 = vadd.f32 %v102, %v505
  %507 = vmatmul.bf16.gmra.mxu0 %v263
  %v508 = vpop.f32.mrf.mxu0
  %v509 = vadd.f32 %v102, %v508
  %v510 = vpop.f32.mrf.mxu0
  %v511 = vadd.f32 %v102, %v510
  %512 = vdwg.mxu0
  %vm513 = vcmp.gt.f32.partialorder %v354, 0.0
  %vm514 = vcmp.gt.f32.partialorder %v356, 0.0
  %vm515 = vcmp.gt.f32.partialorder %v359, 0.0
  %vm516 = vcmp.gt.f32.partialorder %v361, 0.0
  %vm517 = vcmp.gt.f32.partialorder %v364, 0.0
  %vm518 = vcmp.gt.f32.partialorder %v366, 0.0
  %vm519 = vcmp.gt.f32.partialorder %v369, 0.0
  %vm520 = vcmp.gt.f32.partialorder %v371, 0.0
  %vm521 = vcmp.gt.f32.partialorder %v374, 0.0
  %vm522 = vcmp.gt.f32.partialorder %v376, 0.0
  %vm523 = vcmp.gt.f32.partialorder %v379, 0.0
  %vm524 = vcmp.gt.f32.partialorder %v381, 0.0
  %vm525 = vcmp.gt.f32.partialorder %v384, 0.0
  %vm526 = vcmp.gt.f32.partialorder %v386, 0.0
  %vm527 = vcmp.gt.f32.partialorder %v389, 0.0
  %vm528 = vcmp.gt.f32.partialorder %v391, 0.0
  %vm529 = vcmp.gt.f32.partialorder %v394, 0.0
  %vm530 = vcmp.gt.f32.partialorder %v396, 0.0
  %vm531 = vcmp.gt.f32.partialorder %v399, 0.0
  %vm532 = vcmp.gt.f32.partialorder %v401, 0.0
  %vm533 = vcmp.gt.f32.partialorder %v404, 0.0
  %vm534 = vcmp.gt.f32.partialorder %v406, 0.0
  %vm535 = vcmp.gt.f32.partialorder %v409, 0.0
  %vm536 = vcmp.gt.f32.partialorder %v411, 0.0
  %vm537 = vcmp.gt.f32.partialorder %v414, 0.0
  %vm538 = vcmp.gt.f32.partialorder %v416, 0.0
  %vm539 = vcmp.gt.f32.partialorder %v419, 0.0
  %vm540 = vcmp.gt.f32.partialorder %v421, 0.0
  %vm541 = vcmp.gt.f32.partialorder %v424, 0.0
  %vm542 = vcmp.gt.f32.partialorder %v426, 0.0
  %vm543 = vcmp.gt.f32.partialorder %v429, 0.0
  %vm544 = vcmp.gt.f32.partialorder %v431, 0.0
  %vm545 = vcmp.gt.f32.partialorder %v434, 0.0
  %vm546 = vcmp.gt.f32.partialorder %v436, 0.0
  %vm547 = vcmp.gt.f32.partialorder %v439, 0.0
  %vm548 = vcmp.gt.f32.partialorder %v441, 0.0
  %vm549 = vcmp.gt.f32.partialorder %v444, 0.0
  %vm550 = vcmp.gt.f32.partialorder %v446, 0.0
  %vm551 = vcmp.gt.f32.partialorder %v449, 0.0
  %vm552 = vcmp.gt.f32.partialorder %v451, 0.0
  %vm553 = vcmp.gt.f32.partialorder %v454, 0.0
  %vm554 = vcmp.gt.f32.partialorder %v456, 0.0
  %vm555 = vcmp.gt.f32.partialorder %v459, 0.0
  %vm556 = vcmp.gt.f32.partialorder %v461, 0.0
  %vm557 = vcmp.gt.f32.partialorder %v464, 0.0
  %vm558 = vcmp.gt.f32.partialorder %v466, 0.0
  %vm559 = vcmp.gt.f32.partialorder %v469, 0.0
  %vm560 = vcmp.gt.f32.partialorder %v471, 0.0
  %vm561 = vcmp.gt.f32.partialorder %v474, 0.0
  %vm562 = vcmp.gt.f32.partialorder %v476, 0.0
  %vm563 = vcmp.gt.f32.partialorder %v479, 0.0
  %vm564 = vcmp.gt.f32.partialorder %v481, 0.0
  %vm565 = vcmp.gt.f32.partialorder %v484, 0.0
  %vm566 = vcmp.gt.f32.partialorder %v486, 0.0
  %vm567 = vcmp.gt.f32.partialorder %v489, 0.0
  %vm568 = vcmp.gt.f32.partialorder %v491, 0.0
  %vm569 = vcmp.gt.f32.partialorder %v494, 0.0
  %vm570 = vcmp.gt.f32.partialorder %v496, 0.0
  %vm571 = vcmp.gt.f32.partialorder %v499, 0.0
  %vm572 = vcmp.gt.f32.partialorder %v501, 0.0
  %vm573 = vcmp.gt.f32.partialorder %v504, 0.0
  %vm574 = vcmp.gt.f32.partialorder %v506, 0.0
  %vm575 = vcmp.gt.f32.partialorder %v509, 0.0
  %vm576 = vcmp.gt.f32.partialorder %v511, 0.0
  %v577 = vmul.f32 %v354, 0.2
  %v578 = vmul.f32 %v356, 0.2
  %v579 = vmul.f32 %v359, 0.2
  %v580 = vmul.f32 %v361, 0.2
  %v581 = vmul.f32 %v364, 0.2
  %v582 = vmul.f32 %v366, 0.2
  %v583 = vmul.f32 %v369, 0.2
  %v584 = vmul.f32 %v371, 0.2
  %v585 = vmul.f32 %v374, 0.2
  %v586 = vmul.f32 %v376, 0.2
  %v587 = vmul.f32 %v379, 0.2
  %v588 = vmul.f32 %v381, 0.2
  %v589 = vmul.f32 %v384, 0.2
  %v590 = vmul.f32 %v386, 0.2
  %v591 = vmul.f32 %v389, 0.2
  %v592 = vmul.f32 %v391, 0.2
  %v593 = vmul.f32 %v394, 0.2
  %v594 = vmul.f32 %v396, 0.2
  %v595 = vmul.f32 %v399, 0.2
  %v596 = vmul.f32 %v401, 0.2
  %v597 = vmul.f32 %v404, 0.2
  %v598 = vmul.f32 %v406, 0.2
  %v599 = vmul.f32 %v409, 0.2
  %v600 = vmul.f32 %v411, 0.2
  %v601 = vmul.f32 %v414, 0.2
  %v602 = vmul.f32 %v416, 0.2
  %v603 = vmul.f32 %v419, 0.2
  %v604 = vmul.f32 %v421, 0.2
  %v605 = vmul.f32 %v424, 0.2
  %v606 = vmul.f32 %v426, 0.2
  %v607 = vmul.f32 %v429, 0.2
  %v608 = vmul.f32 %v431, 0.2
  %v609 = vmul.f32 %v434, 0.2
  %v610 = vmul.f32 %v436, 0.2
  %v611 = vmul.f32 %v439, 0.2
  %v612 = vmul.f32 %v441, 0.2
  %v613 = vmul.f32 %v444, 0.2
  %v614 = vmul.f32 %v446, 0.2
  %v615 = vmul.f32 %v449, 0.2
  %v616 = vmul.f32 %v451, 0.2
  %v617 = vmul.f32 %v454, 0.2
  %v618 = vmul.f32 %v456, 0.2
  %v619 = vmul.f32 %v459, 0.2
  %v620 = vmul.f32 %v461, 0.2
  %v621 = vmul.f32 %v464, 0.2
  %v622 = vmul.f32 %v466, 0.2
  %v623 = vmul.f32 %v469, 0.2
  %v624 = vmul.f32 %v471, 0.2
  %v625 = vmul.f32 %v474, 0.2
  %v626 = vmul.f32 %v476, 0.2
  %v627 = vmul.f32 %v479, 0.2
  %v628 = vmul.f32 %v481, 0.2
  %v629 = vmul.f32 %v484, 0.2
  %v630 = vmul.f32 %v486, 0.2
  %v631 = vmul.f32 %v489, 0.2
  %v632 = vmul.f32 %v491, 0.2
  %v633 = vmul.f32 %v494, 0.2
  %v634 = vmul.f32 %v496, 0.2
  %v635 = vmul.f32 %v499, 0.2
  %v636 = vmul.f32 %v501, 0.2
  %v637 = vmul.f32 %v504, 0.2
  %v638 = vmul.f32 %v506, 0.2
  %v639 = vmul.f32 %v509, 0.2
  %v640 = vmul.f32 %v511, 0.2
  %v641 = vsel %vm513, %v354, %v577
  %v642 = vsel %vm514, %v356, %v578
  %v643 = vsel %vm515, %v359, %v579
  %v644 = vsel %vm516, %v361, %v580
  %v645 = vsel %vm517, %v364, %v581
  %v646 = vsel %vm518, %v366, %v582
  %v647 = vsel %vm519, %v369, %v583
  %v648 = vsel %vm520, %v371, %v584
  %v649 = vsel %vm521, %v374, %v585
  %v650 = vsel %vm522, %v376, %v586
  %v651 = vsel %vm523, %v379, %v587
  %v652 = vsel %vm524, %v381, %v588
  %v653 = vsel %vm525, %v384, %v589
  %v654 = vsel %vm526, %v386, %v590
  %v655 = vsel %vm527, %v389, %v591
  %v656 = vsel %vm528, %v391, %v592
  %v657 = vsel %vm529, %v394, %v593
  %v658 = vsel %vm530, %v396, %v594
  %v659 = vsel %vm531, %v399, %v595
  %v660 = vsel %vm532, %v401, %v596
  %v661 = vsel %vm533, %v404, %v597
  %v662 = vsel %vm534, %v406, %v598
  %v663 = vsel %vm535, %v409, %v599
  %v664 = vsel %vm536, %v411, %v600
  %v665 = vsel %vm537, %v414, %v601
  %v666 = vsel %vm538, %v416, %v602
  %v667 = vsel %vm539, %v419, %v603
  %v668 = vsel %vm540, %v421, %v604
  %v669 = vsel %vm541, %v424, %v605
  %v670 = vsel %vm542, %v426, %v606
  %v671 = vsel %vm543, %v429, %v607
  %v672 = vsel %vm544, %v431, %v608
  %v673 = vsel %vm545, %v434, %v609
  %v674 = vsel %vm546, %v436, %v610
  %v675 = vsel %vm547, %v439, %v611
  %v676 = vsel %vm548, %v441, %v612
  %v677 = vsel %vm549, %v444, %v613
  %v678 = vsel %vm550, %v446, %v614
  %v679 = vsel %vm551, %v449, %v615
  %v680 = vsel %vm552, %v451, %v616
  %v681 = vsel %vm553, %v454, %v617
  %v682 = vsel %vm554, %v456, %v618
  %v683 = vsel %vm555, %v459, %v619
  %v684 = vsel %vm556, %v461, %v620
  %v685 = vsel %vm557, %v464, %v621
  %v686 = vsel %vm558, %v466, %v622
  %v687 = vsel %vm559, %v469, %v623
  %v688 = vsel %vm560, %v471, %v624
  %v689 = vsel %vm561, %v474, %v625
  %v690 = vsel %vm562, %v476, %v626
  %v691 = vsel %vm563, %v479, %v627
  %v692 = vsel %vm564, %v481, %v628
  %v693 = vsel %vm565, %v484, %v629
  %v694 = vsel %vm566, %v486, %v630
  %v695 = vsel %vm567, %v489, %v631
  %v696 = vsel %vm568, %v491, %v632
  %v697 = vsel %vm569, %v494, %v633
  %v698 = vsel %vm570, %v496, %v634
  %v699 = vsel %vm571, %v499, %v635
  %v700 = vsel %vm572, %v501, %v636
  %v701 = vsel %vm573, %v504, %v637
  %v702 = vsel %vm574, %v506, %v638
  %v703 = vsel %vm575, %v509, %v639
  %v704 = vsel %vm576, %v511, %v640
  %vm705 = vcmask 523264
  %v706 = vsel %vm705, %v641, 0.0
  %v707 = vsel %vm705, %v642, 0.0
  %v708 = vadd.f32 %v706, %v707
  %v709 = vsel %vm705, %v643, 0.0
  %v710 = vadd.f32 %v708, %v709
  %v711 = vsel %vm705, %v644, 0.0
  %v712 = vadd.f32 %v710, %v711
  %v713 = vsel %vm705, %v645, 0.0
  %v714 = vadd.f32 %v712, %v713
  %v715 = vsel %vm705, %v646, 0.0
  %v716 = vadd.f32 %v714, %v715
  %v717 = vsel %vm705, %v647, 0.0
  %v718 = vadd.f32 %v716, %v717
  %v719 = vsel %vm705, %v648, 0.0
  %v720 = vadd.f32 %v718, %v719
  %v721 = vsel %vm705, %v649, 0.0
  %v722 = vadd.f32 %v720, %v721
  %v723 = vsel %vm705, %v650, 0.0
  %v724 = vadd.f32 %v722, %v723
  %v725 = vsel %vm705, %v651, 0.0
  %v726 = vadd.f32 %v724, %v725
  %v727 = vsel %vm705, %v652, 0.0
  %v728 = vadd.f32 %v726, %v727
  %v729 = vsel %vm705, %v653, 0.0
  %v730 = vadd.f32 %v728, %v729
  %v731 = vsel %vm705, %v654, 0.0
  %v732 = vadd.f32 %v730, %v731
  %v733 = vsel %vm705, %v655, 0.0
  %v734 = vadd.f32 %v732, %v733
  %v735 = vsel %vm705, %v656, 0.0
  %v736 = vadd.f32 %v734, %v735
  %v737 = vsel %vm705, %v657, 0.0
  %v738 = vadd.f32 %v736, %v737
  %v739 = vsel %vm705, %v658, 0.0
  %v740 = vadd.f32 %v738, %v739
  %v741 = vsel %vm705, %v659, 0.0
  %v742 = vadd.f32 %v740, %v741
  %v743 = vsel %vm705, %v660, 0.0
  %v744 = vadd.f32 %v742, %v743
  %v745 = vsel %vm705, %v661, 0.0
  %v746 = vadd.f32 %v744, %v745
  %v747 = vsel %vm705, %v662, 0.0
  %v748 = vadd.f32 %v746, %v747
  %v749 = vsel %vm705, %v663, 0.0
  %v750 = vadd.f32 %v748, %v749
  %v751 = vsel %vm705, %v664, 0.0
  %v752 = vadd.f32 %v750, %v751
  %v753 = vsel %vm705, %v665, 0.0
  %v754 = vadd.f32 %v752, %v753
  %v755 = vsel %vm705, %v666, 0.0
  %v756 = vadd.f32 %v754, %v755
  %v757 = vsel %vm705, %v667, 0.0
  %v758 = vadd.f32 %v756, %v757
  %v759 = vsel %vm705, %v668, 0.0
  %v760 = vadd.f32 %v758, %v759
  %v761 = vsel %vm705, %v669, 0.0
  %v762 = vadd.f32 %v760, %v761
  %v763 = vsel %vm705, %v670, 0.0
  %v764 = vadd.f32 %v762, %v763
  %v765 = vsel %vm705, %v671, 0.0
  %v766 = vadd.f32 %v764, %v765
  %v767 = vsel %vm705, %v672, 0.0
  %v768 = vadd.f32 %v766, %v767
  %v769 = vsel %vm705, %v673, 0.0
  %v770 = vadd.f32 %v768, %v769
  %v771 = vsel %vm705, %v674, 0.0
  %v772 = vadd.f32 %v770, %v771
  %v773 = vsel %vm705, %v675, 0.0
  %v774 = vadd.f32 %v772, %v773
  %v775 = vsel %vm705, %v676, 0.0
  %v776 = vadd.f32 %v774, %v775
  %v777 = vsel %vm705, %v677, 0.0
  %v778 = vadd.f32 %v776, %v777
  %v779 = vsel %vm705, %v678, 0.0
  %v780 = vadd.f32 %v778, %v779
  %v781 = vsel %vm705, %v679, 0.0
  %v782 = vadd.f32 %v780, %v781
  %v783 = vsel %vm705, %v680, 0.0
  %v784 = vadd.f32 %v782, %v783
  %v785 = vsel %vm705, %v681, 0.0
  %v786 = vadd.f32 %v784, %v785
  %v787 = vsel %vm705, %v682, 0.0
  %v788 = vadd.f32 %v786, %v787
  %v789 = vsel %vm705, %v683, 0.0
  %v790 = vadd.f32 %v788, %v789
  %v791 = vsel %vm705, %v684, 0.0
  %v792 = vadd.f32 %v790, %v791
  %v793 = vsel %vm705, %v685, 0.0
  %v794 = vadd.f32 %v792, %v793
  %v795 = vsel %vm705, %v686, 0.0
  %v796 = vadd.f32 %v794, %v795
  %v797 = vsel %vm705, %v687, 0.0
  %v798 = vadd.f32 %v796, %v797
  %v799 = vsel %vm705, %v688, 0.0
  %v800 = vadd.f32 %v798, %v799
  %v801 = vsel %vm705, %v689, 0.0
  %v802 = vadd.f32 %v800, %v801
  %v803 = vsel %vm705, %v690, 0.0
  %v804 = vadd.f32 %v802, %v803
  %v805 = vsel %vm705, %v691, 0.0
  %v806 = vadd.f32 %v804, %v805
  %v807 = vsel %vm705, %v692, 0.0
  %v808 = vadd.f32 %v806, %v807
  %v809 = vsel %vm705, %v693, 0.0
  %v810 = vadd.f32 %v808, %v809
  %v811 = vsel %vm705, %v694, 0.0
  %v812 = vadd.f32 %v810, %v811
  %v813 = vsel %vm705, %v695, 0.0
  %v814 = vadd.f32 %v812, %v813
  %v815 = vsel %vm705, %v696, 0.0
  %v816 = vadd.f32 %v814, %v815
  %v817 = vsel %vm705, %v697, 0.0
  %v818 = vadd.f32 %v816, %v817
  %v819 = vsel %vm705, %v698, 0.0
  %v820 = vadd.f32 %v818, %v819
  %v821 = vsel %vm705, %v699, 0.0
  %v822 = vadd.f32 %v820, %v821
  %v823 = vsel %vm705, %v700, 0.0
  %v824 = vadd.f32 %v822, %v823
  %v825 = vsel %vm705, %v701, 0.0
  %v826 = vadd.f32 %v824, %v825
  %v827 = vsel %vm705, %v702, 0.0
  %v828 = vadd.f32 %v826, %v827
  %v829 = vsel %vm705, %v703, 0.0
  %v830 = vadd.f32 %v828, %v829
  %v831 = vsel %vm705, %v704, 0.0
  %v832 = vadd.f32 %v830, %v831
  %v833 = vrot.slane %v832, 4
  %v834 = vadd.f32 %v832, %v833
  %v835 = vrot.slane %v834, 2
  %v836 = vadd.f32 %v834, %v835
  %v837 = vrot.slane %v836, 1
  %v838 = vadd.f32 %v836, %v837
  %v839 = vmul.f32 %v641, %v641
  %v840 = vmul.f32 %v642, %v642
  %v841 = vmul.f32 %v643, %v643
  %v842 = vmul.f32 %v644, %v644
  %v843 = vmul.f32 %v645, %v645
  %v844 = vmul.f32 %v646, %v646
  %v845 = vmul.f32 %v647, %v647
  %v846 = vmul.f32 %v648, %v648
  %v847 = vmul.f32 %v649, %v649
  %v848 = vmul.f32 %v650, %v650
  %v849 = vmul.f32 %v651, %v651
  %v850 = vmul.f32 %v652, %v652
  %v851 = vmul.f32 %v653, %v653
  %v852 = vmul.f32 %v654, %v654
  %v853 = vmul.f32 %v655, %v655
  %v854 = vmul.f32 %v656, %v656
  %v855 = vmul.f32 %v657, %v657
  %v856 = vmul.f32 %v658, %v658
  %v857 = vmul.f32 %v659, %v659
  %v858 = vmul.f32 %v660, %v660
  %v859 = vmul.f32 %v661, %v661
  %v860 = vmul.f32 %v662, %v662
  %v861 = vmul.f32 %v663, %v663
  %v862 = vmul.f32 %v664, %v664
  %v863 = vmul.f32 %v665, %v665
  %v864 = vmul.f32 %v666, %v666
  %v865 = vmul.f32 %v667, %v667
  %v866 = vmul.f32 %v668, %v668
  %v867 = vmul.f32 %v669, %v669
  %v868 = vmul.f32 %v670, %v670
  %v869 = vmul.f32 %v671, %v671
  %v870 = vmul.f32 %v672, %v672
  %v871 = vmul.f32 %v673, %v673
  %v872 = vmul.f32 %v674, %v674
  %v873 = vmul.f32 %v675, %v675
  %v874 = vmul.f32 %v676, %v676
  %v875 = vmul.f32 %v677, %v677
  %v876 = vmul.f32 %v678, %v678
  %v877 = vmul.f32 %v679, %v679
  %v878 = vmul.f32 %v680, %v680
  %v879 = vmul.f32 %v681, %v681
  %v880 = vmul.f32 %v682, %v682
  %v881 = vmul.f32 %v683, %v683
  %v882 = vmul.f32 %v684, %v684
  %v883 = vmul.f32 %v685, %v685
  %v884 = vmul.f32 %v686, %v686
  %v885 = vmul.f32 %v687, %v687
  %v886 = vmul.f32 %v688, %v688
  %v887 = vmul.f32 %v689, %v689
  %v888 = vmul.f32 %v690, %v690
  %v889 = vmul.f32 %v691, %v691
  %v890 = vmul.f32 %v692, %v692
  %v891 = vmul.f32 %v693, %v693
  %v892 = vmul.f32 %v694, %v694
  %v893 = vmul.f32 %v695, %v695
  %v894 = vmul.f32 %v696, %v696
  %v895 = vmul.f32 %v697, %v697
  %v896 = vmul.f32 %v698, %v698
  %v897 = vmul.f32 %v699, %v699
  %v898 = vmul.f32 %v700, %v700
  %v899 = vmul.f32 %v701, %v701
  %v900 = vmul.f32 %v702, %v702
  %v901 = vmul.f32 %v703, %v703
  %v902 = vmul.f32 %v704, %v704
  %v903 = vsel %vm705, %v839, 0.0
  %v904 = vsel %vm705, %v840, 0.0
  %v905 = vadd.f32 %v903, %v904
  %v906 = vsel %vm705, %v841, 0.0
  %v907 = vadd.f32 %v905, %v906
  %v908 = vsel %vm705, %v842, 0.0
  %v909 = vadd.f32 %v907, %v908
  %v910 = vsel %vm705, %v843, 0.0
  %v911 = vadd.f32 %v909, %v910
  %v912 = vsel %vm705, %v844, 0.0
  %v913 = vadd.f32 %v911, %v912
  %v914 = vsel %vm705, %v845, 0.0
  %v915 = vadd.f32 %v913, %v914
  %v916 = vsel %vm705, %v846, 0.0
  %v917 = vadd.f32 %v915, %v916
  %v918 = vsel %vm705, %v847, 0.0
  %v919 = vadd.f32 %v917, %v918
  %v920 = vsel %vm705, %v848, 0.0
  %v921 = vadd.f32 %v919, %v920
  %v922 = vsel %vm705, %v849, 0.0
  %v923 = vadd.f32 %v921, %v922
  %v924 = vsel %vm705, %v850, 0.0
  %v925 = vadd.f32 %v923, %v924
  %v926 = vsel %vm705, %v851, 0.0
  %v927 = vadd.f32 %v925, %v926
  %v928 = vsel %vm705, %v852, 0.0
  %v929 = vadd.f32 %v927, %v928
  %v930 = vsel %vm705, %v853, 0.0
  %v931 = vadd.f32 %v929, %v930
  %v932 = vsel %vm705, %v854, 0.0
  %v933 = vadd.f32 %v931, %v932
  %v934 = vsel %vm705, %v855, 0.0
  %v935 = vadd.f32 %v933, %v934
  %v936 = vsel %vm705, %v856, 0.0
  %v937 = vadd.f32 %v935, %v936
  %v938 = vsel %vm705, %v857, 0.0
  %v939 = vadd.f32 %v937, %v938
  %v940 = vsel %vm705, %v858, 0.0
  %v941 = vadd.f32 %v939, %v940
  %v942 = vsel %vm705, %v859, 0.0
  %v943 = vadd.f32 %v941, %v942
  %v944 = vsel %vm705, %v860, 0.0
  %v945 = vadd.f32 %v943, %v944
  %v946 = vsel %vm705, %v861, 0.0
  %v947 = vadd.f32 %v945, %v946
  %v948 = vsel %vm705, %v862, 0.0
  %v949 = vadd.f32 %v947, %v948
  %v950 = vsel %vm705, %v863, 0.0
  %v951 = vadd.f32 %v949, %v950
  %v952 = vsel %vm705, %v864, 0.0
  %v953 = vadd.f32 %v951, %v952
  %v954 = vsel %vm705, %v865, 0.0
  %v955 = vadd.f32 %v953, %v954
  %v956 = vsel %vm705, %v866, 0.0
  %v957 = vadd.f32 %v955, %v956
  %v958 = vsel %vm705, %v867, 0.0
  %v959 = vadd.f32 %v957, %v958
  %v960 = vsel %vm705, %v868, 0.0
  %v961 = vadd.f32 %v959, %v960
  %v962 = vsel %vm705, %v869, 0.0
  %v963 = vadd.f32 %v961, %v962
  %v964 = vsel %vm705, %v870, 0.0
  %v965 = vadd.f32 %v963, %v964
  %v966 = vsel %vm705, %v871, 0.0
  %v967 = vadd.f32 %v965, %v966
  %v968 = vsel %vm705, %v872, 0.0
  %v969 = vadd.f32 %v967, %v968
  %v970 = vsel %vm705, %v873, 0.0
  %v971 = vadd.f32 %v969, %v970
  %v972 = vsel %vm705, %v874, 0.0
  %v973 = vadd.f32 %v971, %v972
  %v974 = vsel %vm705, %v875, 0.0
  %v975 = vadd.f32 %v973, %v974
  %v976 = vsel %vm705, %v876, 0.0
  %v977 = vadd.f32 %v975, %v976
  %v978 = vsel %vm705, %v877, 0.0
  %v979 = vadd.f32 %v977, %v978
  %v980 = vsel %vm705, %v878, 0.0
  %v981 = vadd.f32 %v979, %v980
  %v982 = vsel %vm705, %v879, 0.0
  %v983 = vadd.f32 %v981, %v982
  %v984 = vsel %vm705, %v880, 0.0
  %v985 = vadd.f32 %v983, %v984
  %v986 = vsel %vm705, %v881, 0.0
  %v987 = vadd.f32 %v985, %v986
  %v988 = vsel %vm705, %v882, 0.0
  %v989 = vadd.f32 %v987, %v988
  %v990 = vsel %vm705, %v883, 0.0
  %v991 = vadd.f32 %v989, %v990
  %v992 = vsel %vm705, %v884, 0.0
  %v993 = vadd.f32 %v991, %v992
  %v994 = vsel %vm705, %v885, 0.0
  %v995 = vadd.f32 %v993, %v994
  %v996 = vsel %vm705, %v886, 0.0
  %v997 = vadd.f32 %v995, %v996
  %v998 = vsel %vm705, %v887, 0.0
  %v999 = vadd.f32 %v997, %v998
  %v1000 = vsel %vm705, %v888, 0.0
  %v1001 = vadd.f32 %v999, %v1000
  %v1002 = vsel %vm705, %v889, 0.0
  %v1003 = vadd.f32 %v1001, %v1002
  %v1004 = vsel %vm705, %v890, 0.0
  %v1005 = vadd.f32 %v1003, %v1004
  %v1006 = vsel %vm705, %v891, 0.0
  %v1007 = vadd.f32 %v1005, %v1006
  %v1008 = vsel %vm705, %v892, 0.0
  %v1009 = vadd.f32 %v1007, %v1008
  %v1010 = vsel %vm705, %v893, 0.0
  %v1011 = vadd.f32 %v1009, %v1010
  %v1012 = vsel %vm705, %v894, 0.0
  %v1013 = vadd.f32 %v1011, %v1012
  %v1014 = vsel %vm705, %v895, 0.0
  %v1015 = vadd.f32 %v1013, %v1014
  %v1016 = vsel %vm705, %v896, 0.0
  %v1017 = vadd.f32 %v1015, %v1016
  %v1018 = vsel %vm705, %v897, 0.0
  %v1019 = vadd.f32 %v1017, %v1018
  %v1020 = vsel %vm705, %v898, 0.0
  %v1021 = vadd.f32 %v1019, %v1020
  %v1022 = vsel %vm705, %v899, 0.0
  %v1023 = vadd.f32 %v1021, %v1022
  %v1024 = vsel %vm705, %v900, 0.0
  %v1025 = vadd.f32 %v1023, %v1024
  %v1026 = vsel %vm705, %v901, 0.0
  %v1027 = vadd.f32 %v1025, %v1026
  %v1028 = vsel %vm705, %v902, 0.0
  %v1029 = vadd.f32 %v1027, %v1028
  %v1030 = vrot.slane %v1029, 4
  %v1031 = vadd.f32 %v1029, %v1030
  %v1032 = vrot.slane %v1031, 2
  %v1033 = vadd.f32 %v1031, %v1032
  %v1034 = vrot.slane %v1033, 1
  %v1035 = vadd.f32 %v1033, %v1034
  %v1036 = vmul.f32 %v838, 0.001953125
  %v1037 = vmul.f32 %v1035, 0.001953125
  %v1038 = vmul.f32 %v1036, %v1036
  %v1039 = vsub.f32 %v1037, %v1038
  %v1040 = vadd.f32 %v1039, 1e-05
  %v1041 = vrsqrt.pop %v1040
  %v1042 = vmul.f32 %v1041, %v1040
  %v1043 = vmul.f32 %v1042, %v1041
  %v1044 = vmul.f32 0.5, %v1043
  %v1045 = vsub.f32 1.5, %v1044
  %v1046 = vmul.f32 %v1041, %v1045
  %vm1047 = vweird.f32 %v1040
  %vm1048 = vweird.f32 %v1041
  %vm1049 = vmor %vm1047, %vm1048
  %v1050 = vsel %vm1049, %v1041, %v1046
  %v1051 = vld [vmem:[%s3] sm:$0x1]
  %v1052 = vmul.f32 %v1050, %v1051
  %v1053 = vsub.f32 %v641, %v1036
  %v1054 = vsub.f32 %v642, %v1036
  %v1055 = vsub.f32 %v643, %v1036
  %v1056 = vsub.f32 %v644, %v1036
  %v1057 = vsub.f32 %v645, %v1036
  %v1058 = vsub.f32 %v646, %v1036
  %v1059 = vsub.f32 %v647, %v1036
  %v1060 = vsub.f32 %v648, %v1036
  %v1061 = vsub.f32 %v649, %v1036
  %v1062 = vsub.f32 %v650, %v1036
  %v1063 = vsub.f32 %v651, %v1036
  %v1064 = vsub.f32 %v652, %v1036
  %v1065 = vsub.f32 %v653, %v1036
  %v1066 = vsub.f32 %v654, %v1036
  %v1067 = vsub.f32 %v655, %v1036
  %v1068 = vsub.f32 %v656, %v1036
  %v1069 = vsub.f32 %v657, %v1036
  %v1070 = vsub.f32 %v658, %v1036
  %v1071 = vsub.f32 %v659, %v1036
  %v1072 = vsub.f32 %v660, %v1036
  %v1073 = vsub.f32 %v661, %v1036
  %v1074 = vsub.f32 %v662, %v1036
  %v1075 = vsub.f32 %v663, %v1036
  %v1076 = vsub.f32 %v664, %v1036
  %v1077 = vsub.f32 %v665, %v1036
  %v1078 = vsub.f32 %v666, %v1036
  %v1079 = vsub.f32 %v667, %v1036
  %v1080 = vsub.f32 %v668, %v1036
  %v1081 = vsub.f32 %v669, %v1036
  %v1082 = vsub.f32 %v670, %v1036
  %v1083 = vsub.f32 %v671, %v1036
  %v1084 = vsub.f32 %v672, %v1036
  %v1085 = vsub.f32 %v673, %v1036
  %v1086 = vsub.f32 %v674, %v1036
  %v1087 = vsub.f32 %v675, %v1036
  %v1088 = vsub.f32 %v676, %v1036
  %v1089 = vsub.f32 %v677, %v1036
  %v1090 = vsub.f32 %v678, %v1036
  %v1091 = vsub.f32 %v679, %v1036
  %v1092 = vsub.f32 %v680, %v1036
  %v1093 = vsub.f32 %v681, %v1036
  %v1094 = vsub.f32 %v682, %v1036
  %v1095 = vsub.f32 %v683, %v1036
  %v1096 = vsub.f32 %v684, %v1036
  %v1097 = vsub.f32 %v685, %v1036
  %v1098 = vsub.f32 %v686, %v1036
  %v1099 = vsub.f32 %v687, %v1036
  %v1100 = vsub.f32 %v688, %v1036
  %v1101 = vsub.f32 %v689, %v1036
  %v1102 = vsub.f32 %v690, %v1036
  %v1103 = vsub.f32 %v691, %v1036
  %v1104 = vsub.f32 %v692, %v1036
  %v1105 = vsub.f32 %v693, %v1036
  %v1106 = vsub.f32 %v694, %v1036
  %v1107 = vsub.f32 %v695, %v1036
  %v1108 = vsub.f32 %v696, %v1036
  %v1109 = vsub.f32 %v697, %v1036
  %v1110 = vsub.f32 %v698, %v1036
  %v1111 = vsub.f32 %v699, %v1036
  %v1112 = vsub.f32 %v700, %v1036
  %v1113 = vsub.f32 %v701, %v1036
  %v1114 = vsub.f32 %v702, %v1036
  %v1115 = vsub.f32 %v703, %v1036
  %v1116 = vsub.f32 %v704, %v1036
  %v1117 = vperm.slane %v1052, 0
  %v1118 = vmul.f32 %v1053, %v1117
  %v1119 = vmul.f32 %v1054, %v1117
  %v1120 = vmul.f32 %v1055, %v1117
  %v1121 = vmul.f32 %v1056, %v1117
  %v1122 = vmul.f32 %v1057, %v1117
  %v1123 = vmul.f32 %v1058, %v1117
  %v1124 = vmul.f32 %v1059, %v1117
  %v1125 = vmul.f32 %v1060, %v1117
  %v1126 = vmul.f32 %v1061, %v1117
  %v1127 = vmul.f32 %v1062, %v1117
  %v1128 = vmul.f32 %v1063, %v1117
  %v1129 = vmul.f32 %v1064, %v1117
  %v1130 = vmul.f32 %v1065, %v1117
  %v1131 = vmul.f32 %v1066, %v1117
  %v1132 = vmul.f32 %v1067, %v1117
  %v1133 = vmul.f32 %v1068, %v1117
  %v1134 = vmul.f32 %v1069, %v1117
  %v1135 = vmul.f32 %v1070, %v1117
  %v1136 = vmul.f32 %v1071, %v1117
  %v1137 = vmul.f32 %v1072, %v1117
  %v1138 = vmul.f32 %v1073, %v1117
  %v1139 = vmul.f32 %v1074, %v1117
  %v1140 = vmul.f32 %v1075, %v1117
  %v1141 = vmul.f32 %v1076, %v1117
  %v1142 = vmul.f32 %v1077, %v1117
  %v1143 = vmul.f32 %v1078, %v1117
  %v1144 = vmul.f32 %v1079, %v1117
  %v1145 = vmul.f32 %v1080, %v1117
  %v1146 = vmul.f32 %v1081, %v1117
  %v1147 = vmul.f32 %v1082, %v1117
  %v1148 = vmul.f32 %v1083, %v1117
  %v1149 = vmul.f32 %v1084, %v1117
  %v1150 = vmul.f32 %v1085, %v1117
  %v1151 = vmul.f32 %v1086, %v1117
  %v1152 = vmul.f32 %v1087, %v1117
  %v1153 = vmul.f32 %v1088, %v1117
  %v1154 = vmul.f32 %v1089, %v1117
  %v1155 = vmul.f32 %v1090, %v1117
  %v1156 = vmul.f32 %v1091, %v1117
  %v1157 = vmul.f32 %v1092, %v1117
  %v1158 = vmul.f32 %v1093, %v1117
  %v1159 = vmul.f32 %v1094, %v1117
  %v1160 = vmul.f32 %v1095, %v1117
  %v1161 = vmul.f32 %v1096, %v1117
  %v1162 = vmul.f32 %v1097, %v1117
  %v1163 = vmul.f32 %v1098, %v1117
  %v1164 = vmul.f32 %v1099, %v1117
  %v1165 = vmul.f32 %v1100, %v1117
  %v1166 = vmul.f32 %v1101, %v1117
  %v1167 = vmul.f32 %v1102, %v1117
  %v1168 = vmul.f32 %v1103, %v1117
  %v1169 = vmul.f32 %v1104, %v1117
  %v1170 = vmul.f32 %v1105, %v1117
  %v1171 = vmul.f32 %v1106, %v1117
  %v1172 = vmul.f32 %v1107, %v1117
  %v1173 = vmul.f32 %v1108, %v1117
  %v1174 = vmul.f32 %v1109, %v1117
  %v1175 = vmul.f32 %v1110, %v1117
  %v1176 = vmul.f32 %v1111, %v1117
  %v1177 = vmul.f32 %v1112, %v1117
  %v1178 = vmul.f32 %v1113, %v1117
  %v1179 = vmul.f32 %v1114, %v1117
  %v1180 = vmul.f32 %v1115, %v1117
  %v1181 = vmul.f32 %v1116, %v1117
  %v1182 = vld [vmem:[%s4] sm:$0x1]
  %v1184 = vperm.slane %v1182, 0
  %v1186 = vadd.f32 %v1118, %v1184
  %v1187 = vadd.f32 %v1119, %v1184
  %v1188 = vadd.f32 %v1120, %v1184
  %v1189 = vadd.f32 %v1121, %v1184
  %v1190 = vadd.f32 %v1122, %v1184
  %v1191 = vadd.f32 %v1123, %v1184
  %v1192 = vadd.f32 %v1124, %v1184
  %v1193 = vadd.f32 %v1125, %v1184
  %v1194 = vadd.f32 %v1126, %v1184
  %v1195 = vadd.f32 %v1127, %v1184
  %v1196 = vadd.f32 %v1128, %v1184
  %v1197 = vadd.f32 %v1129, %v1184
  %v1198 = vadd.f32 %v1130, %v1184
  %v1199 = vadd.f32 %v1131, %v1184
  %v1200 = vadd.f32 %v1132, %v1184
  %v1201 = vadd.f32 %v1133, %v1184
  %v1202 = vadd.f32 %v1134, %v1184
  %v1203 = vadd.f32 %v1135, %v1184
  %v1204 = vadd.f32 %v1136, %v1184
  %v1205 = vadd.f32 %v1137, %v1184
  %v1206 = vadd.f32 %v1138, %v1184
  %v1207 = vadd.f32 %v1139, %v1184
  %v1208 = vadd.f32 %v1140, %v1184
  %v1209 = vadd.f32 %v1141, %v1184
  %v1210 = vadd.f32 %v1142, %v1184
  %v1211 = vadd.f32 %v1143, %v1184
  %v1212 = vadd.f32 %v1144, %v1184
  %v1213 = vadd.f32 %v1145, %v1184
  %v1214 = vadd.f32 %v1146, %v1184
  %v1215 = vadd.f32 %v1147, %v1184
  %v1216 = vadd.f32 %v1148, %v1184
  %v1217 = vadd.f32 %v1149, %v1184
  %v1218 = vadd.f32 %v1150, %v1184
  %v1219 = vadd.f32 %v1151, %v1184
  %v1220 = vadd.f32 %v1152, %v1184
  %v1221 = vadd.f32 %v1153, %v1184
  %v1222 = vadd.f32 %v1154, %v1184
  %v1223 = vadd.f32 %v1155, %v1184
  %v1224 = vadd.f32 %v1156, %v1184
  %v1225 = vadd.f32 %v1157, %v1184
  %v1226 = vadd.f32 %v1158, %v1184
  %v1227 = vadd.f32 %v1159, %v1184
  %v1228 = vadd.f32 %v1160, %v1184
  %v1229 = vadd.f32 %v1161, %v1184
  %v1230 = vadd.f32 %v1162, %v1184
  %v1231 = vadd.f32 %v1163, %v1184
  %v1232 = vadd.f32 %v1164, %v1184
  %v1233 = vadd.f32 %v1165, %v1184
  %v1234 = vadd.f32 %v1166, %v1184
  %v1235 = vadd.f32 %v1167, %v1184
  %v1236 = vadd.f32 %v1168, %v1184
  %v1237 = vadd.f32 %v1169, %v1184
  %v1238 = vadd.f32 %v1170, %v1184
  %v1239 = vadd.f32 %v1171, %v1184
  %v1240 = vadd.f32 %v1172, %v1184
  %v1241 = vadd.f32 %v1173, %v1184
  %v1242 = vadd.f32 %v1174, %v1184
  %v1243 = vadd.f32 %v1175, %v1184
  %v1244 = vadd.f32 %v1176, %v1184
  %v1245 = vadd.f32 %v1177, %v1184
  %v1246 = vadd.f32 %v1178, %v1184
  %v1247 = vadd.f32 %v1179, %v1184
  %v1248 = vadd.f32 %v1180, %v1184
  %v1249 = vadd.f32 %v1181, %v1184
  %1250 = vst.msk [vmem:[%s5] sm:$0xff] %vm705, %v1186
  %1251 = vst.msk [vmem:[%s5 + $0x8] sm:$0xff] %vm705, %v1187
  %1252 = vst.msk [vmem:[%s5 + $0x10] sm:$0xff] %vm705, %v1188
  %1253 = vst.msk [vmem:[%s5 + $0x18] sm:$0xff] %vm705, %v1189
  %1254 = vst.msk [vmem:[%s5 + $0x20] sm:$0xff] %vm705, %v1190
  %1255 = vst.msk [vmem:[%s5 + $0x28] sm:$0xff] %vm705, %v1191
  %1256 = vst.msk [vmem:[%s5 + $0x30] sm:$0xff] %vm705, %v1192
  %1257 = vst.msk [vmem:[%s5 + $0x38] sm:$0xff] %vm705, %v1193
  %1258 = vst.msk [vmem:[%s5 + $0x40] sm:$0xff] %vm705, %v1194
  %1259 = vst.msk [vmem:[%s5 + $0x48] sm:$0xff] %vm705, %v1195
  %1260 = vst.msk [vmem:[%s5 + $0x50] sm:$0xff] %vm705, %v1196
  %1261 = vst.msk [vmem:[%s5 + $0x58] sm:$0xff] %vm705, %v1197
  %1262 = vst.msk [vmem:[%s5 + $0x60] sm:$0xff] %vm705, %v1198
  %1263 = vst.msk [vmem:[%s5 + $0x68] sm:$0xff] %vm705, %v1199
  %1264 = vst.msk [vmem:[%s5 + $0x70] sm:$0xff] %vm705, %v1200
  %1265 = vst.msk [vmem:[%s5 + $0x78] sm:$0xff] %vm705, %v1201
  %1266 = vst.msk [vmem:[%s5 + $0x80] sm:$0xff] %vm705, %v1202
  %1267 = vst.msk [vmem:[%s5 + $0x88] sm:$0xff] %vm705, %v1203
  %1268 = vst.msk [vmem:[%s5 + $0x90] sm:$0xff] %vm705, %v1204
  %1269 = vst.msk [vmem:[%s5 + $0x98] sm:$0xff] %vm705, %v1205
  %1270 = vst.msk [vmem:[%s5 + $0xa0] sm:$0xff] %vm705, %v1206
  %1271 = vst.msk [vmem:[%s5 + $0xa8] sm:$0xff] %vm705, %v1207
  %1272 = vst.msk [vmem:[%s5 + $0xb0] sm:$0xff] %vm705, %v1208
  %1273 = vst.msk [vmem:[%s5 + $0xb8] sm:$0xff] %vm705, %v1209
  %1274 = vst.msk [vmem:[%s5 + $0xc0] sm:$0xff] %vm705, %v1210
  %1275 = vst.msk [vmem:[%s5 + $0xc8] sm:$0xff] %vm705, %v1211
  %1276 = vst.msk [vmem:[%s5 + $0xd0] sm:$0xff] %vm705, %v1212
  %1277 = vst.msk [vmem:[%s5 + $0xd8] sm:$0xff] %vm705, %v1213
  %1278 = vst.msk [vmem:[%s5 + $0xe0] sm:$0xff] %vm705, %v1214
  %1279 = vst.msk [vmem:[%s5 + $0xe8] sm:$0xff] %vm705, %v1215
  %1280 = vst.msk [vmem:[%s5 + $0xf0] sm:$0xff] %vm705, %v1216
  %1281 = vst.msk [vmem:[%s5 + $0xf8] sm:$0xff] %vm705, %v1217
  %1282 = vst.msk [vmem:[%s5 + $0x100] sm:$0xff] %vm705, %v1218
  %1283 = vst.msk [vmem:[%s5 + $0x108] sm:$0xff] %vm705, %v1219
  %1284 = vst.msk [vmem:[%s5 + $0x110] sm:$0xff] %vm705, %v1220
  %1285 = vst.msk [vmem:[%s5 + $0x118] sm:$0xff] %vm705, %v1221
  %1286 = vst.msk [vmem:[%s5 + $0x120] sm:$0xff] %vm705, %v1222
  %1287 = vst.msk [vmem:[%s5 + $0x128] sm:$0xff] %vm705, %v1223
  %1288 = vst.msk [vmem:[%s5 + $0x130] sm:$0xff] %vm705, %v1224
  %1289 = vst.msk [vmem:[%s5 + $0x138] sm:$0xff] %vm705, %v1225
  %1290 = vst.msk [vmem:[%s5 + $0x140] sm:$0xff] %vm705, %v1226
  %1291 = vst.msk [vmem:[%s5 + $0x148] sm:$0xff] %vm705, %v1227
  %1292 = vst.msk [vmem:[%s5 + $0x150] sm:$0xff] %vm705, %v1228
  %1293 = vst.msk [vmem:[%s5 + $0x158] sm:$0xff] %vm705, %v1229
  %1294 = vst.msk [vmem:[%s5 + $0x160] sm:$0xff] %vm705, %v1230
  %1295 = vst.msk [vmem:[%s5 + $0x168] sm:$0xff] %vm705, %v1231
  %1296 = vst.msk [vmem:[%s5 + $0x170] sm:$0xff] %vm705, %v1232
  %1297 = vst.msk [vmem:[%s5 + $0x178] sm:$0xff] %vm705, %v1233
  %1298 = vst.msk [vmem:[%s5 + $0x180] sm:$0xff] %vm705, %v1234
  %1299 = vst.msk [vmem:[%s5 + $0x188] sm:$0xff] %vm705, %v1235
  %1300 = vst.msk [vmem:[%s5 + $0x190] sm:$0xff] %vm705, %v1236
  %1301 = vst.msk [vmem:[%s5 + $0x198] sm:$0xff] %vm705, %v1237
  %1302 = vst.msk [vmem:[%s5 + $0x1a0] sm:$0xff] %vm705, %v1238
  %1303 = vst.msk [vmem:[%s5 + $0x1a8] sm:$0xff] %vm705, %v1239
  %1304 = vst.msk [vmem:[%s5 + $0x1b0] sm:$0xff] %vm705, %v1240
  %1305 = vst.msk [vmem:[%s5 + $0x1b8] sm:$0xff] %vm705, %v1241
  %1306 = vst.msk [vmem:[%s5 + $0x1c0] sm:$0xff] %vm705, %v1242
  %1307 = vst.msk [vmem:[%s5 + $0x1c8] sm:$0xff] %vm705, %v1243
  %1308 = vst.msk [vmem:[%s5 + $0x1d0] sm:$0xff] %vm705, %v1244
  %1309 = vst.msk [vmem:[%s5 + $0x1d8] sm:$0xff] %vm705, %v1245
  %1310 = vst.msk [vmem:[%s5 + $0x1e0] sm:$0xff] %vm705, %v1246
  %1311 = vst.msk [vmem:[%s5 + $0x1e8] sm:$0xff] %vm705, %v1247
  %1312 = vst.msk [vmem:[%s5 + $0x1f0] sm:$0xff] %vm705, %v1248
  %1313 = vst.msk [vmem:[%s5 + $0x1f8] sm:$0xff] %vm705, %v1249
  // Predicated region
  $region22: #{discriminator_forward.3} parent=0 // pred_check
    _
  $region23: #{discriminator_forward.3} parent=0 // pred_check_branch
    %1315 = sbr.rel (0) target = $region25
  $region24: #{discriminator_forward.3} parent=0 // pred_region
    _
  $region25: #{discriminator_forward.3} parent=0 // pred_fallthru
    _
  // Predicated region
  $region26: #{discriminator_forward.3} parent=0 // pred_check
    _
  $region27: #{discriminator_forward.3} parent=0 // pred_check_branch
    %1317 = sbr.rel (0) target = $region29
  $region28: #{discriminator_forward.3} parent=0 // pred_region
    _
  $region29: #{discriminator_forward.3} parent=0 // pred_fallthru
    _

// kernel: discriminator_forward.4
$region0: #{discriminator_forward.4}
  #allocation0 [shape = 'u32[]', space=smem, size = 0x4, offset = 0x4, fixed_abs, tag = 'smem constant byte address 0x4 - core index']
  #allocation1 [shape = 'u32[72,128]{1,0:T(1,128)}', space=vmem, size = 0x9000, scoped, tag = 'internal scratch']
  %s0 = inlined_call_operand.vmem [shape: bf16[128,640], index: 0, kind: input, shape index: {}]
  %s1 = inlined_call_operand.vmem [shape: bf16[640,128], index: 1, kind: input, shape index: {}]
  %s2 = inlined_call_operand.vmem [shape: f32[1,128], index: 2, kind: input, shape index: {}]
  %s3 = inlined_call_operand.vmem [shape: f32[1,128], index: 3, kind: input, shape index: {}]
  %s4 = inlined_call_operand.vmem [shape: f32[1,128], index: 4, kind: input, shape index: {}]
  %s5 = inlined_call_operand.vmem [shape: f32[128,128], index: 5, kind: output, shape index: {}]
  %s6 = sld [smem:[#allocation0]]
  $region30: #{discriminator_forward.4} parent=0
    _
  %s8 = ssub.s32 1, %s6
  %s9 = scalar_select 0, %s8, %s6
  // Predicated region
  $region2: #{discriminator_forward.4} parent=0 // pred_check
    _
  $region3: #{discriminator_forward.4} parent=0 // pred_check_branch
    %11 = sbr.rel (0) target = $region5
  $region4: #{discriminator_forward.4} parent=0 // pred_region
    _
  $region5: #{discriminator_forward.4} parent=0 // pred_fallthru
    _
  // Predicated region
  $region6: #{discriminator_forward.4} parent=0 // pred_check
    _
  $region7: #{discriminator_forward.4} parent=0 // pred_check_branch
    %13 = sbr.rel (0) target = $region9
  $region8: #{discriminator_forward.4} parent=0 // pred_region
    _
  $region9: #{discriminator_forward.4} parent=0 // pred_fallthru
    _
  // Predicated region
  $region10: #{discriminator_forward.4} parent=0 // pred_check
    _
  $region11: #{discriminator_forward.4} parent=0 // pred_check_branch
    %15 = sbr.rel (0) target = $region13
  $region12: #{discriminator_forward.4} parent=0 // pred_region
    _
  $region13: #{discriminator_forward.4} parent=0 // pred_fallthru
    _
  // Predicated region
  $region14: #{discriminator_forward.4} parent=0 // pred_check
    _
  $region15: #{discriminator_forward.4} parent=0 // pred_check_branch
    %17 = sbr.rel (0) target = $region17
  $region16: #{discriminator_forward.4} parent=0 // pred_region
    _
  $region17: #{discriminator_forward.4} parent=0 // pred_fallthru
    _
  // Predicated region
  $region18: #{discriminator_forward.4} parent=0 // pred_check
    _
  $region19: #{discriminator_forward.4} parent=0 // pred_check_branch
    %19 = sbr.rel (0) target = $region21
  $region20: #{discriminator_forward.4} parent=0 // pred_region
    _
  $region21: #{discriminator_forward.4} parent=0 // pred_fallthru
    _
  %v20 = vld [vmem:[%s0] sm:$0xff]
  %v21 = vld [vmem:[%s0 + $0x8] sm:$0xff]
  %v22 = vld [vmem:[%s0 + $0x10] sm:$0xf]
  %v23 = vld [vmem:[%s0 + $0x14] sm:$0xff]
  %v24 = vld [vmem:[%s0 + $0x1c] sm:$0xff]
  %v25 = vld [vmem:[%s0 + $0x24] sm:$0xf]
  %v26 = vld [vmem:[%s0 + $0x28] sm:$0xff]
  %v27 = vld [vmem:[%s0 + $0x30] sm:$0xff]
  %v28 = vld [vmem:[%s0 + $0x38] sm:$0xf]
  %v29 = vld [vmem:[%s0 + $0x3c] sm:$0xff]
  %v30 = vld [vmem:[%s0 + $0x44] sm:$0xff]
  %v31 = vld [vmem:[%s0 + $0x4c] sm:$0xf]
  %v32 = vld [vmem:[%s0 + $0x50] sm:$0xff]
  %v33 = vld [vmem:[%s0 + $0x58] sm:$0xff]
  %v34 = vld [vmem:[%s0 + $0x60] sm:$0xf]
  %v35 = vld [vmem:[%s0 + $0x64] sm:$0xff]
  %v36 = vld [vmem:[%s0 + $0x6c] sm:$0xff]
  %v37 = vld [vmem:[%s0 + $0x74] sm:$0xf]
  %v38 = vld [vmem:[%s0 + $0x78] sm:$0xff]
  %v39 = vld [vmem:[%s0 + $0x80] sm:$0xff]
  %v40 = vld [vmem:[%s0 + $0x88] sm:$0xf]
  %v41 = vld [vmem:[%s0 + $0x8c] sm:$0xff]
  %v42 = vld [vmem:[%s0 + $0x94] sm:$0xff]
  %v43 = vld [vmem:[%s0 + $0x9c] sm:$0xf]
  %v44 = vld [vmem:[%s0 + $0xa0] sm:$0xff]
  %v45 = vld [vmem:[%s0 + $0xa8] sm:$0xff]
  %v46 = vld [vmem:[%s0 + $0xb0] sm:$0xf]
  %v47 = vld [vmem:[%s0 + $0xb4] sm:$0xff]
  %v48 = vld [vmem:[%s0 + $0xbc] sm:$0xff]
  %v49 = vld [vmem:[%s0 + $0xc4] sm:$0xf]
  %v50 = vld [vmem:[%s0 + $0xc8] sm:$0xff]
  %v51 = vld [vmem:[%s0 + $0xd0] sm:$0xff]
  %v52 = vld [vmem:[%s0 + $0xd8] sm:$0xf]
  %v53 = vld [vmem:[%s0 + $0xdc] sm:$0xff]
  %v54 = vld [vmem:[%s0 + $0xe4] sm:$0xff]
  %v55 = vld [vmem:[%s0 + $0xec] sm:$0xf]
  %v56 = vld [vmem:[%s0 + $0xf0] sm:$0xff]
  %v57 = vld [vmem:[%s0 + $0xf8] sm:$0xff]
  %v58 = vld [vmem:[%s0 + $0x100] sm:$0xf]
  %v59 = vld [vmem:[%s0 + $0x104] sm:$0xff]
  %v60 = vld [vmem:[%s0 + $0x10c] sm:$0xff]
  %v61 = vld [vmem:[%s0 + $0x114] sm:$0xf]
  %v62 = vld [vmem:[%s0 + $0x118] sm:$0xff]
  %v63 = vld [vmem:[%s0 + $0x120] sm:$0xff]
  %v64 = vld [vmem:[%s0 + $0x128] sm:$0xf]
  %v65 = vld [vmem:[%s0 + $0x12c] sm:$0xff]
  %v66 = vld [vmem:[%s0 + $0x134] sm:$0xff]
  %v67 = vld [vmem:[%s0 + $0x13c] sm:$0xf]
  %v68 = vld [vmem:[%s1] sm:$0xf]
  %v69 = vld [vmem:[%s1 + $0x4] sm:$0xf]
  %v70 = vld [vmem:[%s1 + $0x8] sm:$0xf]
  %v71 = vld [vmem:[%s1 + $0xc] sm:$0xf]
  %v72 = vld [vmem:[%s1 + $0x10] sm:$0xf]
  %v73 = vld [vmem:[%s1 + $0x14] sm:$0xf]
  %v74 = vld [vmem:[%s1 + $0x18] sm:$0xf]
  %v75 = vld [vmem:[%s1 + $0x1c] sm:$0xf]
  %v76 = vld [vmem:[%s1 + $0x20] sm:$0xf]
  %v77 = vld [vmem:[%s1 + $0x24] sm:$0xf]
  %v78 = vld [vmem:[%s1 + $0x28] sm:$0xf]
  %v79 = vld [vmem:[%s1 + $0x2c] sm:$0xf]
  %v80 = vld [vmem:[%s1 + $0x30] sm:$0xf]
  %v81 = vld [vmem:[%s1 + $0x34] sm:$0xf]
  %v82 = vld [vmem:[%s1 + $0x38] sm:$0xf]
  %v83 = vld [vmem:[%s1 + $0x3c] sm:$0xf]
  %v84 = vld [vmem:[%s1 + $0x40] sm:$0xf]
  %v85 = vld [vmem:[%s1 + $0x44] sm:$0xf]
  %v86 = vld [vmem:[%s1 + $0x48] sm:$0xf]
  %v87 = vld [vmem:[%s1 + $0x4c] sm:$0xf]
  %v88 = vld [vmem:[%s1 + $0x50] sm:$0xf]
  %v89 = vld [vmem:[%s1 + $0x54] sm:$0xf]
  %v90 = vld [vmem:[%s1 + $0x58] sm:$0xf]
  %v91 = vld [vmem:[%s1 + $0x5c] sm:$0xf]
  %v92 = vld [vmem:[%s1 + $0x60] sm:$0xf]
  %v93 = vld [vmem:[%s1 + $0x64] sm:$0xf]
  %v94 = vld [vmem:[%s1 + $0x68] sm:$0xf]
  %v95 = vld [vmem:[%s1 + $0x6c] sm:$0xf]
  %v96 = vld [vmem:[%s1 + $0x70] sm:$0xf]
  %v97 = vld [vmem:[%s1 + $0x74] sm:$0xf]
  %v98 = vld [vmem:[%s1 + $0x78] sm:$0xf]
  %v99 = vld [vmem:[%s1 + $0x7c] sm:$0xf]
  %v100 = vld [vmem:[%s1 + $0x80] sm:$0xf]
  %v101 = vld [vmem:[%s1 + $0x84] sm:$0xf]
  %v102 = vld [vmem:[%s1 + $0x88] sm:$0xf]
  %v103 = vld [vmem:[%s1 + $0x8c] sm:$0xf]
  %v104 = vld [vmem:[%s1 + $0x90] sm:$0xf]
  %v105 = vld [vmem:[%s1 + $0x94] sm:$0xf]
  %v106 = vld [vmem:[%s1 + $0x98] sm:$0xf]
  %v107 = vld [vmem:[%s1 + $0x9c] sm:$0xf]
  %v108 = vld [vmem:[%s1 + $0xa0] sm:$0xf]
  %v109 = vld [vmem:[%s1 + $0xa4] sm:$0xf]
  %v110 = vld [vmem:[%s1 + $0xa8] sm:$0xf]
  %v111 = vld [vmem:[%s1 + $0xac] sm:$0xf]
  %v112 = vld [vmem:[%s1 + $0xb0] sm:$0xf]
  %v113 = vld [vmem:[%s1 + $0xb4] sm:$0xf]
  %v114 = vld [vmem:[%s1 + $0xb8] sm:$0xf]
  %v115 = vld [vmem:[%s1 + $0xbc] sm:$0xf]
  %v116 = vld [vmem:[%s1 + $0xc0] sm:$0xf]
  %v117 = vld [vmem:[%s1 + $0xc4] sm:$0xf]
  %v118 = vld [vmem:[%s1 + $0xc8] sm:$0xf]
  %v119 = vld [vmem:[%s1 + $0xcc] sm:$0xf]
  %v120 = vld [vmem:[%s1 + $0xd0] sm:$0xf]
  %v121 = vld [vmem:[%s1 + $0xd4] sm:$0xf]
  %v122 = vld [vmem:[%s1 + $0xd8] sm:$0xf]
  %v123 = vld [vmem:[%s1 + $0xdc] sm:$0xf]
  %v124 = vld [vmem:[%s1 + $0xe0] sm:$0xf]
  %v125 = vld [vmem:[%s1 + $0xe4] sm:$0xf]
  %v126 = vld [vmem:[%s1 + $0xe8] sm:$0xf]
  %v127 = vld [vmem:[%s1 + $0xec] sm:$0xf]
  %v128 = vld [vmem:[%s1 + $0xf0] sm:$0xf]
  %v129 = vld [vmem:[%s1 + $0xf4] sm:$0xf]
  %v130 = vld [vmem:[%s1 + $0xf8] sm:$0xf]
  %v131 = vld [vmem:[%s1 + $0xfc] sm:$0xf]
  %v132 = vld [vmem:[%s1 + $0x100] sm:$0xf]
  %v133 = vld [vmem:[%s1 + $0x104] sm:$0xf]
  %v134 = vld [vmem:[%s1 + $0x108] sm:$0xf]
  %v135 = vld [vmem:[%s1 + $0x10c] sm:$0xf]
  %v136 = vld [vmem:[%s1 + $0x110] sm:$0xf]
  %v137 = vld [vmem:[%s1 + $0x114] sm:$0xf]
  %v138 = vld [vmem:[%s1 + $0x118] sm:$0xf]
  %v139 = vld [vmem:[%s1 + $0x11c] sm:$0xf]
  %v140 = vld [vmem:[%s1 + $0x120] sm:$0xf]
  %v141 = vld [vmem:[%s1 + $0x124] sm:$0xf]
  %v142 = vld [vmem:[%s1 + $0x128] sm:$0xf]
  %v143 = vld [vmem:[%s1 + $0x12c] sm:$0xf]
  %v144 = vld [vmem:[%s1 + $0x130] sm:$0xf]
  %v145 = vld [vmem:[%s1 + $0x134] sm:$0xf]
  %v146 = vld [vmem:[%s1 + $0x138] sm:$0xf]
  %v147 = vld [vmem:[%s1 + $0x13c] sm:$0xf]
  %v148 = vld [vmem:[%s2] sm:$0x1]
  %v150 = vperm.slane %v148, 0
  %v200 = vunpack.c.l.b16 %v20
  %v201 = vunpack.c.h.b16 %v20
  %v202 = vunpack.c.l.b16 %v21
  %v203 = vunpack.c.h.b16 %v21
  %v204 = vunpack.c.l.b16 %v22
  %v205 = vunpack.c.l.b16 %v23
  %v206 = vunpack.c.h.b16 %v23
  %v207 = vunpack.c.l.b16 %v24
  %v208 = vunpack.c.h.b16 %v24
  %v209 = vunpack.c.l.b16 %v25
  %v210 = vunpack.c.l.b16 %v26
  %v211 = vunpack.c.h.b16 %v26
  %v212 = vunpack.c.l.b16 %v27
  %v213 = vunpack.c.h.b16 %v27
  %v214 = vunpack.c.l.b16 %v28
  %v215 = vunpack.c.l.b16 %v29
  %v216 = vunpack.c.h.b16 %v29
  %v217 = vunpack.c.l.b16 %v30
  %v218 = vunpack.c.h.b16 %v30
  %v219 = vunpack.c.l.b16 %v31
  %v220 = vunpack.c.l.b16 %v32
  %v221 = vunpack.c.h.b16 %v32
  %v222 = vunpack.c.l.b16 %v33
  %v223 = vunpack.c.h.b16 %v33
  %v224 = vunpack.c.l.b16 %v34
  %v225 = vunpack.c.l.b16 %v35
  %v226 = vunpack.c.h.b16 %v35
  %v227 = vunpack.c.l.b16 %v36
  %v228 = vunpack.c.h.b16 %v36
  %v229 = vunpack.c.l.b16 %v37
  %v230 = vunpack.c.l.b16 %v38
  %v231 = vunpack.c.h.b16 %v38
  %v232 = vunpack.c.l.b16 %v39
  %v233 = vunpack.c.h.b16 %v39
  %v234 = vunpack.c.l.b16 %v40
  %v235 = vunpack.c.l.b16 %v41
  %v236 = vunpack.c.h.b16 %v41
  %v237 = vunpack.c.l.b16 %v42
  %v238 = vunpack.c.h.b16 %v42
  %v239 = vunpack.c.l.b16 %v43
  %v240 = vunpack.c.l.b16 %v44
  %v241 = vunpack.c.h.b16 %v44
  %v242 = vunpack.c.l.b16 %v45
  %v243 = vunpack.c.h.b16 %v45
  %v244 = vunpack.c.l.b16 %v46
  %v245 = vunpack.c.l.b16 %v47
  %v246 = vunpack.c.h.b16 %v47
  %v247 = vunpack.c.l.b16 %v48
  %v248 = vunpack.c.h.b16 %v48
  %v249 = vunpack.c.l.b16 %v49
  %v250 = vunpack.c.l.b16 %v50
  %v251 = vunpack.c.h.b16 %v50
  %v252 = vunpack.c.l.b16 %v51
  %v253 = vunpack.c.h.b16 %v51
  %v254 = vunpack.c.l.b16 %v52
  %v255 = vunpack.c.l.b16 %v53
  %v256 = vunpack.c.h.b16 %v53
  %v257 = vunpack.c.l.b16 %v54
  %v258 = vunpack.c.h.b16 %v54
  %v259 = vunpack.c.l.b16 %v55
  %v260 = vunpack.c.l.b16 %v56
  %v261 = vunpack.c.h.b16 %v56
  %v262 = vunpack.c.l.b16 %v57
  %v263 = vunpack.c.h.b16 %v57
  %v264 = vunpack.c.l.b16 %v58
  %v265 = vunpack.c.l.b16 %v59
  %v266 = vunpack.c.h.b16 %v59
  %v267 = vunpack.c.l.b16 %v60
  %v268 = vunpack.c.h.b16 %v60
  %v269 = vunpack.c.l.b16 %v61
  %v270 = vunpack.c.l.b16 %v62
  %v271 = vunpack.c.h.b16 %v62
  %v272 = vunpack.c.l.b16 %v63
  %v273 = vunpack.c.h.b16 %v63
  %v274 = vunpack.c.l.b16 %v64
  %v275 = vunpack.c.l.b16 %v65
  %v276 = vunpack.c.h.b16 %v65
  %v277 = vunpack.c.l.b16 %v66
  %v278 = vunpack.c.h.b16 %v66
  %v279 = vunpack.c.l.b16 %v67
  %v280 = vpack.c.b16 %v205, %v200
  %v281 = vpack.c.b16 %v206, %v201
  %v282 = vpack.c.b16 %v207, %v202
  %v283 = vpack.c.b16 %v208, %v203
  %v284 = vpack.c.b16 %v209, %v204
  %v285 = vpack.c.b16 %v215, %v210
  %v286 = vpack.c.b16 %v216, %v211
  %v287 = vpack.c.b16 %v217, %v212
  %v288 = vpack.c.b16 %v218, %v213
  %v289 = vpack.c.b16 %v219, %v214
  %v290 = vpack.c.b16 %v225, %v220
  %v291 = vpack.c.b16 %v226, %v221
  %v292 = vpack.c.b16 %v227, %v222
  %v293 = vpack.c.b16 %v228, %v223
  %v294 = vpack.c.b16 %v229, %v224
  %v295 = vpack.c.b16 %v235, %v230
  %v296 = vpack.c.b16 %v236, %v231
  %v297 = vpack.c.b16 %v237, %v232
  %v298 = vpack.c.b16 %v238, %v233
  %v299 = vpack.c.b16 %v239, %v234
  %v300 = vpack.c.b16 %v245, %v240
  %v301 = vpack.c.b16 %v246, %v241
  %v302 = vpack.c.b16 %v247, %v242
  %v303 = vpack.c.b16 %v248, %v243
  %v304 = vpack.c.b16 %v249, %v244
  %v305 = vpack.c.b16 %v255, %v250
  %v306 = vpack.c.b16 %v256, %v251
  %v307 = vpack.c.b16 %v257, %v252
  %v308 = vpack.c.b16 %v258, %v253
  %v309 = vpack.c.b16 %v259, %v254
  %v310 = vpack.c.b16 %v265, %v260
  %v311 = vpack.c.b16 %v266, %v261
  %v312 = vpack.c.b16 %v267, %v262
  %v313 = vpack.c.b16 %v268, %v263
  %v314 = vpack.c.b16 %v269, %v264
  %v315 = vpack.c.b16 %v275, %v270
  %v316 = vpack.c.b16 %v276, %v271
  %v317 = vpack.c.b16 %v277, %v272
  %v318 = vpack.c.b16 %v278, %v273
  %v319 = vpack.c.b16 %v279, %v274
  %v440 = vunpack.c.l.b16 %v68
  %v441 = vunpack.c.l.b16 %v69
  %v442 = vunpack.c.l.b16 %v70
  %v443 = vunpack.c.l.b16 %v71
  %v444 = vunpack.c.l.b16 %v72
  %v445 = vunpack.c.l.b16 %v73
  %v446 = vunpack.c.l.b16 %v74
  %v447 = vunpack.c.l.b16 %v75
  %v448 = vunpack.c.l.b16 %v76
  %v449 = vunpack.c.l.b16 %v77
  %v450 = vunpack.c.l.b16 %v78
  %v451 = vunpack.c.l.b16 %v79
  %v452 = vunpack.c.l.b16 %v80
  %v453 = vunpack.c.l.b16 %v81
  %v454 = vunpack.c.l.b16 %v82
  %v455 = vunpack.c.l.b16 %v83
  %v456 = vunpack.c.l.b16 %v84
  %v457 = vunpack.c.l.b16 %v85
  %v458 = vunpack.c.l.b16 %v86
  %v459 = vunpack.c.l.b16 %v87
  %v460 = vunpack.c.l.b16 %v88
  %v461 = vunpack.c.l.b16 %v89
  %v462 = vunpack.c.l.b16 %v90
  %v463 = vunpack.c.l.b16 %v91
  %v464 = vunpack.c.l.b16 %v92
  %v465 = vunpack.c.l.b16 %v93
  %v466 = vunpack.c.l.b16 %v94
  %v467 = vunpack.c.l.b16 %v95
  %v468 = vunpack.c.l.b16 %v96
  %v469 = vunpack.c.l.b16 %v97
  %v470 = vunpack.c.l.b16 %v98
  %v471 = vunpack.c.l.b16 %v99
  %v472 = vunpack.c.l.b16 %v100
  %v473 = vunpack.c.l.b16 %v101
  %v474 = vunpack.c.l.b16 %v102
  %v475 = vunpack.c.l.b16 %v103
  %v476 = vunpack.c.l.b16 %v104
  %v477 = vunpack.c.l.b16 %v105
  %v478 = vunpack.c.l.b16 %v106
  %v479 = vunpack.c.l.b16 %v107
  %v480 = vunpack.c.l.b16 %v108
  %v481 = vunpack.c.l.b16 %v109
  %v482 = vunpack.c.l.b16 %v110
  %v483 = vunpack.c.l.b16 %v111
  %v484 = vunpack.c.l.b16 %v112
  %v485 = vunpack.c.l.b16 %v113
  %v486 = vunpack.c.l.b16 %v114
  %v487 = vunpack.c.l.b16 %v115
  %v488 = vunpack.c.l.b16 %v116
  %v489 = vunpack.c.l.b16 %v117
  %v490 = vunpack.c.l.b16 %v118
  %v491 = vunpack.c.l.b16 %v119
  %v492 = vunpack.c.l.b16 %v120
  %v493 = vunpack.c.l.b16 %v121
  %v494 = vunpack.c.l.b16 %v122
  %v495 = vunpack.c.l.b16 %v123
  %v496 = vunpack.c.l.b16 %v124
  %v497 = vunpack.c.l.b16 %v125
  %v498 = vunpack.c.l.b16 %v126
  %v499 = vunpack.c.l.b16 %v127
  %v500 = vunpack.c.l.b16 %v128
  %v501 = vunpack.c.l.b16 %v129
  %v502 = vunpack.c.l.b16 %v130
  %v503 = vunpack.c.l.b16 %v131
  %v504 = vunpack.c.l.b16 %v132
  %v505 = vunpack.c.l.b16 %v133
  %v506 = vunpack.c.l.b16 %v134
  %v507 = vunpack.c.l.b16 %v135
  %v508 = vunpack.c.l.b16 %v136
  %v509 = vunpack.c.l.b16 %v137
  %v510 = vunpack.c.l.b16 %v138
  %v511 = vunpack.c.l.b16 %v139
  %v512 = vunpack.c.l.b16 %v140
  %v513 = vunpack.c.l.b16 %v141
  %v514 = vunpack.c.l.b16 %v142
  %v515 = vunpack.c.l.b16 %v143
  %v516 = vunpack.c.l.b16 %v144
  %v517 = vunpack.c.l.b16 %v145
  %v518 = vunpack.c.l.b16 %v146
  %v519 = vunpack.c.l.b16 %v147
  %v520 = vpack.c.b16 %v441, %v440
  %v521 = vpack.c.b16 %v443, %v442
  %v522 = vpack.c.b16 %v445, %v444
  %v523 = vpack.c.b16 %v447, %v446
  %v524 = vpack.c.b16 %v449, %v448
  %v525 = vpack.c.b16 %v451, %v450
  %v526 = vpack.c.b16 %v453, %v452
  %v527 = vpack.c.b16 %v455, %v454
  %v528 = vpack.c.b16 %v457, %v456
  %v529 = vpack.c.b16 %v459, %v458
  %v530 = vpack.c.b16 %v461, %v460
  %v531 = vpack.c.b16 %v463, %v462
  %v532 = vpack.c.b16 %v465, %v464
  %v533 = vpack.c.b16 %v467, %v466
  %v534 = vpack.c.b16 %v469, %v468
  %v535 = vpack.c.b16 %v471, %v470
  %v536 = vpack.c.b16 %v473, %v472
  %v537 = vpack.c.b16 %v475, %v474
  %v538 = vpack.c.b16 %v477, %v476
  %v539 = vpack.c.b16 %v479, %v478
  %v540 = vpack.c.b16 %v481, %v480
  %v541 = vpack.c.b16 %v483, %v482
  %v542 = vpack.c.b16 %v485, %v484
  %v543 = vpack.c.b16 %v487, %v486
  %v544 = vpack.c.b16 %v489, %v488
  %v545 = vpack.c.b16 %v491, %v490
  %v546 = vpack.c.b16 %v493, %v492
  %v547 = vpack.c.b16 %v495, %v494
  %v548 = vpack.c.b16 %v497, %v496
  %v549 = vpack.c.b16 %v499, %v498
  %v550 = vpack.c.b16 %v501, %v500
  %v551 = vpack.c.b16 %v503, %v502
  %v552 = vpack.c.b16 %v505, %v504
  %v553 = vpack.c.b16 %v507, %v506
  %v554 = vpack.c.b16 %v509, %v508
  %v555 = vpack.c.b16 %v511, %v510
  %v556 = vpack.c.b16 %v513, %v512
  %v557 = vpack.c.b16 %v515, %v514
  %v558 = vpack.c.b16 %v517, %v516
  %v559 = vpack.c.b16 %v519, %v518
  %600 = vmatpush.bf16.msra.mxu0 %v527
  %601 = vmatpush.bf16.msra.mxu0 %v526
  %602 = vmatpush.bf16.msra.mxu0 %v525
  %603 = vmatpush.bf16.msra.mxu0 %v524
  %604 = vmatpush.bf16.msra.mxu0 %v523
  %605 = vmatpush.bf16.msra.mxu0 %v522
  %606 = vmatpush.bf16.msra.mxu0 %v521
  %607 = vmatpush.bf16.msra.mxu0 %v520
  %608 = vmatmul.bf16.gmra.mxu0 %v280
  %v609 = vpop.f32.mrf.mxu0
  %v610 = vadd.f32 %v150, %v609
  %v611 = vpop.f32.mrf.mxu0
  %v612 = vadd.f32 %v150, %v611
  %613 = vmatmul.bf16.gmra.mxu0 %v285
  %v614 = vpop.f32.mrf.mxu0
  %v615 = vadd.f32 %v150, %v614
  %v616 = vpop.f32.mrf.mxu0
  %v617 = vadd.f32 %v150, %v616
  %618 = vmatmul.bf16.gmra.mxu0 %v290
  %v619 = vpop.f32.mrf.mxu0
  %v620 = vadd.f32 %v150, %v619
  %v621 = vpop.f32.mrf.mxu0
  %v622 = vadd.f32 %v150, %v621
  %623 = vmatmul.bf16.gmra.mxu0 %v295
  %v624 = vpop.f32.mrf.mxu0
  %v625 = vadd.f32 %v150, %v624
  %v626 = vpop.f32.mrf.mxu0
  %v627 = vadd.f32 %v150, %v626
  %628 = vmatmul.bf16.gmra.mxu0 %v300
  %v629 = vpop.f32.mrf.mxu0
  %v630 = vadd.f32 %v150, %v629
  %v631 = vpop.f32.mrf.mxu0
  %v632 = vadd.f32 %v150, %v631
  %633 = vmatmul.bf16.gmra.mxu0 %v305
  %v634 = vpop.f32.mrf.mxu0
  %v635 = vadd.f32 %v150, %v634
  %v636 = vpop.f32.mrf.mxu0
  %v637 = vadd.f32 %v150, %v636
  %638 = vmatmul.bf16.gmra.mxu0 %v310
  %v639 = vpop.f32.mrf.mxu0
  %v640 = vadd.f32 %v150, %v639
  %v641 = vpop.f32.mrf.mxu0
  %v642 = vadd.f32 %v150, %v641
  %643 = vmatmul.bf16.gmra.mxu0 %v315
  %v644 = vpop.f32.mrf.mxu0
  %v645 = vadd.f32 %v150, %v644
  %v646 = vpop.f32.mrf.mxu0
  %v647 = vadd.f32 %v150, %v646
  %648 = vdwg.mxu0
  %649 = vmatpush.bf16.msra.mxu0 %v535
  %650 = vmatpush.bf16.msra.mxu0 %v534
  %651 = vmatpush.bf16.msra.mxu0 %v533
  %652 = vmatpush.bf16.msra.mxu0 %v532
  %653 = vmatpush.bf16.msra.mxu0 %v531
  %654 = vmatpush.bf16.msra.mxu0 %v530
  %655 = vmatpush.bf16.msra.mxu0 %v529
  %656 = vmatpush.bf16.msra.mxu0 %v528
  %657 = vmatmul.bf16.gmra.mxu0 %v281
  %v658 = vpop.f32.mrf.mxu0
  %v659 = vadd.f32 %v610, %v658
  %v660 = vpop.f32.mrf.mxu0
  %v661 = vadd.f32 %v612, %v660
  %662 = vmatmul.bf16.gmra.mxu0 %v286
  %v663 = vpop.f32.mrf.mxu0
  %v664 = vadd.f32 %v615, %v663
  %v665 = vpop.f32.mrf.mxu0
  %v666 = vadd.f32 %v617, %v665
  %667 = vmatmul.bf16.gmra.mxu0 %v291
  %v668 = vpop.f32.mrf.mxu0
  %v669 = vadd.f32 %v620, %v668
  %v670 = vpop.f32.mrf.mxu0
  %v671 = vadd.f32 %v622, %v670
  %672 = vmatmul.bf16.gmra.mxu0 %v296
  %v673 = vpop.f32.mrf.mxu0
  %v674 = vadd.f32 %v625, %v673
  %v675 = vpop.f32.mrf.mxu0
  %v676 = vadd.f32 %v627, %v675
  %677 = vmatmul.bf16.gmra.mxu0 %v301
  %v678 = vpop.f32.mrf.mxu0
  %v679 = vadd.f32 %v630, %v678
  %v680 = vpop.f32.mrf.mxu0
  %v681 = vadd.f32 %v632, %v680
  %682 = vmatmul.bf16.gmra.mxu0 %v306
  %v683 = vpop.f32.mrf.mxu0
  %v684 = vadd.f32 %v635, %v683
  %v685 = vpop.f32.mrf.mxu0
  %v686 = vadd.f32 %v637, %v685
  %687 = vmatmul.bf16.gmra.mxu0 %v311
  %v688 = vpop.f32.mrf.mxu0
  %v689 = vadd.f32 %v640, %v688
  %v690 = vpop.f32.mrf.mxu0
  %v691 = vadd.f32 %v642, %v690
  %692 = vmatmul.bf16.gmra.mxu0 %v316
  %v693 = vpop.f32.mrf.mxu0
  %v694 = vadd.f32 %v645, %v693
  %v695 = vpop.f32.mrf.mxu0
  %v696 = vadd.f32 %v647, %v695
  %697 = vdwg.mxu0
  %698 = vmatpush.bf16.msra.mxu0 %v543
  %699 = vmatpush.bf16.msra.mxu0 %v542
  %700 = vmatpush.bf16.msra.mxu0 %v541
  %701 = vmatpush.bf16.msra.mxu0 %v540
  %702 = vmatpush.bf16.msra.mxu0 %v539
  %703 = vmatpush.bf16.msra.mxu0 %v538
  %704 = vmatpush.bf16.msra.mxu0 %v537
  %705 = vmatpush.bf16.msra.mxu0 %v536
  %706 = vmatmul.bf16.gmra.mxu0 %v282
  %v707 = vpop.f32.mrf.mxu0
  %v708 = vadd.f32 %v659, %v707
  %v709 = vpop.f32.mrf.mxu0
  %v710 = vadd.f32 %v661, %v709
  %711 = vmatmul.bf16.gmra.mxu0 %v287
  %v712 = vpop.f32.mrf.mxu0
  %v713 = vadd.f32 %v664, %v712
  %v714 = vpop.f32.mrf.mxu0
  %v715 = vadd.f32 %v666, %v714
  %716 = vmatmul.bf16.gmra.mxu0 %v292
  %v717 = vpop.f32.mrf.mxu0
  %v718 = vadd.f32 %v669, %v717
  %v719 = vpop.f32.mrf.mxu0
  %v720 = vadd.f32 %v671, %v719
  %721 = vmatmul.bf16.gmra.mxu0 %v297
  %v722 = vpop.f32.mrf.mxu0
  %v723 = vadd.f32 %v674, %v722
  %v724 = vpop.f32.mrf.mxu0
  %v725 = vadd.f32 %v676, %v724
  %726 = vmatmul.bf16.gmra.mxu0 %v302
  %v727 = vpop.f32.mrf.mxu0
  %v728 = vadd.f32 %v679, %v727
  %v729 = vpop.f32.mrf.mxu0
  %v730 = vadd.f32 %v681, %v729
  %731 = vmatmul.bf16.gmra.mxu0 %v307
  %v732 = vpop.f32.mrf.mxu0
  %v733 = vadd.f32 %v684, %v732
  %v734 = vpop.f32.mrf.mxu0
  %v735 = vadd.f32 %v686, %v734
  %736 = vmatmul.bf16.gmra.mxu0 %v312
  %v737 = vpop.f32.mrf.mxu0
  %v738 = vadd.f32 %v689, %v737
  %v739 = vpop.f32.mrf.mxu0
  %v740 = vadd.f32 %v691, %v739
  %741 = vmatmul.bf16.gmra.mxu0 %v317
  %v742 = vpop.f32.mrf.mxu0
  %v743 = vadd.f32 %v694, %v742
  %v744 = vpop.f32.mrf.mxu0
  %v745 = vadd.f32 %v696, %v744
  %746 = vdwg.mxu0
  %747 = vmatpush.bf16.msra.mxu0 %v551
  %748 = vmatpush.bf16.msra.mxu0 %v550
  %749 = vmatpush.bf16.msra.mxu0 %v549
  %750 = vmatpush.bf16.msra.mxu0 %v548
  %751 = vmatpush.bf16.msra.mxu0 %v547
  %752 = vmatpush.bf16.msra.mxu0 %v546
  %753 = vmatpush.bf16.msra.mxu0 %v545
  %754 = vmatpush.bf16.msra.mxu0 %v544
  %755 = vmatmul.bf16.gmra.mxu0 %v283
  %v756 = vpop.f32.mrf.mxu0
  %v757 = vadd.f32 %v708, %v756
  %v758 = vpop.f32.mrf.mxu0
  %v759 = vadd.f32 %v710, %v758
  %760 = vmatmul.bf16.gmra.mxu0 %v288
  %v761 = vpop.f32.mrf.mxu0
  %v762 = vadd.f32 %v713, %v761
  %v763 = vpop.f32.mrf.mxu0
  %v764 = vadd.f32 %v715, %v763
  %765 = vmatmul.bf16.gmra.mxu0 %v293
  %v766 = vpop.f32.mrf.mxu0
  %v767 = vadd.f32 %v718, %v766
  %v768 = vpop.f32.mrf.mxu0
  %v769 = vadd.f32 %v720, %v768
  %770 = vmatmul.bf16.gmra.mxu0 %v298
  %v771 = vpop.f32.mrf.mxu0
  %v772 = vadd.f32 %v723, %v771
  %v773 = vpop.f32.mrf.mxu0
  %v774 = vadd.f32 %v725, %v773
  %775 = vmatmul.bf16.gmra.mxu0 %v303
  %v776 = vpop.f32.mrf.mxu0
  %v777 = vadd.f32 %v728, %v776
  %v778 = vpop.f32.mrf.mxu0
  %v779 = vadd.f32 %v730, %v778
  %780 = vmatmul.bf16.gmra.mxu0 %v308
  %v781 = vpop.f32.mrf.mxu0
  %v782 = vadd.f32 %v733, %v781
  %v783 = vpop.f32.mrf.mxu0
  %v784 = vadd.f32 %v735, %v783
  %785 = vmatmul.bf16.gmra.mxu0 %v313
  %v786 = vpop.f32.mrf.mxu0
  %v787 = vadd.f32 %v738, %v786
  %v788 = vpop.f32.mrf.mxu0
  %v789 = vadd.f32 %v740, %v788
  %790 = vmatmul.bf16.gmra.mxu0 %v318
  %v791 = vpop.f32.mrf.mxu0
  %v792 = vadd.f32 %v743, %v791
  %v793 = vpop.f32.mrf.mxu0
  %v794 = vadd.f32 %v745, %v793
  %795 = vdwg.mxu0
  %796 = vmatpush.bf16.msra.mxu0 %v559
  %797 = vmatpush.bf16.msra.mxu0 %v558
  %798 = vmatpush.bf16.msra.mxu0 %v557
  %799 = vmatpush.bf16.msra.mxu0 %v556
  %800 = vmatpush.bf16.msra.mxu0 %v555
  %801 = vmatpush.bf16.msra.mxu0 %v554
  %802 = vmatpush.bf16.msra.mxu0 %v553
  %803 = vmatpush.bf16.msra.mxu0 %v552
  %804 = vmatmul.bf16.gmra.mxu0 %v284
  %v805 = vpop.f32.mrf.mxu0
  %v806 = vadd.f32 %v757, %v805
  %v807 = vpop.f32.mrf.mxu0
  %v808 = vadd.f32 %v759, %v807
  %809 = vmatmul.bf16.gmra.mxu0 %v289
  %v810 = vpop.f32.mrf.mxu0
  %v811 = vadd.f32 %v762, %v810
  %v812 = vpop.f32.mrf.mxu0
  %v813 = vadd.f32 %v764, %v812
  %814 = vmatmul.bf16.gmra.mxu0 %v294
  %v815 = vpop.f32.mrf.mxu0
  %v816 = vadd.f32 %v767, %v815
  %v817 = vpop.f32.mrf.mxu0
  %v818 = vadd.f32 %v769, %v817
  %819 = vmatmul.bf16.gmra.mxu0 %v299
  %v820 = vpop.f32.mrf.mxu0
  %v821 = vadd.f32 %v772, %v820
  %v822 = vpop.f32.mrf.mxu0
  %v823 = vadd.f32 %v774, %v822
  %824 = vmatmul.bf16.gmra.mxu0 %v304
  %v825 = vpop.f32.mrf.mxu0
  %v826 = vadd.f32 %v777, %v825
  %v827 = vpop.f32.mrf.mxu0
  %v828 = vadd.f32 %v779, %v827
  %829 = vmatmul.bf16.gmra.mxu0 %v309
  %v830 = vpop.f32.mrf.mxu0
  %v831 = vadd.f32 %v782, %v830
  %v832 = vpop.f32.mrf.mxu0
  %v833 = vadd.f32 %v784, %v832
  %834 = vmatmul.bf16.gmra.mxu0 %v314
  %v835 = vpop.f32.mrf.mxu0
  %v836 = vadd.f32 %v787, %v835
  %v837 = vpop.f32.mrf.mxu0
  %v838 = vadd.f32 %v789, %v837
  %839 = vmatmul.bf16.gmra.mxu0 %v319
  %v840 = vpop.f32.mrf.mxu0
  %v841 = vadd.f32 %v792, %v840
  %v842 = vpop.f32.mrf.mxu0
  %v843 = vadd.f32 %v794, %v842
  %844 = vdwg.mxu0
  %vm845 = vcmp.gt.f32.partialorder %v806, 0.0
  %vm846 = vcmp.gt.f32.partialorder %v808, 0.0
  %vm847 = vcmp.gt.f32.partialorder %v811, 0.0
  %vm848 = vcmp.gt.f32.partialorder %v813, 0.0
  %vm849 = vcmp.gt.f32.partialorder %v816, 0.0
  %vm850 = vcmp.gt.f32.partialorder %v818, 0.0
  %vm851 = vcmp.gt.f32.partialorder %v821, 0.0
  %vm852 = vcmp.gt.f32.partialorder %v823, 0.0
  %vm853 = vcmp.gt.f32.partialorder %v826, 0.0
  %vm854 = vcmp.gt.f32.partialorder %v828, 0.0
  %vm855 = vcmp.gt.f32.partialorder %v831, 0.0
  %vm856 = vcmp.gt.f32.partialorder %v833, 0.0
  %vm857 = vcmp.gt.f32.partialorder %v836, 0.0
  %vm858 = vcmp.gt.f32.partialorder %v838, 0.0
  %vm859 = vcmp.gt.f32.partialorder %v841, 0.0
  %vm860 = vcmp.gt.f32.partialorder %v843, 0.0
  %v861 = vmul.f32 %v806, 0.2
  %v862 = vmul.f32 %v808, 0.2
  %v863 = vmul.f32 %v811, 0.2
  %v864 = vmul.f32 %v813, 0.2
  %v865 = vmul.f32 %v816, 0.2
  %v866 = vmul.f32 %v818, 0.2
  %v867 = vmul.f32 %v821, 0.2
  %v868 = vmul.f32 %v823, 0.2
  %v869 = vmul.f32 %v826, 0.2
  %v870 = vmul.f32 %v828, 0.2
  %v871 = vmul.f32 %v831, 0.2
  %v872 = vmul.f32 %v833, 0.2
  %v873 = vmul.f32 %v836, 0.2
  %v874 = vmul.f32 %v838, 0.2
  %v875 = vmul.f32 %v841, 0.2
  %v876 = vmul.f32 %v843, 0.2
  %v877 = vsel %vm845, %v806, %v861
  %v878 = vsel %vm846, %v808, %v862
  %v879 = vsel %vm847, %v811, %v863
  %v880 = vsel %vm848, %v813, %v864
  %v881 = vsel %vm849, %v816, %v865
  %v882 = vsel %vm850, %v818, %v866
  %v883 = vsel %vm851, %v821, %v867
  %v884 = vsel %vm852, %v823, %v868
  %v885 = vsel %vm853, %v826, %v869
  %v886 = vsel %vm854, %v828, %v870
  %v887 = vsel %vm855, %v831, %v871
  %v888 = vsel %vm856, %v833, %v872
  %v889 = vsel %vm857, %v836, %v873
  %v890 = vsel %vm858, %v838, %v874
  %v891 = vsel %vm859, %v841, %v875
  %v892 = vsel %vm860, %v843, %v876
  %v893 = vadd.f32 %v877, %v878
  %v894 = vadd.f32 %v893, %v879
  %v895 = vadd.f32 %v894, %v880
  %v896 = vadd.f32 %v895, %v881
  %v897 = vadd.f32 %v896, %v882
  %v898 = vadd.f32 %v897, %v883
  %v899 = vadd.f32 %v898, %v884
  %v900 = vadd.f32 %v899, %v885
  %v901 = vadd.f32 %v900, %v886
  %v902 = vadd.f32 %v901, %v887
  %v903 = vadd.f32 %v902, %v888
  %v904 = vadd.f32 %v903, %v889
  %v905 = vadd.f32 %v904, %v890
  %v906 = vadd.f32 %v905, %v891
  %v907 = vadd.f32 %v906, %v892
  %v908 = vrot.slane %v907, 4
  %v909 = vadd.f32 %v907, %v908
  %v910 = vrot.slane %v909, 2
  %v911 = vadd.f32 %v909, %v910
  %v912 = vrot.slane %v911, 1
  %v913 = vadd.f32 %v911, %v912
  %v914 = vmul.f32 %v877, %v877
  %v915 = vmul.f32 %v878, %v878
  %v916 = vmul.f32 %v879, %v879
  %v917 = vmul.f32 %v880, %v880
  %v918 = vmul.f32 %v881, %v881
  %v919 = vmul.f32 %v882, %v882
  %v920 = vmul.f32 %v883, %v883
  %v921 = vmul.f32 %v884, %v884
  %v922 = vmul.f32 %v885, %v885
  %v923 = vmul.f32 %v886, %v886
  %v924 = vmul.f32 %v887, %v887
  %v925 = vmul.f32 %v888, %v888
  %v926 = vmul.f32 %v889, %v889
  %v927 = vmul.f32 %v890, %v890
  %v928 = vmul.f32 %v891, %v891
  %v929 = vmul.f32 %v892, %v892
  %v930 = vadd.f32 %v914, %v915
  %v931 = vadd.f32 %v930, %v916
  %v932 = vadd.f32 %v931, %v917
  %v933 = vadd.f32 %v932, %v918
  %v934 = vadd.f32 %v933, %v919
  %v935 = vadd.f32 %v934, %v920
  %v936 = vadd.f32 %v935, %v921
  %v937 = vadd.f32 %v936, %v922
  %v938 = vadd.f32 %v937, %v923
  %v939 = vadd.f32 %v938, %v924
  %v940 = vadd.f32 %v939, %v925
  %v941 = vadd.f32 %v940, %v926
  %v942 = vadd.f32 %v941, %v927
  %v943 = vadd.f32 %v942, %v928
  %v944 = vadd.f32 %v943, %v929
  %v945 = vrot.slane %v944, 4
  %v946 = vadd.f32 %v944, %v945
  %v947 = vrot.slane %v946, 2
  %v948 = vadd.f32 %v946, %v947
  %v949 = vrot.slane %v948, 1
  %v950 = vadd.f32 %v948, %v949
  %v951 = vmul.f32 %v913, 0.0078125
  %v952 = vmul.f32 %v950, 0.0078125
  %v953 = vmul.f32 %v951, %v951
  %v954 = vsub.f32 %v952, %v953
  %v955 = vadd.f32 %v954, 1e-05
  %v956 = vrsqrt.pop %v955
  %v957 = vmul.f32 %v956, %v955
  %v958 = vmul.f32 %v957, %v956
  %v959 = vmul.f32 0.5, %v958
  %v960 = vsub.f32 1.5, %v959
  %v961 = vmul.f32 %v956, %v960
  %vm962 = vweird.f32 %v955
  %vm963 = vweird.f32 %v956
  %vm964 = vmor %vm962, %vm963
  %v965 = vsel %vm964, %v956, %v961
  %v966 = vld [vmem:[%s3] sm:$0x1]
  %v967 = vmul.f32 %v965, %v966
  %v968 = vsub.f32 %v877, %v951
  %v969 = vsub.f32 %v878, %v951
  %v970 = vsub.f32 %v879, %v951
  %v971 = vsub.f32 %v880, %v951
  %v972 = vsub.f32 %v881, %v951
  %v973 = vsub.f32 %v882, %v951
  %v974 = vsub.f32 %v883, %v951
  %v975 = vsub.f32 %v884, %v951
  %v976 = vsub.f32 %v885, %v951
  %v977 = vsub.f32 %v886, %v951
  %v978 = vsub.f32 %v887, %v951
  %v979 = vsub.f32 %v888, %v951
  %v980 = vsub.f32 %v889, %v951
  %v981 = vsub.f32 %v890, %v951
  %v982 = vsub.f32 %v891, %v951
  %v983 = vsub.f32 %v892, %v951
  %v984 = vperm.slane %v967, 0
  %v985 = vmul.f32 %v968, %v984
  %v986 = vmul.f32 %v969, %v984
  %v987 = vmul.f32 %v970, %v984
  %v988 = vmul.f32 %v971, %v984
  %v989 = vmul.f32 %v972, %v984
  %v990 = vmul.f32 %v973, %v984
  %v991 = vmul.f32 %v974, %v984
  %v992 = vmul.f32 %v975, %v984
  %v993 = vmul.f32 %v976, %v984
  %v994 = vmul.f32 %v977, %v984
  %v995 = vmul.f32 %v978, %v984
  %v996 = vmul.f32 %v979, %v984
  %v997 = vmul.f32 %v980, %v984
  %v998 = vmul.f32 %v981, %v984
  %v999 = vmul.f32 %v982, %v984
  %v1000 = vmul.f32 %v983, %v984
  %v1001 = vld [vmem:[%s4] sm:$0x1]
  %v1003 = vperm.slane %v1001, 0
  %v1005 = vadd.f32 %v985, %v1003
  %v1006 = vadd.f32 %v986, %v1003
  %v1007 = vadd.f32 %v987, %v1003
  %v1008 = vadd.f32 %v988, %v1003
  %v1009 = vadd.f32 %v989, %v1003
  %v1010 = vadd.f32 %v990, %v1003
  %v1011 = vadd.f32 %v991, %v1003
  %v1012 = vadd.f32 %v992, %v1003
  %v1013 = vadd.f32 %v993, %v1003
  %v1014 = vadd.f32 %v994, %v1003
  %v1015 = vadd.f32 %v995, %v1003
  %v1016 = vadd.f32 %v996, %v1003
  %v1017 = vadd.f32 %v997, %v1003
  %v1018 = vadd.f32 %v998, %v1003
  %v1019 = vadd.f32 %v999, %v1003
  %v1020 = vadd.f32 %v1000, %v1003
  %1021 = vst [vmem:[%s5] sm:$0xff] %v1005
  %1022 = vst [vmem:[%s5 + $0x8] sm:$0xff] %v1006
  %1023 = vst [vmem:[%s5 + $0x10] sm:$0xff] %v1007
  %1024 = vst [vmem:[%s5 + $0x18] sm:$0xff] %v1008
  %1025 = vst [vmem:[%s5 + $0x20] sm:$0xff] %v1009
  %1026 = vst [vmem:[%s5 + $0x28] sm:$0xff] %v1010
  %1027 = vst [vmem:[%s5 + $0x30] sm:$0xff] %v1011
  %1028 = vst [vmem:[%s5 + $0x38] sm:$0xff] %v1012
  %1029 = vst [vmem:[%s5 + $0x40] sm:$0xff] %v1013
  %1030 = vst [vmem:[%s5 + $0x48] sm:$0xff] %v1014
  %1031 = vst [vmem:[%s5 + $0x50] sm:$0xff] %v1015
  %1032 = vst [vmem:[%s5 + $0x58] sm:$0xff] %v1016
  %1033 = vst [vmem:[%s5 + $0x60] sm:$0xff] %v1017
  %1034 = vst [vmem:[%s5 + $0x68] sm:$0xff] %v1018
  %1035 = vst [vmem:[%s5 + $0x70] sm:$0xff] %v1019
  %1036 = vst [vmem:[%s5 + $0x78] sm:$0xff] %v1020
  // Predicated region
  $region22: #{discriminator_forward.4} parent=0 // pred_check
    _
  $region23: #{discriminator_forward.4} parent=0 // pred_check_branch
    %1038 = sbr.rel (0) target = $region25
  $region24: #{discriminator_forward.4} parent=0 // pred_region
    _
  $region25: #{discriminator_forward.4} parent=0 // pred_fallthru
    _
  // Predicated region
  $region26: #{discriminator_forward.4} parent=0 // pred_check
    _
  $region27: #{discriminator_forward.4} parent=0 // pred_check_branch
    %1040 = sbr.rel (0) target = $region29
  $region28: #{discriminator_forward.4} parent=0 // pred_region
    _
  $region29: #{discriminator_forward.4} parent=0 // pred_fallthru
    _

// kernel: discriminator_forward.5
$region0: #{discriminator_forward.5}
  #allocation0 [shape = 'u32[]', space=smem, size = 0x4, offset = 0x4, fixed_abs, tag = 'smem constant byte address 0x4 - core index']
  #allocation1 [shape = 'u32[72,128]{1,0:T(1,128)}', space=vmem, size = 0x9000, scoped, tag = 'internal scratch']
  #allocation2 [shape = 'f32[1,1]{1,0:T(1,128)S(1)}', space=vmem, size = 0x200, scoped, tag = 'scoped memory for discriminator_forward.5']
  %s0 = inlined_call_operand.vmem [shape: bf16[32,1152], index: 0, kind: input, shape index: {}]
  %s1 = inlined_call_operand.vmem [shape: bf16[1152,256], index: 1, kind: input, shape index: {}]
  %s2 = inlined_call_operand.vmem [shape: f32[1,256], index: 2, kind: input, shape index: {}]
  %s3 = inlined_call_operand.vmem [shape: f32[1,256], index: 3, kind: input, shape index: {}]
  %s4 = inlined_call_operand.vmem [shape: f32[1,256], index: 4, kind: input, shape index: {}]
  %s5 = inlined_call_operand.vmem [shape: f32[32,256], index: 5, kind: input, shape index: {}]
  %s6 = inlined_call_operand.<no memory space> [shape: f32[1,1], index: 6, kind: input, shape index: {}]
  %s7 = inlined_call_operand.vmem [shape: f32[2,32], index: 7, kind: input, shape index: {}]
  %s8 = inlined_call_operand.vmem [shape: f32[2,1], index: 8, kind: output, shape index: {}]
  %s9 = sld [smem:[#allocation0]]
  $region42: #{discriminator_forward.5} parent=0
    _
  %s11 = ssub.s32 1, %s9
  %s12 = scalar_select 0, %s11, %s9
  %v13 = vstv %s6
  %14 = vst [vmem:[#allocation2] sm:$0x1] %v13
  // Predicated region
  $region2: #{discriminator_forward.5} parent=0 // pred_check
    _
  $region3: #{discriminator_forward.5} parent=0 // pred_check_branch
    %16 = sbr.rel (0) target = $region5
  $region4: #{discriminator_forward.5} parent=0 // pred_region
    _
  $region5: #{discriminator_forward.5} parent=0 // pred_fallthru
    _
  // Predicated region
  $region6: #{discriminator_forward.5} parent=0 // pred_check
    _
  $region7: #{discriminator_forward.5} parent=0 // pred_check_branch
    %18 = sbr.rel (0) target = $region9
  $region8: #{discriminator_forward.5} parent=0 // pred_region
    _
  $region9: #{discriminator_forward.5} parent=0 // pred_fallthru
    _
  // Predicated region
  $region10: #{discriminator_forward.5} parent=0 // pred_check
    _
  $region11: #{discriminator_forward.5} parent=0 // pred_check_branch
    %20 = sbr.rel (0) target = $region13
  $region12: #{discriminator_forward.5} parent=0 // pred_region
    _
  $region13: #{discriminator_forward.5} parent=0 // pred_fallthru
    _
  // Predicated region
  $region14: #{discriminator_forward.5} parent=0 // pred_check
    _
  $region15: #{discriminator_forward.5} parent=0 // pred_check_branch
    %22 = sbr.rel (0) target = $region17
  $region16: #{discriminator_forward.5} parent=0 // pred_region
    _
  $region17: #{discriminator_forward.5} parent=0 // pred_fallthru
    _
  // Predicated region
  $region18: #{discriminator_forward.5} parent=0 // pred_check
    _
  $region19: #{discriminator_forward.5} parent=0 // pred_check_branch
    %24 = sbr.rel (0) target = $region21
  $region20: #{discriminator_forward.5} parent=0 // pred_region
    _
  $region21: #{discriminator_forward.5} parent=0 // pred_fallthru
    _
  // Predicated region
  $region22: #{discriminator_forward.5} parent=0 // pred_check
    _
  $region23: #{discriminator_forward.5} parent=0 // pred_check_branch
    %26 = sbr.rel (0) target = $region25
  $region24: #{discriminator_forward.5} parent=0 // pred_region
    _
  $region25: #{discriminator_forward.5} parent=0 // pred_fallthru
    _
  // Predicated region
  $region26: #{discriminator_forward.5} parent=0 // pred_check
    _
  $region27: #{discriminator_forward.5} parent=0 // pred_check_branch
    %28 = sbr.rel (0) target = $region29
  $region28: #{discriminator_forward.5} parent=0 // pred_region
    _
  $region29: #{discriminator_forward.5} parent=0 // pred_fallthru
    _
  // Predicated region
  $region30: #{discriminator_forward.5} parent=0 // pred_check
    _
  $region31: #{discriminator_forward.5} parent=0 // pred_check_branch
    %30 = sbr.rel (0) target = $region33
  $region32: #{discriminator_forward.5} parent=0 // pred_region
    _
  $region33: #{discriminator_forward.5} parent=0 // pred_fallthru
    _
  %v31 = vld [vmem:[%s0] sm:$0xff]
  %v32 = vld [vmem:[%s0 + $0x8] sm:$0xff]
  %v33 = vld [vmem:[%s0 + $0x10] sm:$0xff]
  %v34 = vld [vmem:[%s0 + $0x18] sm:$0xff]
  %v35 = vld [vmem:[%s0 + $0x20] sm:$0xf]
  %v36 = vld [vmem:[%s0 + $0x24] sm:$0xff]
  %v37 = vld [vmem:[%s0 + $0x2c] sm:$0xff]
  %v38 = vld [vmem:[%s0 + $0x34] sm:$0xff]
  %v39 = vld [vmem:[%s0 + $0x3c] sm:$0xff]
  %v40 = vld [vmem:[%s0 + $0x44] sm:$0xf]
  %v41 = vld [vmem:[%s0 + $0x48] sm:$0xff]
  %v42 = vld [vmem:[%s0 + $0x50] sm:$0xff]
  %v43 = vld [vmem:[%s0 + $0x58] sm:$0xff]
  %v44 = vld [vmem:[%s0 + $0x60] sm:$0xff]
  %v45 = vld [vmem:[%s0 + $0x68] sm:$0xf]
  %v46 = vld [vmem:[%s0 + $0x6c] sm:$0xff]
  %v47 = vld [vmem:[%s0 + $0x74] sm:$0xff]
  %v48 = vld [vmem:[%s0 + $0x7c] sm:$0xff]
  %v49 = vld [vmem:[%s0 + $0x84] sm:$0xff]
  %v50 = vld [vmem:[%s0 + $0x8c] sm:$0xf]
  %v51 = vld [vmem:[%s1] sm:$0xff]
  %v52 = vld [vmem:[%s1 + $0x8] sm:$0xff]
  %v53 = vld [vmem:[%s1 + $0x10] sm:$0xff]
  %v54 = vld [vmem:[%s1 + $0x18] sm:$0xff]
  %v55 = vld [vmem:[%s1 + $0x20] sm:$0xff]
  %v56 = vld [vmem:[%s1 + $0x28] sm:$0xff]
  %v57 = vld [vmem:[%s1 + $0x30] sm:$0xff]
  %v58 = vld [vmem:[%s1 + $0x38] sm:$0xff]
  %v59 = vld [vmem:[%s1 + $0x40] sm:$0xff]
  %v60 = vld [vmem:[%s1 + $0x48] sm:$0xff]
  %v61 = vld [vmem:[%s1 + $0x50] sm:$0xff]
  %v62 = vld [vmem:[%s1 + $0x58] sm:$0xff]
  %v63 = vld [vmem:[%s1 + $0x60] sm:$0xff]
  %v64 = vld [vmem:[%s1 + $0x68] sm:$0xff]
  %v65 = vld [vmem:[%s1 + $0x70] sm:$0xff]
  %v66 = vld [vmem:[%s1 + $0x78] sm:$0xff]
  %v67 = vld [vmem:[%s1 + $0x80] sm:$0xff]
  %v68 = vld [vmem:[%s1 + $0x88] sm:$0xff]
  %v69 = vld [vmem:[%s1 + $0x90] sm:$0xff]
  %v70 = vld [vmem:[%s1 + $0x98] sm:$0xff]
  %v71 = vld [vmem:[%s1 + $0xa0] sm:$0xff]
  %v72 = vld [vmem:[%s1 + $0xa8] sm:$0xff]
  %v73 = vld [vmem:[%s1 + $0xb0] sm:$0xff]
  %v74 = vld [vmem:[%s1 + $0xb8] sm:$0xff]
  %v75 = vld [vmem:[%s1 + $0xc0] sm:$0xff]
  %v76 = vld [vmem:[%s1 + $0xc8] sm:$0xff]
  %v77 = vld [vmem:[%s1 + $0xd0] sm:$0xff]
  %v78 = vld [vmem:[%s1 + $0xd8] sm:$0xff]
  %v79 = vld [vmem:[%s1 + $0xe0] sm:$0xff]
  %v80 = vld [vmem:[%s1 + $0xe8] sm:$0xff]
  %v81 = vld [vmem:[%s1 + $0xf0] sm:$0xff]
  %v82 = vld [vmem:[%s1 + $0xf8] sm:$0xff]
  %v83 = vld [vmem:[%s1 + $0x100] sm:$0xff]
  %v84 = vld [vmem:[%s1 + $0x108] sm:$0xff]
  %v85 = vld [vmem:[%s1 + $0x110] sm:$0xff]
  %v86 = vld [vmem:[%s1 + $0x118] sm:$0xff]
  %v87 = vld [vmem:[%s1 + $0x120] sm:$0xff]
  %v88 = vld [vmem:[%s1 + $0x128] sm:$0xff]
  %v89 = vld [vmem:[%s1 + $0x130] sm:$0xff]
  %v90 = vld [vmem:[%s1 + $0x138] sm:$0xff]
  %v91 = vld [vmem:[%s1 + $0x140] sm:$0xff]
  %v92 = vld [vmem:[%s1 + $0x148] sm:$0xff]
  %v93 = vld [vmem:[%s1 + $0x150] sm:$0xff]
  %v94 = vld [vmem:[%s1 + $0x158] sm:$0xff]
  %v95 = vld [vmem:[%s1 + $0x160] sm:$0xff]
  %v96 = vld [vmem:[%s1 + $0x168] sm:$0xff]
  %v97 = vld [vmem:[%s1 + $0x170] sm:$0xff]
  %v98 = vld [vmem:[%s1 + $0x178] sm:$0xff]
  %v99 = vld [vmem:[%s1 + $0x180] sm:$0xff]
  %v100 = vld [vmem:[%s1 + $0x188] sm:$0xff]
  %v101 = vld [vmem:[%s1 + $0x190] sm:$0xff]
  %v102 = vld [vmem:[%s1 + $0x198] sm:$0xff]
  %v103 = vld [vmem:[%s1 + $0x1a0] sm:$0xff]
  %v104 = vld [vmem:[%s1 + $0x1a8] sm:$0xff]
  %v105 = vld [vmem:[%s1 + $0x1b0] sm:$0xff]
  %v106 = vld [vmem:[%s1 + $0x1b8] sm:$0xff]
  %v107 = vld [vmem:[%s1 + $0x1c0] sm:$0xff]
  %v108 = vld [vmem:[%s1 + $0x1c8] sm:$0xff]
  %v109 = vld [vmem:[%s1 + $0x1d0] sm:$0xff]
  %v110 = vld [vmem:[%s1 + $0x1d8] sm:$0xff]
  %v111 = vld [vmem:[%s1 + $0x1e0] sm:$0xff]
  %v112 = vld [vmem:[%s1 + $0x1e8] sm:$0xff]
  %v113 = vld [vmem:[%s1 + $0x1f0] sm:$0xff]
  %v114 = vld [vmem:[%s1 + $0x1f8] sm:$0xff]
  %v115 = vld [vmem:[%s1 + $0x200] sm:$0xff]
  %v116 = vld [vmem:[%s1 + $0x208] sm:$0xff]
  %v117 = vld [vmem:[%s1 + $0x210] sm:$0xff]
  %v118 = vld [vmem:[%s1 + $0x218] sm:$0xff]
  %v119 = vld [vmem:[%s1 + $0x220] sm:$0xff]
  %v120 = vld [vmem:[%s1 + $0x228] sm:$0xff]
  %v121 = vld [vmem:[%s1 + $0x230] sm:$0xff]
  %v122 = vld [vmem:[%s1 + $0x238] sm:$0xff]
  %v123 = vld [vmem:[%s1 + $0x240] sm:$0xff]
  %v124 = vld [vmem:[%s1 + $0x248] sm:$0xff]
  %v125 = vld [vmem:[%s1 + $0x250] sm:$0xff]
  %v126 = vld [vmem:[%s1 + $0x258] sm:$0xff]
  %v127 = vld [vmem:[%s1 + $0x260] sm:$0xff]
  %v128 = vld [vmem:[%s1 + $0x268] sm:$0xff]
  %v129 = vld [vmem:[%s1 + $0x270] sm:$0xff]
  %v130 = vld [vmem:[%s1 + $0x278] sm:$0xff]
  %v131 = vld [vmem:[%s1 + $0x280] sm:$0xff]
  %v132 = vld [vmem:[%s1 + $0x288] sm:$0xff]
  %v133 = vld [vmem:[%s1 + $0x290] sm:$0xff]
  %v134 = vld [vmem:[%s1 + $0x298] sm:$0xff]
  %v135 = vld [vmem:[%s1 + $0x2a0] sm:$0xff]
  %v136 = vld [vmem:[%s1 + $0x2a8] sm:$0xff]
  %v137 = vld [vmem:[%s1 + $0x2b0] sm:$0xff]
  %v138 = vld [vmem:[%s1 + $0x2b8] sm:$0xff]
  %v139 = vld [vmem:[%s1 + $0x2c0] sm:$0xff]
  %v140 = vld [vmem:[%s1 + $0x2c8] sm:$0xff]
  %v141 = vld [vmem:[%s1 + $0x2d0] sm:$0xff]
  %v142 = vld [vmem:[%s1 + $0x2d8] sm:$0xff]
  %v143 = vld [vmem:[%s1 + $0x2e0] sm:$0xff]
  %v144 = vld [vmem:[%s1 + $0x2e8] sm:$0xff]
  %v145 = vld [vmem:[%s1 + $0x2f0] sm:$0xff]
  %v146 = vld [vmem:[%s1 + $0x2f8] sm:$0xff]
  %v147 = vld [vmem:[%s1 + $0x300] sm:$0xff]
  %v148 = vld [vmem:[%s1 + $0x308] sm:$0xff]
  %v149 = vld [vmem:[%s1 + $0x310] sm:$0xff]
  %v150 = vld [vmem:[%s1 + $0x318] sm:$0xff]
  %v151 = vld [vmem:[%s1 + $0x320] sm:$0xff]
  %v152 = vld [vmem:[%s1 + $0x328] sm:$0xff]
  %v153 = vld [vmem:[%s1 + $0x330] sm:$0xff]
  %v154 = vld [vmem:[%s1 + $0x338] sm:$0xff]
  %v155 = vld [vmem:[%s1 + $0x340] sm:$0xff]
  %v156 = vld [vmem:[%s1 + $0x348] sm:$0xff]
  %v157 = vld [vmem:[%s1 + $0x350] sm:$0xff]
  %v158 = vld [vmem:[%s1 + $0x358] sm:$0xff]
  %v159 = vld [vmem:[%s1 + $0x360] sm:$0xff]
  %v160 = vld [vmem:[%s1 + $0x368] sm:$0xff]
  %v161 = vld [vmem:[%s1 + $0x370] sm:$0xff]
  %v162 = vld [vmem:[%s1 + $0x378] sm:$0xff]
  %v163 = vld [vmem:[%s1 + $0x380] sm:$0xff]
  %v164 = vld [vmem:[%s1 + $0x388] sm:$0xff]
  %v165 = vld [vmem:[%s1 + $0x390] sm:$0xff]
  %v166 = vld [vmem:[%s1 + $0x398] sm:$0xff]
  %v167 = vld [vmem:[%s1 + $0x3a0] sm:$0xff]
  %v168 = vld [vmem:[%s1 + $0x3a8] sm:$0xff]
  %v169 = vld [vmem:[%s1 + $0x3b0] sm:$0xff]
  %v170 = vld [vmem:[%s1 + $0x3b8] sm:$0xff]
  %v171 = vld [vmem:[%s1 + $0x3c0] sm:$0xff]
  %v172 = vld [vmem:[%s1 + $0x3c8] sm:$0xff]
  %v173 = vld [vmem:[%s1 + $0x3d0] sm:$0xff]
  %v174 = vld [vmem:[%s1 + $0x3d8] sm:$0xff]
  %v175 = vld [vmem:[%s1 + $0x3e0] sm:$0xff]
  %v176 = vld [vmem:[%s1 + $0x3e8] sm:$0xff]
  %v177 = vld [vmem:[%s1 + $0x3f0] sm:$0xff]
  %v178 = vld [vmem:[%s1 + $0x3f8] sm:$0xff]
  %v179 = vld [vmem:[%s1 + $0x400] sm:$0xff]
  %v180 = vld [vmem:[%s1 + $0x408] sm:$0xff]
  %v181 = vld [vmem:[%s1 + $0x410] sm:$0xff]
  %v182 = vld [vmem:[%s1 + $0x418] sm:$0xff]
  %v183 = vld [vmem:[%s1 + $0x420] sm:$0xff]
  %v184 = vld [vmem:[%s1 + $0x428] sm:$0xff]
  %v185 = vld [vmem:[%s1 + $0x430] sm:$0xff]
  %v186 = vld [vmem:[%s1 + $0x438] sm:$0xff]
  %v187 = vld [vmem:[%s1 + $0x440] sm:$0xff]
  %v188 = vld [vmem:[%s1 + $0x448] sm:$0xff]
  %v189 = vld [vmem:[%s1 + $0x450] sm:$0xff]
  %v190 = vld [vmem:[%s1 + $0x458] sm:$0xff]
  %v191 = vld [vmem:[%s1 + $0x460] sm:$0xff]
  %v192 = vld [vmem:[%s1 + $0x468] sm:$0xff]
  %v193 = vld [vmem:[%s1 + $0x470] sm:$0xff]
  %v194 = vld [vmem:[%s1 + $0x478] sm:$0xff]
  %v195 = vld [vmem:[%s2] sm:$0x3]
  %v197 = vperm.slane %v195, 0
  %v198 = vperm.slane %v195, 1
  %v221 = vunpack.c.l.b16 %v31
  %v222 = vunpack.c.h.b16 %v31
  %v223 = vunpack.c.l.b16 %v32
  %v224 = vunpack.c.h.b16 %v32
  %v225 = vunpack.c.l.b16 %v33
  %v226 = vunpack.c.h.b16 %v33
  %v227 = vunpack.c.l.b16 %v34
  %v228 = vunpack.c.h.b16 %v34
  %v229 = vunpack.c.l.b16 %v35
  %v230 = vunpack.c.l.b16 %v36
  %v231 = vunpack.c.h.b16 %v36
  %v232 = vunpack.c.l.b16 %v37
  %v233 = vunpack.c.h.b16 %v37
  %v234 = vunpack.c.l.b16 %v38
  %v235 = vunpack.c.h.b16 %v38
  %v236 = vunpack.c.l.b16 %v39
  %v237 = vunpack.c.h.b16 %v39
  %v238 = vunpack.c.l.b16 %v40
  %v239 = vunpack.c.l.b16 %v41
  %v240 = vunpack.c.h.b16 %v41
  %v241 = vunpack.c.l.b16 %v42
  %v242 = vunpack.c.h.b16 %v42
  %v243 = vunpack.c.l.b16 %v43
  %v244 = vunpack.c.h.b16 %v43
  %v245 = vunpack.c.l.b16 %v44
  %v246 = vunpack.c.h.b16 %v44
  %v247 = vunpack.c.l.b16 %v45
  %v248 = vunpack.c.l.b16 %v46
  %v249 = vunpack.c.h.b16 %v46
  %v250 = vunpack.c.l.b16 %v47
  %v251 = vunpack.c.h.b16 %v47
  %v252 = vunpack.c.l.b16 %v48
  %v253 = vunpack.c.h.b16 %v48
  %v254 = vunpack.c.l.b16 %v49
  %v255 = vunpack.c.h.b16 %v49
  %v256 = vunpack.c.l.b16 %v50
  %v257 = vpack.c.b16 %v230, %v221
  %v258 = vpack.c.b16 %v231, %v222
  %v259 = vpack.c.b16 %v232, %v223
  %v260 = vpack.c.b16 %v233, %v224
  %v261 = vpack.c.b16 %v234, %v225
  %v262 = vpack.c.b16 %v235, %v226
  %v263 = vpack.c.b16 %v236, %v227
  %v264 = vpack.c.b16 %v237, %v228
  %v265 = vpack.c.b16 %v238, %v229
  %v266 = vpack.c.b16 %v248, %v239
  %v267 = vpack.c.b16 %v249, %v240
  %v268 = vpack.c.b16 %v250, %v241
  %v269 = vpack.c.b16 %v251, %v242
  %v270 = vpack.c.b16 %v252, %v243
  %v271 = vpack.c.b16 %v253, %v244
  %v272 = vpack.c.b16 %v254, %v245
  %v273 = vpack.c.b16 %v255, %v246
  %v274 = vpack.c.b16 %v256, %v247
  %v437 = vunpack.c.l.b16 %v51
  %v438 = vunpack.c.h.b16 %v51
  %v439 = vunpack.c.l.b16 %v52
  %v440 = vunpack.c.h.b16 %v52
  %v441 = vunpack.c.l.b16 %v53
  %v442 = vunpack.c.h.b16 %v53
  %v443 = vunpack.c.l.b16 %v54
  %v444 = vunpack.c.h.b16 %v54
  %v445 = vunpack.c.l.b16 %v55
  %v446 = vunpack.c.h.b16 %v55
  %v447 = vunpack.c.l.b16 %v56
  %v448 = vunpack.c.h.b16 %v56
  %v449 = vunpack.c.l.b16 %v57
  %v450 = vunpack.c.h.b16 %v57
  %v451 = vunpack.c.l.b16 %v58
  %v452 = vunpack.c.h.b16 %v58
  %v453 = vunpack.c.l.b16 %v59
  %v454 = vunpack.c.h.b16 %v59
  %v455 = vunpack.c.l.b16 %v60
  %v456 = vunpack.c.h.b16 %v60
  %v457 = vunpack.c.l.b16 %v61
  %v458 = vunpack.c.h.b16 %v61
  %v459 = vunpack.c.l.b16 %v62
  %v460 = vunpack.c.h.b16 %v62
  %v461 = vunpack.c.l.b16 %v63
  %v462 = vunpack.c.h.b16 %v63
  %v463 = vunpack.c.l.b16 %v64
  %v464 = vunpack.c.h.b16 %v64
  %v465 = vunpack.c.l.b16 %v65
  %v466 = vunpack.c.h.b16 %v65
  %v467 = vunpack.c.l.b16 %v66
  %v468 = vunpack.c.h.b16 %v66
  %v469 = vunpack.c.l.b16 %v67
  %v470 = vunpack.c.h.b16 %v67
  %v471 = vunpack.c.l.b16 %v68
  %v472 = vunpack.c.h.b16 %v68
  %v473 = vunpack.c.l.b16 %v69
  %v474 = vunpack.c.h.b16 %v69
  %v475 = vunpack.c.l.b16 %v70
  %v476 = vunpack.c.h.b16 %v70
  %v477 = vunpack.c.l.b16 %v71
  %v478 = vunpack.c.h.b16 %v71
  %v479 = vunpack.c.l.b16 %v72
  %v480 = vunpack.c.h.b16 %v72
  %v481 = vunpack.c.l.b16 %v73
  %v482 = vunpack.c.h.b16 %v73
  %v483 = vunpack.c.l.b16 %v74
  %v484 = vunpack.c.h.b16 %v74
  %v485 = vunpack.c.l.b16 %v75
  %v486 = vunpack.c.h.b16 %v75
  %v487 = vunpack.c.l.b16 %v76
  %v488 = vunpack.c.h.b16 %v76
  %v489 = vunpack.c.l.b16 %v77
  %v490 = vunpack.c.h.b16 %v77
  %v491 = vunpack.c.l.b16 %v78
  %v492 = vunpack.c.h.b16 %v78
  %v493 = vunpack.c.l.b16 %v79
  %v494 = vunpack.c.h.b16 %v79
  %v495 = vunpack.c.l.b16 %v80
  %v496 = vunpack.c.h.b16 %v80
  %v497 = vunpack.c.l.b16 %v81
  %v498 = vunpack.c.h.b16 %v81
  %v499 = vunpack.c.l.b16 %v82
  %v500 = vunpack.c.h.b16 %v82
  %v501 = vunpack.c.l.b16 %v83
  %v502 = vunpack.c.h.b16 %v83
  %v503 = vunpack.c.l.b16 %v84
  %v504 = vunpack.c.h.b16 %v84
  %v505 = vunpack.c.l.b16 %v85
  %v506 = vunpack.c.h.b16 %v85
  %v507 = vunpack.c.l.b16 %v86
  %v508 = vunpack.c.h.b16 %v86
  %v509 = vunpack.c.l.b16 %v87
  %v510 = vunpack.c.h.b16 %v87
  %v511 = vunpack.c.l.b16 %v88
  %v512 = vunpack.c.h.b16 %v88
  %v513 = vunpack.c.l.b16 %v89
  %v514 = vunpack.c.h.b16 %v89
  %v515 = vunpack.c.l.b16 %v90
  %v516 = vunpack.c.h.b16 %v90
  %v517 = vunpack.c.l.b16 %v91
  %v518 = vunpack.c.h.b16 %v91
  %v519 = vunpack.c.l.b16 %v92
  %v520 = vunpack.c.h.b16 %v92
  %v521 = vunpack.c.l.b16 %v93
  %v522 = vunpack.c.h.b16 %v93
  %v523 = vunpack.c.l.b16 %v94
  %v524 = vunpack.c.h.b16 %v94
  %v525 = vunpack.c.l.b16 %v95
  %v526 = vunpack.c.h.b16 %v95
  %v527 = vunpack.c.l.b16 %v96
  %v528 = vunpack.c.h.b16 %v96
  %v529 = vunpack.c.l.b16 %v97
  %v530 = vunpack.c.h.b16 %v97
  %v531 = vunpack.c.l.b16 %v98
  %v532 = vunpack.c.h.b16 %v98
  %v533 = vunpack.c.l.b16 %v99
  %v534 = vunpack.c.h.b16 %v99
  %v535 = vunpack.c.l.b16 %v100
  %v536 = vunpack.c.h.b16 %v100
  %v537 = vunpack.c.l.b16 %v101
  %v538 = vunpack.c.h.b16 %v101
  %v539 = vunpack.c.l.b16 %v102
  %v540 = vunpack.c.h.b16 %v102
  %v541 = vunpack.c.l.b16 %v103
  %v542 = vunpack.c.h.b16 %v103
  %v543 = vunpack.c.l.b16 %v104
  %v544 = vunpack.c.h.b16 %v104
  %v545 = vunpack.c.l.b16 %v105
  %v546 = vunpack.c.h.b16 %v105
  %v547 = vunpack.c.l.b16 %v106
  %v548 = vunpack.c.h.b16 %v106
  %v549 = vunpack.c.l.b16 %v107
  %v550 = vunpack.c.h.b16 %v107
  %v551 = vunpack.c.l.b16 %v108
  %v552 = vunpack.c.h.b16 %v108
  %v553 = vunpack.c.l.b16 %v109
  %v554 = vunpack.c.h.b16 %v109
  %v555 = vunpack.c.l.b16 %v110
  %v556 = vunpack.c.h.b16 %v110
  %v557 = vunpack.c.l.b16 %v111
  %v558 = vunpack.c.h.b16 %v111
  %v559 = vunpack.c.l.b16 %v112
  %v560 = vunpack.c.h.b16 %v112
  %v561 = vunpack.c.l.b16 %v113
  %v562 = vunpack.c.h.b16 %v113
  %v563 = vunpack.c.l.b16 %v114
  %v564 = vunpack.c.h.b16 %v114
  %v565 = vunpack.c.l.b16 %v115
  %v566 = vunpack.c.h.b16 %v115
  %v567 = vunpack.c.l.b16 %v116
  %v568 = vunpack.c.h.b16 %v116
  %v569 = vunpack.c.l.b16 %v117
  %v570 = vunpack.c.h.b16 %v117
  %v571 = vunpack.c.l.b16 %v118
  %v572 = vunpack.c.h.b16 %v118
  %v573 = vunpack.c.l.b16 %v119
  %v574 = vunpack.c.h.b16 %v119
  %v575 = vunpack.c.l.b16 %v120
  %v576 = vunpack.c.h.b16 %v120
  %v577 = vunpack.c.l.b16 %v121
  %v578 = vunpack.c.h.b16 %v121
  %v579 = vunpack.c.l.b16 %v122
  %v580 = vunpack.c.h.b16 %v122
  %v581 = vunpack.c.l.b16 %v123
  %v582 = vunpack.c.h.b16 %v123
  %v583 = vunpack.c.l.b16 %v124
  %v584 = vunpack.c.h.b16 %v124
  %v585 = vunpack.c.l.b16 %v125
  %v586 = vunpack.c.h.b16 %v125
  %v587 = vunpack.c.l.b16 %v126
  %v588 = vunpack.c.h.b16 %v126
  %v589 = vunpack.c.l.b16 %v127
  %v590 = vunpack.c.h.b16 %v127
  %v591 = vunpack.c.l.b16 %v128
  %v592 = vunpack.c.h.b16 %v128
  %v593 = vunpack.c.l.b16 %v129
  %v594 = vunpack.c.h.b16 %v129
  %v595 = vunpack.c.l.b16 %v130
  %v596 = vunpack.c.h.b16 %v130
  %v597 = vunpack.c.l.b16 %v131
  %v598 = vunpack.c.h.b16 %v131
  %v599 = vunpack.c.l.b16 %v132
  %v600 = vunpack.c.h.b16 %v132
  %v601 = vunpack.c.l.b16 %v133
  %v602 = vunpack.c.h.b16 %v133
  %v603 = vunpack.c.l.b16 %v134
  %v604 = vunpack.c.h.b16 %v134
  %v605 = vunpack.c.l.b16 %v135
  %v606 = vunpack.c.h.b16 %v135
  %v607 = vunpack.c.l.b16 %v136
  %v608 = vunpack.c.h.b16 %v136
  %v609 = vunpack.c.l.b16 %v137
  %v610 = vunpack.c.h.b16 %v137
  %v611 = vunpack.c.l.b16 %v138
  %v612 = vunpack.c.h.b16 %v138
  %v613 = vunpack.c.l.b16 %v139
  %v614 = vunpack.c.h.b16 %v139
  %v615 = vunpack.c.l.b16 %v140
  %v616 = vunpack.c.h.b16 %v140
  %v617 = vunpack.c.l.b16 %v141
  %v618 = vunpack.c.h.b16 %v141
  %v619 = vunpack.c.l.b16 %v142
  %v620 = vunpack.c.h.b16 %v142
  %v621 = vunpack.c.l.b16 %v143
  %v622 = vunpack.c.h.b16 %v143
  %v623 = vunpack.c.l.b16 %v144
  %v624 = vunpack.c.h.b16 %v144
  %v625 = vunpack.c.l.b16 %v145
  %v626 = vunpack.c.h.b16 %v145
  %v627 = vunpack.c.l.b16 %v146
  %v628 = vunpack.c.h.b16 %v146
  %v629 = vunpack.c.l.b16 %v147
  %v630 = vunpack.c.h.b16 %v147
  %v631 = vunpack.c.l.b16 %v148
  %v632 = vunpack.c.h.b16 %v148
  %v633 = vunpack.c.l.b16 %v149
  %v634 = vunpack.c.h.b16 %v149
  %v635 = vunpack.c.l.b16 %v150
  %v636 = vunpack.c.h.b16 %v150
  %v637 = vunpack.c.l.b16 %v151
  %v638 = vunpack.c.h.b16 %v151
  %v639 = vunpack.c.l.b16 %v152
  %v640 = vunpack.c.h.b16 %v152
  %v641 = vunpack.c.l.b16 %v153
  %v642 = vunpack.c.h.b16 %v153
  %v643 = vunpack.c.l.b16 %v154
  %v644 = vunpack.c.h.b16 %v154
  %v645 = vunpack.c.l.b16 %v155
  %v646 = vunpack.c.h.b16 %v155
  %v647 = vunpack.c.l.b16 %v156
  %v648 = vunpack.c.h.b16 %v156
  %v649 = vunpack.c.l.b16 %v157
  %v650 = vunpack.c.h.b16 %v157
  %v651 = vunpack.c.l.b16 %v158
  %v652 = vunpack.c.h.b16 %v158
  %v653 = vunpack.c.l.b16 %v159
  %v654 = vunpack.c.h.b16 %v159
  %v655 = vunpack.c.l.b16 %v160
  %v656 = vunpack.c.h.b16 %v160
  %v657 = vunpack.c.l.b16 %v161
  %v658 = vunpack.c.h.b16 %v161
  %v659 = vunpack.c.l.b16 %v162
  %v660 = vunpack.c.h.b16 %v162
  %v661 = vunpack.c.l.b16 %v163
  %v662 = vunpack.c.h.b16 %v163
  %v663 = vunpack.c.l.b16 %v164
  %v664 = vunpack.c.h.b16 %v164
  %v665 = vunpack.c.l.b16 %v165
  %v666 = vunpack.c.h.b16 %v165
  %v667 = vunpack.c.l.b16 %v166
  %v668 = vunpack.c.h.b16 %v166
  %v669 = vunpack.c.l.b16 %v167
  %v670 = vunpack.c.h.b16 %v167
  %v671 = vunpack.c.l.b16 %v168
  %v672 = vunpack.c.h.b16 %v168
  %v673 = vunpack.c.l.b16 %v169
  %v674 = vunpack.c.h.b16 %v169
  %v675 = vunpack.c.l.b16 %v170
  %v676 = vunpack.c.h.b16 %v170
  %v677 = vunpack.c.l.b16 %v171
  %v678 = vunpack.c.h.b16 %v171
  %v679 = vunpack.c.l.b16 %v172
  %v680 = vunpack.c.h.b16 %v172
  %v681 = vunpack.c.l.b16 %v173
  %v682 = vunpack.c.h.b16 %v173
  %v683 = vunpack.c.l.b16 %v174
  %v684 = vunpack.c.h.b16 %v174
  %v685 = vunpack.c.l.b16 %v175
  %v686 = vunpack.c.h.b16 %v175
  %v687 = vunpack.c.l.b16 %v176
  %v688 = vunpack.c.h.b16 %v176
  %v689 = vunpack.c.l.b16 %v177
  %v690 = vunpack.c.h.b16 %v177
  %v691 = vunpack.c.l.b16 %v178
  %v692 = vunpack.c.h.b16 %v178
  %v693 = vunpack.c.l.b16 %v179
  %v694 = vunpack.c.h.b16 %v179
  %v695 = vunpack.c.l.b16 %v180
  %v696 = vunpack.c.h.b16 %v180
  %v697 = vunpack.c.l.b16 %v181
  %v698 = vunpack.c.h.b16 %v181
  %v699 = vunpack.c.l.b16 %v182
  %v700 = vunpack.c.h.b16 %v182
  %v701 = vunpack.c.l.b16 %v183
  %v702 = vunpack.c.h.b16 %v183
  %v703 = vunpack.c.l.b16 %v184
  %v704 = vunpack.c.h.b16 %v184
  %v705 = vunpack.c.l.b16 %v185
  %v706 = vunpack.c.h.b16 %v185
  %v707 = vunpack.c.l.b16 %v186
  %v708 = vunpack.c.h.b16 %v186
  %v709 = vunpack.c.l.b16 %v187
  %v710 = vunpack.c.h.b16 %v187
  %v711 = vunpack.c.l.b16 %v188
  %v712 = vunpack.c.h.b16 %v188
  %v713 = vunpack.c.l.b16 %v189
  %v714 = vunpack.c.h.b16 %v189
  %v715 = vunpack.c.l.b16 %v190
  %v716 = vunpack.c.h.b16 %v190
  %v717 = vunpack.c.l.b16 %v191
  %v718 = vunpack.c.h.b16 %v191
  %v719 = vunpack.c.l.b16 %v192
  %v720 = vunpack.c.h.b16 %v192
  %v721 = vunpack.c.l.b16 %v193
  %v722 = vunpack.c.h.b16 %v193
  %v723 = vunpack.c.l.b16 %v194
  %v724 = vunpack.c.h.b16 %v194
  %v725 = vpack.c.b16 %v439, %v437
  %v726 = vpack.c.b16 %v440, %v438
  %v727 = vpack.c.b16 %v443, %v441
  %v728 = vpack.c.b16 %v444, %v442
  %v729 = vpack.c.b16 %v447, %v445
  %v730 = vpack.c.b16 %v448, %v446
  %v731 = vpack.c.b16 %v451, %v449
  %v732 = vpack.c.b16 %v452, %v450
  %v733 = vpack.c.b16 %v455, %v453
  %v734 = vpack.c.b16 %v456, %v454
  %v735 = vpack.c.b16 %v459, %v457
  %v736 = vpack.c.b16 %v460, %v458
  %v737 = vpack.c.b16 %v463, %v461
  %v738 = vpack.c.b16 %v464, %v462
  %v739 = vpack.c.b16 %v467, %v465
  %v740 = vpack.c.b16 %v468, %v466
  %v741 = vpack.c.b16 %v471, %v469
  %v742 = vpack.c.b16 %v472, %v470
  %v743 = vpack.c.b16 %v475, %v473
  %v744 = vpack.c.b16 %v476, %v474
  %v745 = vpack.c.b16 %v479, %v477
  %v746 = vpack.c.b16 %v480, %v478
  %v747 = vpack.c.b16 %v483, %v481
  %v748 = vpack.c.b16 %v484, %v482
  %v749 = vpack.c.b16 %v487, %v485
  %v750 = vpack.c.b16 %v488, %v486
  %v751 = vpack.c.b16 %v491, %v489
  %v752 = vpack.c.b16 %v492, %v490
  %v753 = vpack.c.b16 %v495, %v493
  %v754 = vpack.c.b16 %v496, %v494
  %v755 = vpack.c.b16 %v499, %v497
  %v756 = vpack.c.b16 %v500, %v498
  %v757 = vpack.c.b16 %v503, %v501
  %v758 = vpack.c.b16 %v504, %v502
  %v759 = vpack.c.b16 %v507, %v505
  %v760 = vpack.c.b16 %v508, %v506
  %v761 = vpack.c.b16 %v511, %v509
  %v762 = vpack.c.b16 %v512, %v510
  %v763 = vpack.c.b16 %v515, %v513
  %v764 = vpack.c.b16 %v516, %v514
  %v765 = vpack.c.b16 %v519, %v517
  %v766 = vpack.c.b16 %v520, %v518
  %v767 = vpack.c.b16 %v523, %v521
  %v768 = vpack.c.b16 %v524, %v522
  %v769 = vpack.c.b16 %v527, %v525
  %v770 = vpack.c.b16 %v528, %v526
  %v771 = vpack.c.b16 %v531, %v529
  %v772 = vpack.c.b16 %v532, %v530
  %v773 = vpack.c.b16 %v535, %v533
  %v774 = vpack.c.b16 %v536, %v534
  %v775 = vpack.c.b16 %v539, %v537
  %v776 = vpack.c.b16 %v540, %v538
  %v777 = vpack.c.b16 %v543, %v541
  %v778 = vpack.c.b16 %v544, %v542
  %v779 = vpack.c.b16 %v547, %v545
  %v780 = vpack.c.b16 %v548, %v546
  %v781 = vpack.c.b16 %v551, %v549
  %v782 = vpack.c.b16 %v552, %v550
  %v783 = vpack.c.b16 %v555, %v553
  %v784 = vpack.c.b16 %v556, %v554
  %v785 = vpack.c.b16 %v559, %v557
  %v786 = vpack.c.b16 %v560, %v558
  %v787 = vpack.c.b16 %v563, %v561
  %v788 = vpack.c.b16 %v564, %v562
  %v789 = vpack.c.b16 %v567, %v565
  %v790 = vpack.c.b16 %v568, %v566
  %v791 = vpack.c.b16 %v571, %v569
  %v792 = vpack.c.b16 %v572, %v570
  %v793 = vpack.c.b16 %v575, %v573
  %v794 = vpack.c.b16 %v576, %v574
  %v795 = vpack.c.b16 %v579, %v577
  %v796 = vpack.c.b16 %v580, %v578
  %v797 = vpack.c.b16 %v583, %v581
  %v798 = vpack.c.b16 %v584, %v582
  %v799 = vpack.c.b16 %v587, %v585
  %v800 = vpack.c.b16 %v588, %v586
  %v801 = vpack.c.b16 %v591, %v589
  %v802 = vpack.c.b16 %v592, %v590
  %v803 = vpack.c.b16 %v595, %v593
  %v804 = vpack.c.b16 %v596, %v594
  %v805 = vpack.c.b16 %v599, %v597
  %v806 = vpack.c.b16 %v600, %v598
  %v807 = vpack.c.b16 %v603, %v601
  %v808 = vpack.c.b16 %v604, %v602
  %v809 = vpack.c.b16 %v607, %v605
  %v810 = vpack.c.b16 %v608, %v606
  %v811 = vpack.c.b16 %v611, %v609
  %v812 = vpack.c.b16 %v612, %v610
  %v813 = vpack.c.b16 %v615, %v613
  %v814 = vpack.c.b16 %v616, %v614
  %v815 = vpack.c.b16 %v619, %v617
  %v816 = vpack.c.b16 %v620, %v618
  %v817 = vpack.c.b16 %v623, %v621
  %v818 = vpack.c.b16 %v624, %v622
  %v819 = vpack.c.b16 %v627, %v625
  %v820 = vpack.c.b16 %v628, %v626
  %v821 = vpack.c.b16 %v631, %v629
  %v822 = vpack.c.b16 %v632, %v630
  %v823 = vpack.c.b16 %v635, %v633
  %v824 = vpack.c.b16 %v636, %v634
  %v825 = vpack.c.b16 %v639, %v637
  %v826 = vpack.c.b16 %v640, %v638
  %v827 = vpack.c.b16 %v643, %v641
  %v828 = vpack.c.b16 %v644, %v642
  %v829 = vpack.c.b16 %v647, %v645
  %v830 = vpack.c.b16 %v648, %v646
  %v831 = vpack.c.b16 %v651, %v649
  %v832 = vpack.c.b16 %v652, %v650
  %v833 = vpack.c.b16 %v655, %v653
  %v834 = vpack.c.b16 %v656, %v654
  %v835 = vpack.c.b16 %v659, %v657
  %v836 = vpack.c.b16 %v660, %v658
  %v837 = vpack.c.b16 %v663, %v661
  %v838 = vpack.c.b16 %v664, %v662
  %v839 = vpack.c.b16 %v667, %v665
  %v840 = vpack.c.b16 %v668, %v666
  %v841 = vpack.c.b16 %v671, %v669
  %v842 = vpack.c.b16 %v672, %v670
  %v843 = vpack.c.b16 %v675, %v673
  %v844 = vpack.c.b16 %v676, %v674
  %v845 = vpack.c.b16 %v679, %v677
  %v846 = vpack.c.b16 %v680, %v678
  %v847 = vpack.c.b16 %v683, %v681
  %v848 = vpack.c.b16 %v684, %v682
  %v849 = vpack.c.b16 %v687, %v685
  %v850 = vpack.c.b16 %v688, %v686
  %v851 = vpack.c.b16 %v691, %v689
  %v852 = vpack.c.b16 %v692, %v690
  %v853 = vpack.c.b16 %v695, %v693
  %v854 = vpack.c.b16 %v696, %v694
  %v855 = vpack.c.b16 %v699, %v697
  %v856 = vpack.c.b16 %v700, %v698
  %v857 = vpack.c.b16 %v703, %v701
  %v858 = vpack.c.b16 %v704, %v702
  %v859 = vpack.c.b16 %v707, %v705
  %v860 = vpack.c.b16 %v708, %v706
  %v861 = vpack.c.b16 %v711, %v709
  %v862 = vpack.c.b16 %v712, %v710
  %v863 = vpack.c.b16 %v715, %v713
  %v864 = vpack.c.b16 %v716, %v714
  %v865 = vpack.c.b16 %v719, %v717
  %v866 = vpack.c.b16 %v720, %v718
  %v867 = vpack.c.b16 %v723, %v721
  %v868 = vpack.c.b16 %v724, %v722
  %1013 = vmatpush.bf16.msra.mxu0 %v739
  %1014 = vmatpush.bf16.msra.mxu0 %v737
  %1015 = vmatpush.bf16.msra.mxu0 %v735
  %1016 = vmatpush.bf16.msra.mxu0 %v733
  %1017 = vmatpush.bf16.msra.mxu0 %v731
  %1018 = vmatpush.bf16.msra.mxu0 %v729
  %1019 = vmatpush.bf16.msra.mxu0 %v727
  %1020 = vmatpush.bf16.msra.mxu0 %v725
  %1021 = vmatmul.bf16.gmra.mxu0 %v257
  %v1022 = vpop.f32.mrf.mxu0
  %v1023 = vadd.f32 %v197, %v1022
  %v1024 = vpop.f32.mrf.mxu0
  %v1025 = vadd.f32 %v197, %v1024
  %1026 = vmatmul.bf16.gmra.mxu0 %v266
  %v1027 = vpop.f32.mrf.mxu0
  %v1028 = vadd.f32 %v197, %v1027
  %v1029 = vpop.f32.mrf.mxu0
  %v1030 = vadd.f32 %v197, %v1029
  %1031 = vdwg.mxu0
  %1032 = vmatpush.bf16.msra.mxu0 %v755
  %1033 = vmatpush.bf16.msra.mxu0 %v753
  %1034 = vmatpush.bf16.msra.mxu0 %v751
  %1035 = vmatpush.bf16.msra.mxu0 %v749
  %1036 = vmatpush.bf16.msra.mxu0 %v747
  %1037 = vmatpush.bf16.msra.mxu0 %v745
  %1038 = vmatpush.bf16.msra.mxu0 %v743
  %1039 = vmatpush.bf16.msra.mxu0 %v741
  %1040 = vmatmul.bf16.gmra.mxu0 %v258
  %v1041 = vpop.f32.mrf.mxu0
  %v1042 = vadd.f32 %v1023, %v1041
  %v1043 = vpop.f32.mrf.mxu0
  %v1044 = vadd.f32 %v1025, %v1043
  %1045 = vmatmul.bf16.gmra.mxu0 %v267
  %v1046 = vpop.f32.mrf.mxu0
  %v1047 = vadd.f32 %v1028, %v1046
  %v1048 = vpop.f32.mrf.mxu0
  %v1049 = vadd.f32 %v1030, %v1048
  %1050 = vdwg.mxu0
  %1051 = vmatpush.bf16.msra.mxu0 %v771
  %1052 = vmatpush.bf16.msra.mxu0 %v769
  %1053 = vmatpush.bf16.msra.mxu0 %v767
  %1054 = vmatpush.bf16.msra.mxu0 %v765
  %1055 = vmatpush.bf16.msra.mxu0 %v763
  %1056 = vmatpush.bf16.msra.mxu0 %v761
  %1057 = vmatpush.bf16.msra.mxu0 %v759
  %1058 = vmatpush.bf16.msra.mxu0 %v757
  %1059 = vmatmul.bf16.gmra.mxu0 %v259
  %v1060 = vpop.f32.mrf.mxu0
  %v1061 = vadd.f32 %v1042, %v1060
  %v1062 = vpop.f32.mrf.mxu0
  %v1063 = vadd.f32 %v1044, %v1062
  %1064 = vmatmul.bf16.gmra.mxu0 %v268
  %v1065 = vpop.f32.mrf.mxu0
  %v1066 = vadd.f32 %v1047, %v1065
  %v1067 = vpop.f32.mrf.mxu0
  %v1068 = vadd.f32 %v1049, %v1067
  %1069 = vdwg.mxu0
  %1070 = vmatpush.bf16.msra.mxu0 %v787
  %1071 = vmatpush.bf16.msra.mxu0 %v785
  %1072 = vmatpush.bf16.msra.mxu0 %v783
  %1073 = vmatpush.bf16.msra.mxu0 %v781
  %1074 = vmatpush.bf16.msra.mxu0 %v779
  %1075 = vmatpush.bf16.msra.mxu0 %v777
  %1076 = vmatpush.bf16.msra.mxu0 %v775
  %1077 = vmatpush.bf16.msra.mxu0 %v773
  %1078 = vmatmul.bf16.gmra.mxu0 %v260
  %v1079 = vpop.f32.mrf.mxu0
  %v1080 = vadd.f32 %v1061, %v1079
  %v1081 = vpop.f32.mrf.mxu0
  %v1082 = vadd.f32 %v1063, %v1081
  %1083 = vmatmul.bf16.gmra.mxu0 %v269
  %v1084 = vpop.f32.mrf.mxu0
  %v1085 = vadd.f32 %v1066, %v1084
  %v1086 = vpop.f32.mrf.mxu0
  %v1087 = vadd.f32 %v1068, %v1086
  %1088 = vdwg.mxu0
  %1089 = vmatpush.bf16.msra.mxu0 %v803
  %1090 = vmatpush.bf16.msra.mxu0 %v801
  %1091 = vmatpush.bf16.msra.mxu0 %v799
  %1092 = vmatpush.bf16.msra.mxu0 %v797
  %1093 = vmatpush.bf16.msra.mxu0 %v795
  %1094 = vmatpush.bf16.msra.mxu0 %v793
  %1095 = vmatpush.bf16.msra.mxu0 %v791
  %1096 = vmatpush.bf16.msra.mxu0 %v789
  %1097 = vmatmul.bf16.gmra.mxu0 %v261
  %v1098 = vpop.f32.mrf.mxu0
  %v1099 = vadd.f32 %v1080, %v1098
  %v1100 = vpop.f32.mrf.mxu0
  %v1101 = vadd.f32 %v1082, %v1100
  %1102 = vmatmul.bf16.gmra.mxu0 %v270
  %v1103 = vpop.f32.mrf.mxu0
  %v1104 = vadd.f32 %v1085, %v1103
  %v1105 = vpop.f32.mrf.mxu0
  %v1106 = vadd.f32 %v1087, %v1105
  %1107 = vdwg.mxu0
  %1108 = vmatpush.bf16.msra.mxu0 %v819
  %1109 = vmatpush.bf16.msra.mxu0 %v817
  %1110 = vmatpush.bf16.msra.mxu0 %v815
  %1111 = vmatpush.bf16.msra.mxu0 %v813
  %1112 = vmatpush.bf16.msra.mxu0 %v811
  %1113 = vmatpush.bf16.msra.mxu0 %v809
  %1114 = vmatpush.bf16.msra.mxu0 %v807
  %1115 = vmatpush.bf16.msra.mxu0 %v805
  %1116 = vmatmul.bf16.gmra.mxu0 %v262
  %v1117 = vpop.f32.mrf.mxu0
  %v1118 = vadd.f32 %v1099, %v1117
  %v1119 = vpop.f32.mrf.mxu0
  %v1120 = vadd.f32 %v1101, %v1119
  %1121 = vmatmul.bf16.gmra.mxu0 %v271
  %v1122 = vpop.f32.mrf.mxu0
  %v1123 = vadd.f32 %v1104, %v1122
  %v1124 = vpop.f32.mrf.mxu0
  %v1125 = vadd.f32 %v1106, %v1124
  %1126 = vdwg.mxu0
  %1127 = vmatpush.bf16.msra.mxu0 %v835
  %1128 = vmatpush.bf16.msra.mxu0 %v833
  %1129 = vmatpush.bf16.msra.mxu0 %v831
  %1130 = vmatpush.bf16.msra.mxu0 %v829
  %1131 = vmatpush.bf16.msra.mxu0 %v827
  %1132 = vmatpush.bf16.msra.mxu0 %v825
  %1133 = vmatpush.bf16.msra.mxu0 %v823
  %1134 = vmatpush.bf16.msra.mxu0 %v821
  %1135 = vmatmul.bf16.gmra.mxu0 %v263
  %v1136 = vpop.f32.mrf.mxu0
  %v1137 = vadd.f32 %v1118, %v1136
  %v1138 = vpop.f32.mrf.mxu0
  %v1139 = vadd.f32 %v1120, %v1138
  %1140 = vmatmul.bf16.gmra.mxu0 %v272
  %v1141 = vpop.f32.mrf.mxu0
  %v1142 = vadd.f32 %v1123, %v1141
  %v1143 = vpop.f32.mrf.mxu0
  %v1144 = vadd.f32 %v1125, %v1143
  %1145 = vdwg.mxu0
  %1146 = vmatpush.bf16.msra.mxu0 %v851
  %1147 = vmatpush.bf16.msra.mxu0 %v849
  %1148 = vmatpush.bf16.msra.mxu0 %v847
  %1149 = vmatpush.bf16.msra.mxu0 %v845
  %1150 = vmatpush.bf16.msra.mxu0 %v843
  %1151 = vmatpush.bf16.msra.mxu0 %v841
  %1152 = vmatpush.bf16.msra.mxu0 %v839
  %1153 = vmatpush.bf16.msra.mxu0 %v837
  %1154 = vmatmul.bf16.gmra.mxu0 %v264
  %v1155 = vpop.f32.mrf.mxu0
  %v1156 = vadd.f32 %v1137, %v1155
  %v1157 = vpop.f32.mrf.mxu0
  %v1158 = vadd.f32 %v1139, %v1157
  %1159 = vmatmul.bf16.gmra.mxu0 %v273
  %v1160 = vpop.f32.mrf.mxu0
  %v1161 = vadd.f32 %v1142, %v1160
  %v1162 = vpop.f32.mrf.mxu0
  %v1163 = vadd.f32 %v1144, %v1162
  %1164 = vdwg.mxu0
  %1165 = vmatpush.bf16.msra.mxu0 %v867
  %1166 = vmatpush.bf16.msra.mxu0 %v865
  %1167 = vmatpush.bf16.msra.mxu0 %v863
  %1168 = vmatpush.bf16.msra.mxu0 %v861
  %1169 = vmatpush.bf16.msra.mxu0 %v859
  %1170 = vmatpush.bf16.msra.mxu0 %v857
  %1171 = vmatpush.bf16.msra.mxu0 %v855
  %1172 = vmatpush.bf16.msra.mxu0 %v853
  %1173 = vmatmul.bf16.gmra.mxu0 %v265
  %v1174 = vpop.f32.mrf.mxu0
  %v1175 = vadd.f32 %v1156, %v1174
  %v1176 = vpop.f32.mrf.mxu0
  %v1177 = vadd.f32 %v1158, %v1176
  %1178 = vmatmul.bf16.gmra.mxu0 %v274
  %v1179 = vpop.f32.mrf.mxu0
  %v1180 = vadd.f32 %v1161, %v1179
  %v1181 = vpop.f32.mrf.mxu0
  %v1182 = vadd.f32 %v1163, %v1181
  %1183 = vdwg.mxu0
  %1184 = vmatpush.bf16.msra.mxu0 %v740
  %1185 = vmatpush.bf16.msra.mxu0 %v738
  %1186 = vmatpush.bf16.msra.mxu0 %v736
  %1187 = vmatpush.bf16.msra.mxu0 %v734
  %1188 = vmatpush.bf16.msra.mxu0 %v732
  %1189 = vmatpush.bf16.msra.mxu0 %v730
  %1190 = vmatpush.bf16.msra.mxu0 %v728
  %1191 = vmatpush.bf16.msra.mxu0 %v726
  %1192 = vmatmul.bf16.gmra.mxu0 %v257
  %v1193 = vpop.f32.mrf.mxu0
  %v1194 = vadd.f32 %v198, %v1193
  %v1195 = vpop.f32.mrf.mxu0
  %v1196 = vadd.f32 %v198, %v1195
  %1197 = vmatmul.bf16.gmra.mxu0 %v266
  %v1198 = vpop.f32.mrf.mxu0
  %v1199 = vadd.f32 %v198, %v1198
  %v1200 = vpop.f32.mrf.mxu0
  %v1201 = vadd.f32 %v198, %v1200
  %1202 = vdwg.mxu0
  %1203 = vmatpush.bf16.msra.mxu0 %v756
  %1204 = vmatpush.bf16.msra.mxu0 %v754
  %1205 = vmatpush.bf16.msra.mxu0 %v752
  %1206 = vmatpush.bf16.msra.mxu0 %v750
  %1207 = vmatpush.bf16.msra.mxu0 %v748
  %1208 = vmatpush.bf16.msra.mxu0 %v746
  %1209 = vmatpush.bf16.msra.mxu0 %v744
  %1210 = vmatpush.bf16.msra.mxu0 %v742
  %1211 = vmatmul.bf16.gmra.mxu0 %v258
  %v1212 = vpop.f32.mrf.mxu0
  %v1213 = vadd.f32 %v1194, %v1212
  %v1214 = vpop.f32.mrf.mxu0
  %v1215 = vadd.f32 %v1196, %v1214
  %1216 = vmatmul.bf16.gmra.mxu0 %v267
  %v1217 = vpop.f32.mrf.mxu0
  %v1218 = vadd.f32 %v1199, %v1217
  %v1219 = vpop.f32.mrf.mxu0
  %v1220 = vadd.f32 %v1201, %v1219
  %1221 = vdwg.mxu0
  %1222 = vmatpush.bf16.msra.mxu0 %v772
  %1223 = vmatpush.bf16.msra.mxu0 %v770
  %1224 = vmatpush.bf16.msra.mxu0 %v768
  %1225 = vmatpush.bf16.msra.mxu0 %v766
  %1226 = vmatpush.bf16.msra.mxu0 %v764
  %1227 = vmatpush.bf16.msra.mxu0 %v762
  %1228 = vmatpush.bf16.msra.mxu0 %v760
  %1229 = vmatpush.bf16.msra.mxu0 %v758
  %1230 = vmatmul.bf16.gmra.mxu0 %v259
  %v1231 = vpop.f32.mrf.mxu0
  %v1232 = vadd.f32 %v1213, %v1231
  %v1233 = vpop.f32.mrf.mxu0
  %v1234 = vadd.f32 %v1215, %v1233
  %1235 = vmatmul.bf16.gmra.mxu0 %v268
  %v1236 = vpop.f32.mrf.mxu0
  %v1237 = vadd.f32 %v1218, %v1236
  %v1238 = vpop.f32.mrf.mxu0
  %v1239 = vadd.f32 %v1220, %v1238
  %1240 = vdwg.mxu0
  %1241 = vmatpush.bf16.msra.mxu0 %v788
  %1242 = vmatpush.bf16.msra.mxu0 %v786
  %1243 = vmatpush.bf16.msra.mxu0 %v784
  %1244 = vmatpush.bf16.msra.mxu0 %v782
  %1245 = vmatpush.bf16.msra.mxu0 %v780
  %1246 = vmatpush.bf16.msra.mxu0 %v778
  %1247 = vmatpush.bf16.msra.mxu0 %v776
  %1248 = vmatpush.bf16.msra.mxu0 %v774
  %1249 = vmatmul.bf16.gmra.mxu0 %v260
  %v1250 = vpop.f32.mrf.mxu0
  %v1251 = vadd.f32 %v1232, %v1250
  %v1252 = vpop.f32.mrf.mxu0
  %v1253 = vadd.f32 %v1234, %v1252
  %1254 = vmatmul.bf16.gmra.mxu0 %v269
  %v1255 = vpop.f32.mrf.mxu0
  %v1256 = vadd.f32 %v1237, %v1255
  %v1257 = vpop.f32.mrf.mxu0
  %v1258 = vadd.f32 %v1239, %v1257
  %1259 = vdwg.mxu0
  %1260 = vmatpush.bf16.msra.mxu0 %v804
  %1261 = vmatpush.bf16.msra.mxu0 %v802
  %1262 = vmatpush.bf16.msra.mxu0 %v800
  %1263 = vmatpush.bf16.msra.mxu0 %v798
  %1264 = vmatpush.bf16.msra.mxu0 %v796
  %1265 = vmatpush.bf16.msra.mxu0 %v794
  %1266 = vmatpush.bf16.msra.mxu0 %v792
  %1267 = vmatpush.bf16.msra.mxu0 %v790
  %1268 = vmatmul.bf16.gmra.mxu0 %v261
  %v1269 = vpop.f32.mrf.mxu0
  %v1270 = vadd.f32 %v1251, %v1269
  %v1271 = vpop.f32.mrf.mxu0
  %v1272 = vadd.f32 %v1253, %v1271
  %1273 = vmatmul.bf16.gmra.mxu0 %v270
  %v1274 = vpop.f32.mrf.mxu0
  %v1275 = vadd.f32 %v1256, %v1274
  %v1276 = vpop.f32.mrf.mxu0
  %v1277 = vadd.f32 %v1258, %v1276
  %1278 = vdwg.mxu0
  %1279 = vmatpush.bf16.msra.mxu0 %v820
  %1280 = vmatpush.bf16.msra.mxu0 %v818
  %1281 = vmatpush.bf16.msra.mxu0 %v816
  %1282 = vmatpush.bf16.msra.mxu0 %v814
  %1283 = vmatpush.bf16.msra.mxu0 %v812
  %1284 = vmatpush.bf16.msra.mxu0 %v810
  %1285 = vmatpush.bf16.msra.mxu0 %v808
  %1286 = vmatpush.bf16.msra.mxu0 %v806
  %1287 = vmatmul.bf16.gmra.mxu0 %v262
  %v1288 = vpop.f32.mrf.mxu0
  %v1289 = vadd.f32 %v1270, %v1288
  %v1290 = vpop.f32.mrf.mxu0
  %v1291 = vadd.f32 %v1272, %v1290
  %1292 = vmatmul.bf16.gmra.mxu0 %v271
  %v1293 = vpop.f32.mrf.mxu0
  %v1294 = vadd.f32 %v1275, %v1293
  %v1295 = vpop.f32.mrf.mxu0
  %v1296 = vadd.f32 %v1277, %v1295
  %1297 = vdwg.mxu0
  %1298 = vmatpush.bf16.msra.mxu0 %v836
  %1299 = vmatpush.bf16.msra.mxu0 %v834
  %1300 = vmatpush.bf16.msra.mxu0 %v832
  %1301 = vmatpush.bf16.msra.mxu0 %v830
  %1302 = vmatpush.bf16.msra.mxu0 %v828
  %1303 = vmatpush.bf16.msra.mxu0 %v826
  %1304 = vmatpush.bf16.msra.mxu0 %v824
  %1305 = vmatpush.bf16.msra.mxu0 %v822
  %1306 = vmatmul.bf16.gmra.mxu0 %v263
  %v1307 = vpop.f32.mrf.mxu0
  %v1308 = vadd.f32 %v1289, %v1307
  %v1309 = vpop.f32.mrf.mxu0
  %v1310 = vadd.f32 %v1291, %v1309
  %1311 = vmatmul.bf16.gmra.mxu0 %v272
  %v1312 = vpop.f32.mrf.mxu0
  %v1313 = vadd.f32 %v1294, %v1312
  %v1314 = vpop.f32.mrf.mxu0
  %v1315 = vadd.f32 %v1296, %v1314
  %1316 = vdwg.mxu0
  %1317 = vmatpush.bf16.msra.mxu0 %v852
  %1318 = vmatpush.bf16.msra.mxu0 %v850
  %1319 = vmatpush.bf16.msra.mxu0 %v848
  %1320 = vmatpush.bf16.msra.mxu0 %v846
  %1321 = vmatpush.bf16.msra.mxu0 %v844
  %1322 = vmatpush.bf16.msra.mxu0 %v842
  %1323 = vmatpush.bf16.msra.mxu0 %v840
  %1324 = vmatpush.bf16.msra.mxu0 %v838
  %1325 = vmatmul.bf16.gmra.mxu0 %v264
  %v1326 = vpop.f32.mrf.mxu0
  %v1327 = vadd.f32 %v1308, %v1326
  %v1328 = vpop.f32.mrf.mxu0
  %v1329 = vadd.f32 %v1310, %v1328
  %1330 = vmatmul.bf16.gmra.mxu0 %v273
  %v1331 = vpop.f32.mrf.mxu0
  %v1332 = vadd.f32 %v1313, %v1331
  %v1333 = vpop.f32.mrf.mxu0
  %v1334 = vadd.f32 %v1315, %v1333
  %1335 = vdwg.mxu0
  %1336 = vmatpush.bf16.msra.mxu0 %v868
  %1337 = vmatpush.bf16.msra.mxu0 %v866
  %1338 = vmatpush.bf16.msra.mxu0 %v864
  %1339 = vmatpush.bf16.msra.mxu0 %v862
  %1340 = vmatpush.bf16.msra.mxu0 %v860
  %1341 = vmatpush.bf16.msra.mxu0 %v858
  %1342 = vmatpush.bf16.msra.mxu0 %v856
  %1343 = vmatpush.bf16.msra.mxu0 %v854
  %1344 = vmatmul.bf16.gmra.mxu0 %v265
  %v1345 = vpop.f32.mrf.mxu0
  %v1346 = vadd.f32 %v1327, %v1345
  %v1347 = vpop.f32.mrf.mxu0
  %v1348 = vadd.f32 %v1329, %v1347
  %1349 = vmatmul.bf16.gmra.mxu0 %v274
  %v1350 = vpop.f32.mrf.mxu0
  %v1351 = vadd.f32 %v1332, %v1350
  %v1352 = vpop.f32.mrf.mxu0
  %v1353 = vadd.f32 %v1334, %v1352
  %1354 = vdwg.mxu0
  %vm1355 = vcmp.gt.f32.partialorder %v1175, 0.0
  %vm1356 = vcmp.gt.f32.partialorder %v1346, 0.0
  %vm1357 = vcmp.gt.f32.partialorder %v1177, 0.0
  %vm1358 = vcmp.gt.f32.partialorder %v1348, 0.0
  %vm1359 = vcmp.gt.f32.partialorder %v1180, 0.0
  %vm1360 = vcmp.gt.f32.partialorder %v1351, 0.0
  %vm1361 = vcmp.gt.f32.partialorder %v1182, 0.0
  %vm1362 = vcmp.gt.f32.partialorder %v1353, 0.0
  %v1363 = vmul.f32 %v1175, 0.2
  %v1364 = vmul.f32 %v1346, 0.2
  %v1365 = vmul.f32 %v1177, 0.2
  %v1366 = vmul.f32 %v1348, 0.2
  %v1367 = vmul.f32 %v1180, 0.2
  %v1368 = vmul.f32 %v1351, 0.2
  %v1369 = vmul.f32 %v1182, 0.2
  %v1370 = vmul.f32 %v1353, 0.2
  %v1371 = vsel %vm1355, %v1175, %v1363
  %v1372 = vsel %vm1356, %v1346, %v1364
  %v1373 = vsel %vm1357, %v1177, %v1365
  %v1374 = vsel %vm1358, %v1348, %v1366
  %v1375 = vsel %vm1359, %v1180, %v1367
  %v1376 = vsel %vm1360, %v1351, %v1368
  %v1377 = vsel %vm1361, %v1182, %v1369
  %v1378 = vsel %vm1362, %v1353, %v1370
  %v1379 = vadd.f32 %v1371, %v1373
  %v1380 = vadd.f32 %v1379, %v1375
  %v1381 = vadd.f32 %v1380, %v1377
  %v1382 = vrot.slane %v1381, 4
  %v1383 = vadd.f32 %v1381, %v1382
  %v1384 = vrot.slane %v1383, 2
  %v1385 = vadd.f32 %v1383, %v1384
  %v1386 = vrot.slane %v1385, 1
  %v1387 = vadd.f32 %v1385, %v1386
  %v1388 = vadd.f32 %v1372, %v1374
  %v1389 = vadd.f32 %v1388, %v1376
  %v1390 = vadd.f32 %v1389, %v1378
  %v1391 = vrot.slane %v1390, 4
  %v1392 = vadd.f32 %v1390, %v1391
  %v1393 = vrot.slane %v1392, 2
  %v1394 = vadd.f32 %v1392, %v1393
  %v1395 = vrot.slane %v1394, 1
  %v1396 = vadd.f32 %v1394, %v1395
  %v1397 = vmul.f32 %v1371, %v1371
  %v1398 = vmul.f32 %v1372, %v1372
  %v1399 = vmul.f32 %v1373, %v1373
  %v1400 = vmul.f32 %v1374, %v1374
  %v1401 = vmul.f32 %v1375, %v1375
  %v1402 = vmul.f32 %v1376, %v1376
  %v1403 = vmul.f32 %v1377, %v1377
  %v1404 = vmul.f32 %v1378, %v1378
  %v1405 = vadd.f32 %v1397, %v1399
  %v1406 = vadd.f32 %v1405, %v1401
  %v1407 = vadd.f32 %v1406, %v1403
  %v1408 = vrot.slane %v1407, 4
  %v1409 = vadd.f32 %v1407, %v1408
  %v1410 = vrot.slane %v1409, 2
  %v1411 = vadd.f32 %v1409, %v1410
  %v1412 = vrot.slane %v1411, 1
  %v1413 = vadd.f32 %v1411, %v1412
  %v1414 = vadd.f32 %v1398, %v1400
  %v1415 = vadd.f32 %v1414, %v1402
  %v1416 = vadd.f32 %v1415, %v1404
  %v1417 = vrot.slane %v1416, 4
  %v1418 = vadd.f32 %v1416, %v1417
  %v1419 = vrot.slane %v1418, 2
  %v1420 = vadd.f32 %v1418, %v1419
  %v1421 = vrot.slane %v1420, 1
  %v1422 = vadd.f32 %v1420, %v1421
  %v1423 = vmul.f32 %v1387, 0.03125
  %v1424 = vmul.f32 %v1396, 0.03125
  %v1425 = vmul.f32 %v1413, 0.03125
  %v1426 = vmul.f32 %v1422, 0.03125
  %v1427 = vmul.f32 %v1423, %v1423
  %v1428 = vmul.f32 %v1424, %v1424
  %v1429 = vsub.f32 %v1425, %v1427
  %v1430 = vsub.f32 %v1426, %v1428
  %v1431 = vadd.f32 %v1429, 1e-05
  %v1432 = vadd.f32 %v1430, 1e-05
  %v1433 = vrsqrt.pop %v1431
  %v1434 = vmul.f32 %v1433, %v1431
  %v1435 = vmul.f32 %v1434, %v1433
  %v1436 = vmul.f32 0.5, %v1435
  %v1437 = vsub.f32 1.5, %v1436
  %v1438 = vmul.f32 %v1433, %v1437
  %vm1439 = vweird.f32 %v1431
  %vm1440 = vweird.f32 %v1433
  %vm1441 = vmor %vm1439, %vm1440
  %v1442 = vsel %vm1441, %v1433, %v1438
  %v1443 = vrsqrt.pop %v1432
  %v1444 = vmul.f32 %v1443, %v1432
  %v1445 = vmul.f32 %v1444, %v1443
  %v1446 = vmul.f32 0.5, %v1445
  %v1447 = vsub.f32 1.5, %v1446
  %v1448 = vmul.f32 %v1443, %v1447
  %vm1449 = vweird.f32 %v1432
  %vm1450 = vweird.f32 %v1443
  %vm1451 = vmor %vm1449, %vm1450
  %v1452 = vsel %vm1451, %v1443, %v1448
  %v1453 = vld [vmem:[%s3] sm:$0x3]
  %v1455 = vperm.slane %v1453, 0
  %v1456 = vperm.slane %v1453, 1
  %v1459 = vmul.f32 %v1442, %v1455
  %v1460 = vmul.f32 %v1452, %v1456
  %v1461 = vsub.f32 %v1371, %v1423
  %v1462 = vsub.f32 %v1372, %v1424
  %v1463 = vsub.f32 %v1373, %v1423
  %v1464 = vsub.f32 %v1374, %v1424
  %v1465 = vsub.f32 %v1375, %v1423
  %v1466 = vsub.f32 %v1376, %v1424
  %v1467 = vsub.f32 %v1377, %v1423
  %v1468 = vsub.f32 %v1378, %v1424
  %v1469 = vperm.slane %v1459, 0
  %v1470 = vperm.slane %v1460, 0
  %v1471 = vmul.f32 %v1461, %v1469
  %v1472 = vmul.f32 %v1462, %v1470
  %v1473 = vmul.f32 %v1463, %v1469
  %v1474 = vmul.f32 %v1464, %v1470
  %v1475 = vmul.f32 %v1465, %v1469
  %v1476 = vmul.f32 %v1466, %v1470
  %v1477 = vmul.f32 %v1467, %v1469
  %v1478 = vmul.f32 %v1468, %v1470
  %v1479 = vld [vmem:[%s4] sm:$0x3]
  %v1481 = vperm.slane %v1479, 0
  %v1482 = vperm.slane %v1479, 1
  %v1485 = vadd.f32 %v1471, %v1481
  %v1486 = vadd.f32 %v1472, %v1482
  %v1487 = vadd.f32 %v1473, %v1481
  %v1488 = vadd.f32 %v1474, %v1482
  %v1489 = vadd.f32 %v1475, %v1481
  %v1490 = vadd.f32 %v1476, %v1482
  %v1491 = vadd.f32 %v1477, %v1481
  %v1492 = vadd.f32 %v1478, %v1482
  %v1493 = vld [vmem:[%s5] sm:$0xff]
  %v1494 = vld [vmem:[%s5 + $0x8] sm:$0xff]
  %v1495 = vld [vmem:[%s5 + $0x10] sm:$0xff]
  %v1496 = vld [vmem:[%s5 + $0x18] sm:$0xff]
  %v1497 = vld [vmem:[%s5 + $0x20] sm:$0xff]
  %v1498 = vld [vmem:[%s5 + $0x28] sm:$0xff]
  %v1499 = vld [vmem:[%s5 + $0x30] sm:$0xff]
  %v1500 = vld [vmem:[%s5 + $0x38] sm:$0xff]
  %v1501 = vmul.f32 %v1485, %v1493
  %v1502 = vmul.f32 %v1486, %v1494
  %v1503 = vmul.f32 %v1487, %v1495
  %v1504 = vmul.f32 %v1488, %v1496
  %v1505 = vmul.f32 %v1489, %v1497
  %v1506 = vmul.f32 %v1490, %v1498
  %v1507 = vmul.f32 %v1491, %v1499
  %v1508 = vmul.f32 %v1492, %v1500
  %v1509 = vld [vmem:[%s7] sm:$0x3]
  %vm1510 = vcmask 261120
  %v1512 = vsel %vm1510, %v1509, 0
  %1514 = vmatpush.msra.mxu0 0.0
  %1515 = vmatpush.msra.mxu0 0.0
  %1516 = vmatpush.msra.mxu0 0.0
  %1517 = vmatpush.msra.mxu0 0.0
  %1518 = vmatpush.msra.mxu0 0.0
  %1519 = vmatpush.msra.mxu0 0.0
  %1520 = vmatpush.msra.mxu0 0.0
  %1521 = vmatpush.msra.mxu0 0.0
  %1522 = vmatpush.msra.mxu0 0.0
  %1523 = vmatpush.msra.mxu0 0.0
  %1524 = vmatpush.msra.mxu0 0.0
  %1525 = vmatpush.msra.mxu0 0.0
  %1526 = vmatpush.msra.mxu0 %v1507
  %1527 = vmatpush.msra.mxu0 %v1505
  %1528 = vmatpush.msra.mxu0 %v1503
  %1529 = vmatpush.msra.mxu0 %v1501
  %1530 = vmatmul.f32.gmra.mxu0 %v1512
  %v1531 = vpop.f32.mrf.mxu0
  %v1532 = vadd.f32 0.0, %v1531
  %1533 = vdwg.mxu0
  %1534 = vmatpush.msra.mxu0 0.0
  %1535 = vmatpush.msra.mxu0 0.0
  %1536 = vmatpush.msra.mxu0 0.0
  %1537 = vmatpush.msra.mxu0 0.0
  %1538 = vmatpush.msra.mxu0 0.0
  %1539 = vmatpush.msra.mxu0 0.0
  %1540 = vmatpush.msra.mxu0 0.0
  %1541 = vmatpush.msra.mxu0 0.0
  %1542 = vmatpush.msra.mxu0 0.0
  %1543 = vmatpush.msra.mxu0 0.0
  %1544 = vmatpush.msra.mxu0 0.0
  %1545 = vmatpush.msra.mxu0 0.0
  %1546 = vmatpush.msra.mxu0 %v1508
  %1547 = vmatpush.msra.mxu0 %v1506
  %1548 = vmatpush.msra.mxu0 %v1504
  %1549 = vmatpush.msra.mxu0 %v1502
  %1550 = vmatmul.f32.gmra.mxu0 %v1512
  %v1551 = vpop.f32.mrf.mxu0
  %v1552 = vadd.f32 0.0, %v1551
  %1553 = vdwg.mxu0
  %vm1554 = vcmask 1041408
  %v1555 = vsel %vm1554, %v1532, 0.0
  %v1556 = vsel %vm1554, %v1552, 0.0
  %v1557 = vadd.f32 %v1555, %v1556
  %1558 = vadd.xlane.f32.xlu0 %v1557
  %v1559 = vpop.xlane.xlu0 %1558
  %v1560 = vld [vmem:[#allocation2] sm:$0x1]
  %v1562 = vperm.slane %v1560, 0
  %v1564 = vadd.f32 %v1559, %v1562
  %v1565 = vmul.f32 %v1564, 0.5
  %v1566 = vtanh.pop %v1565
  %v1567 = vadd.f32 %v1566, 1.0
  %v1568 = vmul.f32 %v1567, 0.5
  %vm1569 = vcmask 1024
  %1570 = vst.msk [vmem:[%s8] sm:$0x3] %vm1569, %v1568
  // Predicated region
  $region34: #{discriminator_forward.5} parent=0 // pred_check
    _
  $region35: #{discriminator_forward.5} parent=0 // pred_check_branch
    %1572 = sbr.rel (0) target = $region37
  $region36: #{discriminator_forward.5} parent=0 // pred_region
    _
  $region37: #{discriminator_forward.5} parent=0 // pred_fallthru
    _
  // Predicated region
  $region38: #{discriminator_forward.5} parent=0 // pred_check
    _
  $region39: #{discriminator_forward.5} parent=0 // pred_check_branch
    %1574 = sbr.rel (0) target = $region41
  $region40: #{discriminator_forward.5} parent=0 // pred_region
    _
  $region41: #{discriminator_forward.5} parent=0 // pred_fallthru
    _

</llo_original>
